<compile_context>
chip_gen: v7x
topology: tpu7x:2x2x1
jax: 0.10.0
libtpu: 0.0.40
codegen_flags: <defaults>
</compile_context>

<pallas_src>
import jax
import jax.numpy as jnp
from jax.experimental import pallas as pl
from jax.experimental.pallas import tpu as pltpu


def _ceil_to(n, m):
    return ((n + m - 1) // m) * m


def _vmem_limit_bytes():
    """Per-core VMEM limit: derive from hardware when possible, stay safe on v7x."""
    cap = 64 * 1024 * 1024            # conservative fallback (v7x per-TC VMEM)
    try:
        info = pltpu.get_tpu_info()
        cap = int(getattr(info, "vmem_capacity_bytes", cap) or cap)
    except Exception:
        pass
    return int(min(cap * 3 // 4, 96 * 1024 * 1024))


def dcdetector_kernel(xe_ref, xo_ref, v_ref, beff_ref, wa_ref, ba_ref,
                      wb_ref, bb_ref, s0_ref, s1_ref):
    # xe_ref / xo_ref: (rb, Le) / (rb, Lo) even/odd time samples (VMEM).
    # v, beff, wa, ba, wb, bb: small weight tables in SMEM (scalar reads).
    rb, Le = xe_ref.shape
    Lo = xo_ref.shape[1]
    L = Le + Lo
    C = v_ref.shape[1]
    W0 = L - 2                 # scale[0] width (valid (1,3) conv)
    W0e = (W0 + 1) // 2        # even-phase sample count of scale[0]
    W0o = W0 // 2              # odd-phase sample count
    Wa = W0e                   # (1,1)/stride-2 conv width  (= even-phase samples)
    Wb = W0 - 1                # (1,2) valid conv width
    Wbe = (Wb + 1) // 2
    Wbo = Wb // 2
    Wp = (Wb - 3) // 2 + 1     # (1,3)/stride-2 valid max-pool width

    xe = xe_ref[...]
    xo = xo_ref[...]

    # --- RevIN 'norm': per-row mean/var over all L steps (unbiased=False, eps=1e-5)
    inv_L = 1.0 / float(L)
    mean = (jnp.sum(xe, axis=1, keepdims=True)
            + jnp.sum(xo, axis=1, keepdims=True)) * inv_L
    de = xe - mean
    do = xo - mean
    var = (jnp.sum(de * de, axis=1, keepdims=True)
           + jnp.sum(do * do, axis=1, keepdims=True)) * inv_L
    rstd = jax.lax.rsqrt(var + 1e-5)
    xne = de * rstd            # normalized even-time samples
    xno = do * rstd            # normalized odd-time samples

    # --- shifted phase windows for the fused start_conv + (1,3) conv ---
    # scale0[t'] = xn[t']*v0 + xn[t'+1]*v1 + xn[t'+2]*v2 + b_eff
    xE0 = xne[:, 0:W0e]             # xn[2t]
    xO0 = xno[:, 0:W0e]             # xn[2t+1]
    xE1 = xne[:, 1:1 + W0e]         # xn[2t+2]
    xOb0 = xno[:, 0:W0o]            # xn[2t+1]  (odd outputs)
    xEb1 = xne[:, 1:1 + W0o]        # xn[2t+2]
    xOb1 = xno[:, 1:1 + W0o]        # xn[2t+3]

    s0e = []   # per channel, even-phase samples of scale[0], (rb, W0e)
    s0o = []   # per channel, odd-phase samples of scale[0],  (rb, W0o)
    for c in range(C):
        v0 = v_ref[0, c]
        v1 = v_ref[1, c]
        v2 = v_ref[2, c]
        b = beff_ref[0, c]
        s0e.append(xE0 * v0 + xO0 * v1 + xE1 * v2 + b)
        s0o.append(xOb0 * v0 + xEb1 * v1 + xOb1 * v2 + b)

    # --- layer_block.conv_output: Conv2d(C,C,(1,1),stride=(1,2)) -> even phase only
    convA = []
    for o in range(C):
        a = s0e[0] * wa_ref[0, o]
        for i in range(1, C):
            a = a + s0e[i] * wa_ref[i, o]
        convA.append(a + ba_ref[0, o])                       # (rb, Wa)

    # --- layer_block.conv_output1: Conv2d(C,C,(1,2)) valid, phase-split ---
    # convB[2t]   = sum_i s0e_i[t]*wb0 + s0o_i[t]*wb1
    # convB[2t+1] = sum_i s0o_i[t]*wb0 + s0e_i[t+1]*wb1
    s0e_a = [s0e[i][:, 0:Wbe] for i in range(C)]
    s0o_a = [s0o[i][:, 0:Wbe] for i in range(C)]
    s0o_b = [s0o[i][:, 0:Wbo] for i in range(C)]
    s0e_b = [s0e[i][:, 1:1 + Wbo] for i in range(C)]
    convBe = []
    convBo = []
    for o in range(C):
        be = s0e_a[0] * wb_ref[0, o] + s0o_a[0] * wb_ref[C, o]
        bo = s0o_b[0] * wb_ref[0, o] + s0e_b[0] * wb_ref[C, o]
        for i in range(1, C):
            be = be + s0e_a[i] * wb_ref[i, o] + s0o_a[i] * wb_ref[C + i, o]
            bo = bo + s0o_b[i] * wb_ref[i, o] + s0e_b[i] * wb_ref[C + i, o]
        convBe.append(be + bb_ref[0, o])                     # (rb, Wbe)
        convBo.append(bo + bb_ref[0, o])                     # (rb, Wbo)

    # --- scale[0] output slab: per channel [even | odd], padded to 128 lanes ---
    pieces0 = []
    for c in range(C):
        pieces0.append(s0e[c])
        pieces0.append(s0o[c])
    pad0 = s0_ref.shape[1] - C * W0
    if pad0 > 0:
        pieces0.append(jnp.zeros((rb, pad0), jnp.float32))
    s0_ref[...] = jnp.concatenate(pieces0, axis=1).astype(s0_ref.dtype)

    # --- MaxPool2d((1,3),stride=(1,2)) valid + residual + ReLU ---
    # pool[t] = max(convB[2t], convB[2t+1], convB[2t+2])
    off = Wa - Wp
    pieces1 = []
    for o in range(C):
        p = jnp.maximum(jnp.maximum(convBe[o][:, 0:Wp], convBo[o][:, 0:Wp]),
                        convBe[o][:, 1:1 + Wp])
        pieces1.append(jnp.maximum(p + convA[o][:, off:off + Wp], 0.0))
    pad1 = s1_ref.shape[1] - C * Wp
    if pad1 > 0:
        pieces1.append(jnp.zeros((rb, pad1), jnp.float32))
    s1_ref[...] = jnp.concatenate(pieces1, axis=1).astype(s1_ref.dtype)


def _interleave_last(ev, od):
    """Interleave even/odd phase samples back into time order on the last axis."""
    ne, no = ev.shape[-1], od.shape[-1]
    if ne == no:
        return jnp.stack([ev, od], axis=-1).reshape(ev.shape[:-1] + (ne + no,))
    head = jnp.stack([ev[..., :no], od], axis=-1).reshape(ev.shape[:-1] + (2 * no,))
    return jnp.concatenate([head, ev[..., no:]], axis=-1)


def dcdetector_forward(x, params, max_rows=1024, out_dtype=jnp.float32):
    """x: (B, L, M) float32.  Returns (scale0, scale1) in PyTorch NCHW layout.

    out_dtype=jnp.bfloat16 halves the dominant (output-side) HBM traffic; the
    default stays float32 to match the PyTorch module exactly.
    """
    B, L, M = x.shape
    C = params["wst"].shape[1]
    assert L >= 6, "win_size must be >= 6 for kernel_set=[3, 2]"
    R = B * M
    W0 = L - 2
    W0e = (W0 + 1) // 2
    Wb = W0 - 1
    Wp = (Wb - 3) // 2 + 1
    S0 = C * W0
    S1 = C * Wp
    S0p = _ceil_to(S0, 128)         # 128-lane multiple -> unmasked stores
    S1p = _ceil_to(S1, 128)

    # --- algebraic fusion of start_conv (1x1, 1->C) into scale[0]'s (1,3) conv ---
    wst = params["wst"][0]                                        # (C,)
    bst = params["bst"][0]                                        # (C,)
    w0 = params["w0"]                                             # (3, C, C)
    v = jnp.einsum("c,jco->jo", wst, w0)                          # (3, C)
    b_eff = params["b0"] + jnp.einsum("c,jco->o", bst, w0)[None, :]   # (1, C)
    wb2 = params["wb"].reshape(2 * C, C)                          # (2C, C): [k*C+i, o]

    # --- rows (one per (batch, feature)), time on lanes, split into phases ---
    xr = jnp.transpose(x, (0, 2, 1)).reshape(R, L).astype(jnp.float32)
    xe = xr[:, 0::2]
    xo = xr[:, 1::2]
    Le, Lo = xe.shape[1], xo.shape[1]

    # --- row-block sizing: block budget and compiler limit from the same source ---
    vmem_limit = _vmem_limit_bytes()
    budget = (vmem_limit * 2) // 3
    live_floats = 4 * L + C * (W0 + W0e + Wb + 2 * Wp) + S0p + S1p   # in-kernel temps
    io_floats = 2 * (L + S0p + S1p)                                  # double-buffered I/O
    per_row_bytes = 4 * (3 * live_floats // 2 + io_floats)           # +50% headroom
    rb = max(8, min(max_rows, (budget // per_row_bytes) // 8 * 8, _ceil_to(R, 8)))
    Rp = _ceil_to(R, rb)
    if Rp != R:
        xe = jnp.pad(xe, ((0, Rp - R), (0, 0)))
        xo = jnp.pad(xo, ((0, Rp - R), (0, 0)))
    grid = (Rp // rb,)

    smem = pl.BlockSpec(memory_space=pltpu.MemorySpace.SMEM)
    in_specs = [
        pl.BlockSpec((rb, Le), lambda i: (i, 0)),     # even-time samples
        pl.BlockSpec((rb, Lo), lambda i: (i, 0)),     # odd-time samples
        smem,                                         # v       (3, C)
        smem,                                         # b_eff   (1, C)
        smem,                                         # wa      (C, C)
        smem,                                         # ba      (1, C)
        smem,                                         # wb2     (2C, C)
        smem,                                         # bb      (1, C)
    ]
    out_specs = (
        pl.BlockSpec((rb, S0p), lambda i: (i, 0)),
        pl.BlockSpec((rb, S1p), lambda i: (i, 0)),
    )
    out_shape = (jax.ShapeDtypeStruct((Rp, S0p), out_dtype),
                 jax.ShapeDtypeStruct((Rp, S1p), out_dtype))

    s0f, s1f = pl.pallas_call(
        dcdetector_kernel,
        grid=grid,
        in_specs=in_specs,
        out_specs=out_specs,
        out_shape=out_shape,
        compiler_params=pltpu.CompilerParams(
            dimension_semantics=("parallel",),
            vmem_limit_bytes=vmem_limit,
        ),
    )(xe, xo, v, b_eff, params["wa"], params["ba"], wb2, params["bb"])

    # --- unpack slabs back to PyTorch NCHW (B, C, M, W) ---
    s0c = s0f[:R, :S0].reshape(B, M, C, W0).astype(jnp.float32)
    s0t = _interleave_last(s0c[..., :W0e], s0c[..., W0e:])
    scale0 = jnp.transpose(s0t, (0, 2, 1, 3))
    s1c = s1f[:R, :S1].reshape(B, M, C, Wp).astype(jnp.float32)
    scale1 = jnp.transpose(s1c, (0, 2, 1, 3))
    return scale0, scale1


def make_params(key, conv_channels):
    """Deterministic synthetic parameters (shapes follow the module __init__)."""
    C = conv_channels
    ks = jax.random.split(key, 8)
    scale = 0.2
    return {
        # start_conv: Conv2d(1, C, (1,1))  -> stored as (c_in=1, c_out=C)
        "wst": scale * jax.random.normal(ks[0], (1, C), jnp.float32),
        "bst": scale * jax.random.normal(ks[1], (1, C), jnp.float32),
        # scale[0]: Conv2d(C, C, (1,3))    -> stored as (k=3, c_in, c_out)
        "w0": scale * jax.random.normal(ks[2], (3, C, C), jnp.float32),
        "b0": scale * jax.random.normal(ks[3], (1, C), jnp.float32),
        # layer_block.conv_output: Conv2d(C, C, (1,1), stride (1,2)) -> (c_in, c_out)
        "wa": scale * jax.random.normal(ks[4], (C, C), jnp.float32),
        "ba": scale * jax.random.normal(ks[5], (1, C), jnp.float32),
        # layer_block.conv_output1: Conv2d(C, C, (1,2)) -> (k=2, c_in, c_out)
        "wb": scale * jax.random.normal(ks[6], (2, C, C), jnp.float32),
        "bb": scale * jax.random.normal(ks[7], (1, C), jnp.float32),
    }


def ref_forward(x, p):
    """Pure-JAX (XLA conv) reference of the same forward, for verification."""
    B, L, M = x.shape
    C = p["wst"].shape[1]
    mean = jnp.mean(x, axis=1, keepdims=True)
    var = jnp.mean((x - mean) ** 2, axis=1, keepdims=True)
    xn = (x - mean) / jnp.sqrt(var + 1e-5)
    h = jnp.transpose(xn, (0, 2, 1))[:, None, :, :]   # NCHW: (B, 1, M, L)
    dn = ("NCHW", "OIHW", "NCHW")

    def conv(inp, w_kio, b, stride_w=1):
        w = jnp.transpose(w_kio, (2, 1, 0))[:, :, None, :]   # (co, ci, 1, k)
        y = jax.lax.conv_general_dilated(inp, w, (1, stride_w), "VALID",
                                         dimension_numbers=dn)
        return y + b.reshape(1, -1, 1, 1)

    h = conv(h, p["wst"].reshape(1, 1, C), p["bst"].reshape(C))
    s0 = conv(h, p["w0"], p["b0"].reshape(C))
    convA = conv(s0, p["wa"][None, :, :], p["ba"].reshape(C), stride_w=2)
    convB = conv(s0, p["wb"], p["bb"].reshape(C))
    pool = jax.lax.reduce_window(convB, -jnp.inf, jax.lax.max,
                                 (1, 1, 1, 3), (1, 1, 1, 2), "VALID")
    out1 = jax.nn.relu(pool + convA[..., -pool.shape[3]:])
    return s0, out1


if __name__ == "__main__":
    # Small, forward-consistent shapes:
    #   win_size L = 16, enc_in M = 8, batch B = 2, conv_channels C = 8
    B, L, M, C = 2, 16, 8, 8
    key = jax.random.PRNGKey(0)
    kx, kp = jax.random.split(key)
    x = jax.random.normal(kx, (B, L, M), jnp.float32)
    params = make_params(kp, C)

    scale0, scale1 = dcdetector_forward(x, params)
    jax.block_until_ready((scale0, scale1))

    r0, r1 = ref_forward(x, params)
    assert scale0.shape == (B, C, M, L - 2), scale0.shape
    assert scale1.shape == (B, C, M, ((L - 3) - 3) // 2 + 1), scale1.shape
    assert jnp.allclose(scale0, r0, atol=2e-4, rtol=2e-4), "scale0 mismatch"
    assert jnp.allclose(scale1, r1, atol=2e-4, rtol=2e-4), "scale1 mismatch"

    print("KERNEL_OK")
</pallas_src>

<mosaic_0001>
module attributes {stable_mosaic.version = 11 : i64} {
  func.func @dcdetector_kernel(%arg0: i32, %arg1: memref<16x8xf32, #tpu.memory_space<vmem>>, %arg2: memref<16x8xf32, #tpu.memory_space<vmem>>, %arg3: memref<3x8xf32, #tpu.memory_space<smem>>, %arg4: memref<1x8xf32, #tpu.memory_space<smem>>, %arg5: memref<8x8xf32, #tpu.memory_space<smem>>, %arg6: memref<1x8xf32, #tpu.memory_space<smem>>, %arg7: memref<16x8xf32, #tpu.memory_space<smem>>, %arg8: memref<1x8xf32, #tpu.memory_space<smem>>, %arg9: memref<16x128xf32, #tpu.memory_space<vmem>>, %arg10: memref<16x128xf32, #tpu.memory_space<vmem>>) attributes {dimension_semantics = [#tpu.dimension_semantics<parallel>], iteration_bounds = array<i64: 1>, scalar_prefetch = 0 : i64, scratch_operands = 0 : i64, tpu.core_type = #tpu.core_type<tc>, window_params = [{transform_indices = @transform_0, window_bounds = array<i64: 16, 8>}, {transform_indices = @transform_1, window_bounds = array<i64: 16, 8>}, {transform_indices = @transform_2, window_bounds = array<i64: 3, 8>}, {transform_indices = @transform_3, window_bounds = array<i64: 1, 8>}, {transform_indices = @transform_4, window_bounds = array<i64: 8, 8>}, {transform_indices = @transform_5, window_bounds = array<i64: 1, 8>}, {transform_indices = @transform_6, window_bounds = array<i64: 16, 8>}, {transform_indices = @transform_7, window_bounds = array<i64: 1, 8>}, {transform_indices = @transform_8, window_bounds = array<i64: 16, 128>}, {transform_indices = @transform_9, window_bounds = array<i64: 16, 128>}]} {
    %c0 = arith.constant 0 : index
    %c0_0 = arith.constant 0 : index
    %0 = vector.load %arg1[%c0, %c0_0] : memref<16x8xf32, #tpu.memory_space<vmem>>, vector<16x8xf32>
    %c0_1 = arith.constant 0 : index
    %c0_2 = arith.constant 0 : index
    %1 = vector.load %arg2[%c0_1, %c0_2] : memref<16x8xf32, #tpu.memory_space<vmem>>, vector<16x8xf32>
    %cst = arith.constant dense<0.000000e+00> : vector<16xf32>
    %2 = vector.multi_reduction <add>, %0, %cst [1] : vector<16x8xf32> to vector<16xf32>
    %3 = vector.shape_cast %2 : vector<16xf32> to vector<16x1xf32>
    %cst_3 = arith.constant dense<0.000000e+00> : vector<16xf32>
    %4 = vector.multi_reduction <add>, %1, %cst_3 [1] : vector<16x8xf32> to vector<16xf32>
    %5 = vector.shape_cast %4 : vector<16xf32> to vector<16x1xf32>
    %6 = arith.addf %3, %5 : vector<16x1xf32>
    %cst_4 = arith.constant 6.250000e-02 : f32
    %7 = vector.broadcast %cst_4 : f32 to vector<16x1xf32>
    %8 = arith.mulf %6, %7 : vector<16x1xf32>
    %9 = vector.broadcast %8 : vector<16x1xf32> to vector<16x8xf32>
    %10 = arith.subf %0, %9 : vector<16x8xf32>
    %11 = vector.broadcast %8 : vector<16x1xf32> to vector<16x8xf32>
    %12 = arith.subf %1, %11 : vector<16x8xf32>
    %13 = arith.mulf %10, %10 : vector<16x8xf32>
    %cst_5 = arith.constant dense<0.000000e+00> : vector<16xf32>
    %14 = vector.multi_reduction <add>, %13, %cst_5 [1] : vector<16x8xf32> to vector<16xf32>
    %15 = vector.shape_cast %14 : vector<16xf32> to vector<16x1xf32>
    %16 = arith.mulf %12, %12 : vector<16x8xf32>
    %cst_6 = arith.constant dense<0.000000e+00> : vector<16xf32>
    %17 = vector.multi_reduction <add>, %16, %cst_6 [1] : vector<16x8xf32> to vector<16xf32>
    %18 = vector.shape_cast %17 : vector<16xf32> to vector<16x1xf32>
    %19 = arith.addf %15, %18 : vector<16x1xf32>
    %cst_7 = arith.constant 6.250000e-02 : f32
    %20 = vector.broadcast %cst_7 : f32 to vector<16x1xf32>
    %21 = arith.mulf %19, %20 : vector<16x1xf32>
    %cst_8 = arith.constant 9.99999974E-6 : f32
    %22 = vector.broadcast %cst_8 : f32 to vector<16x1xf32>
    %23 = arith.addf %21, %22 : vector<16x1xf32>
    %24 = math.rsqrt %23 : vector<16x1xf32>
    %25 = vector.broadcast %24 : vector<16x1xf32> to vector<16x8xf32>
    %26 = arith.mulf %10, %25 : vector<16x8xf32>
    %27 = vector.broadcast %24 : vector<16x1xf32> to vector<16x8xf32>
    %28 = arith.mulf %12, %27 : vector<16x8xf32>
    %29 = vector.extract_strided_slice %26 {offsets = [0, 0], sizes = [16, 7], strides = [1, 1]} : vector<16x8xf32> to vector<16x7xf32>
    %30 = vector.extract_strided_slice %28 {offsets = [0, 0], sizes = [16, 7], strides = [1, 1]} : vector<16x8xf32> to vector<16x7xf32>
    %31 = vector.extract_strided_slice %26 {offsets = [0, 1], sizes = [16, 7], strides = [1, 1]} : vector<16x8xf32> to vector<16x7xf32>
    %32 = vector.extract_strided_slice %28 {offsets = [0, 0], sizes = [16, 7], strides = [1, 1]} : vector<16x8xf32> to vector<16x7xf32>
    %33 = vector.extract_strided_slice %26 {offsets = [0, 1], sizes = [16, 7], strides = [1, 1]} : vector<16x8xf32> to vector<16x7xf32>
    %34 = vector.extract_strided_slice %28 {offsets = [0, 1], sizes = [16, 7], strides = [1, 1]} : vector<16x8xf32> to vector<16x7xf32>
    %c0_9 = arith.constant 0 : index
    %c0_10 = arith.constant 0 : index
    %35 = memref.load %arg3[%c0_9, %c0_10] : memref<3x8xf32, #tpu.memory_space<smem>>
    %c1 = arith.constant 1 : index
    %c0_11 = arith.constant 0 : index
    %36 = memref.load %arg3[%c1, %c0_11] : memref<3x8xf32, #tpu.memory_space<smem>>
    %c2 = arith.constant 2 : index
    %c0_12 = arith.constant 0 : index
    %37 = memref.load %arg3[%c2, %c0_12] : memref<3x8xf32, #tpu.memory_space<smem>>
    %c0_13 = arith.constant 0 : index
    %c0_14 = arith.constant 0 : index
    %38 = memref.load %arg4[%c0_13, %c0_14] : memref<1x8xf32, #tpu.memory_space<smem>>
    %39 = vector.broadcast %35 : f32 to vector<16x7xf32>
    %40 = arith.mulf %29, %39 : vector<16x7xf32>
    %41 = vector.broadcast %36 : f32 to vector<16x7xf32>
    %42 = arith.mulf %30, %41 : vector<16x7xf32>
    %43 = arith.addf %40, %42 : vector<16x7xf32>
    %44 = vector.broadcast %37 : f32 to vector<16x7xf32>
    %45 = arith.mulf %31, %44 : vector<16x7xf32>
    %46 = arith.addf %43, %45 : vector<16x7xf32>
    %47 = vector.broadcast %38 : f32 to vector<16x7xf32>
    %48 = arith.addf %46, %47 : vector<16x7xf32>
    %49 = vector.broadcast %35 : f32 to vector<16x7xf32>
    %50 = arith.mulf %32, %49 : vector<16x7xf32>
    %51 = vector.broadcast %36 : f32 to vector<16x7xf32>
    %52 = arith.mulf %33, %51 : vector<16x7xf32>
    %53 = arith.addf %50, %52 : vector<16x7xf32>
    %54 = vector.broadcast %37 : f32 to vector<16x7xf32>
    %55 = arith.mulf %34, %54 : vector<16x7xf32>
    %56 = arith.addf %53, %55 : vector<16x7xf32>
    %57 = vector.broadcast %38 : f32 to vector<16x7xf32>
    %58 = arith.addf %56, %57 : vector<16x7xf32>
    %c0_15 = arith.constant 0 : index
    %c1_16 = arith.constant 1 : index
    %59 = memref.load %arg3[%c0_15, %c1_16] : memref<3x8xf32, #tpu.memory_space<smem>>
    %c1_17 = arith.constant 1 : index
    %c1_18 = arith.constant 1 : index
    %60 = memref.load %arg3[%c1_17, %c1_18] : memref<3x8xf32, #tpu.memory_space<smem>>
    %c2_19 = arith.constant 2 : index
    %c1_20 = arith.constant 1 : index
    %61 = memref.load %arg3[%c2_19, %c1_20] : memref<3x8xf32, #tpu.memory_space<smem>>
    %c0_21 = arith.constant 0 : index
    %c1_22 = arith.constant 1 : index
    %62 = memref.load %arg4[%c0_21, %c1_22] : memref<1x8xf32, #tpu.memory_space<smem>>
    %63 = vector.broadcast %59 : f32 to vector<16x7xf32>
    %64 = arith.mulf %29, %63 : vector<16x7xf32>
    %65 = vector.broadcast %60 : f32 to vector<16x7xf32>
    %66 = arith.mulf %30, %65 : vector<16x7xf32>
    %67 = arith.addf %64, %66 : vector<16x7xf32>
    %68 = vector.broadcast %61 : f32 to vector<16x7xf32>
    %69 = arith.mulf %31, %68 : vector<16x7xf32>
    %70 = arith.addf %67, %69 : vector<16x7xf32>
    %71 = vector.broadcast %62 : f32 to vector<16x7xf32>
    %72 = arith.addf %70, %71 : vector<16x7xf32>
    %73 = vector.broadcast %59 : f32 to vector<16x7xf32>
    %74 = arith.mulf %32, %73 : vector<16x7xf32>
    %75 = vector.broadcast %60 : f32 to vector<16x7xf32>
    %76 = arith.mulf %33, %75 : vector<16x7xf32>
    %77 = arith.addf %74, %76 : vector<16x7xf32>
    %78 = vector.broadcast %61 : f32 to vector<16x7xf32>
    %79 = arith.mulf %34, %78 : vector<16x7xf32>
    %80 = arith.addf %77, %79 : vector<16x7xf32>
    %81 = vector.broadcast %62 : f32 to vector<16x7xf32>
    %82 = arith.addf %80, %81 : vector<16x7xf32>
    %c0_23 = arith.constant 0 : index
    %c2_24 = arith.constant 2 : index
    %83 = memref.load %arg3[%c0_23, %c2_24] : memref<3x8xf32, #tpu.memory_space<smem>>
    %c1_25 = arith.constant 1 : index
    %c2_26 = arith.constant 2 : index
    %84 = memref.load %arg3[%c1_25, %c2_26] : memref<3x8xf32, #tpu.memory_space<smem>>
    %c2_27 = arith.constant 2 : index
    %c2_28 = arith.constant 2 : index
    %85 = memref.load %arg3[%c2_27, %c2_28] : memref<3x8xf32, #tpu.memory_space<smem>>
    %c0_29 = arith.constant 0 : index
    %c2_30 = arith.constant 2 : index
    %86 = memref.load %arg4[%c0_29, %c2_30] : memref<1x8xf32, #tpu.memory_space<smem>>
    %87 = vector.broadcast %83 : f32 to vector<16x7xf32>
    %88 = arith.mulf %29, %87 : vector<16x7xf32>
    %89 = vector.broadcast %84 : f32 to vector<16x7xf32>
    %90 = arith.mulf %30, %89 : vector<16x7xf32>
    %91 = arith.addf %88, %90 : vector<16x7xf32>
    %92 = vector.broadcast %85 : f32 to vector<16x7xf32>
    %93 = arith.mulf %31, %92 : vector<16x7xf32>
    %94 = arith.addf %91, %93 : vector<16x7xf32>
    %95 = vector.broadcast %86 : f32 to vector<16x7xf32>
    %96 = arith.addf %94, %95 : vector<16x7xf32>
    %97 = vector.broadcast %83 : f32 to vector<16x7xf32>
    %98 = arith.mulf %32, %97 : vector<16x7xf32>
    %99 = vector.broadcast %84 : f32 to vector<16x7xf32>
    %100 = arith.mulf %33, %99 : vector<16x7xf32>
    %101 = arith.addf %98, %100 : vector<16x7xf32>
    %102 = vector.broadcast %85 : f32 to vector<16x7xf32>
    %103 = arith.mulf %34, %102 : vector<16x7xf32>
    %104 = arith.addf %101, %103 : vector<16x7xf32>
    %105 = vector.broadcast %86 : f32 to vector<16x7xf32>
    %106 = arith.addf %104, %105 : vector<16x7xf32>
    %c0_31 = arith.constant 0 : index
    %c3 = arith.constant 3 : index
    %107 = memref.load %arg3[%c0_31, %c3] : memref<3x8xf32, #tpu.memory_space<smem>>
    %c1_32 = arith.constant 1 : index
    %c3_33 = arith.constant 3 : index
    %108 = memref.load %arg3[%c1_32, %c3_33] : memref<3x8xf32, #tpu.memory_space<smem>>
    %c2_34 = arith.constant 2 : index
    %c3_35 = arith.constant 3 : index
    %109 = memref.load %arg3[%c2_34, %c3_35] : memref<3x8xf32, #tpu.memory_space<smem>>
    %c0_36 = arith.constant 0 : index
    %c3_37 = arith.constant 3 : index
    %110 = memref.load %arg4[%c0_36, %c3_37] : memref<1x8xf32, #tpu.memory_space<smem>>
    %111 = vector.broadcast %107 : f32 to vector<16x7xf32>
    %112 = arith.mulf %29, %111 : vector<16x7xf32>
    %113 = vector.broadcast %108 : f32 to vector<16x7xf32>
    %114 = arith.mulf %30, %113 : vector<16x7xf32>
    %115 = arith.addf %112, %114 : vector<16x7xf32>
    %116 = vector.broadcast %109 : f32 to vector<16x7xf32>
    %117 = arith.mulf %31, %116 : vector<16x7xf32>
    %118 = arith.addf %115, %117 : vector<16x7xf32>
    %119 = vector.broadcast %110 : f32 to vector<16x7xf32>
    %120 = arith.addf %118, %119 : vector<16x7xf32>
    %121 = vector.broadcast %107 : f32 to vector<16x7xf32>
    %122 = arith.mulf %32, %121 : vector<16x7xf32>
    %123 = vector.broadcast %108 : f32 to vector<16x7xf32>
    %124 = arith.mulf %33, %123 : vector<16x7xf32>
    %125 = arith.addf %122, %124 : vector<16x7xf32>
    %126 = vector.broadcast %109 : f32 to vector<16x7xf32>
    %127 = arith.mulf %34, %126 : vector<16x7xf32>
    %128 = arith.addf %125, %127 : vector<16x7xf32>
    %129 = vector.broadcast %110 : f32 to vector<16x7xf32>
    %130 = arith.addf %128, %129 : vector<16x7xf32>
    %c0_38 = arith.constant 0 : index
    %c4 = arith.constant 4 : index
    %131 = memref.load %arg3[%c0_38, %c4] : memref<3x8xf32, #tpu.memory_space<smem>>
    %c1_39 = arith.constant 1 : index
    %c4_40 = arith.constant 4 : index
    %132 = memref.load %arg3[%c1_39, %c4_40] : memref<3x8xf32, #tpu.memory_space<smem>>
    %c2_41 = arith.constant 2 : index
    %c4_42 = arith.constant 4 : index
    %133 = memref.load %arg3[%c2_41, %c4_42] : memref<3x8xf32, #tpu.memory_space<smem>>
    %c0_43 = arith.constant 0 : index
    %c4_44 = arith.constant 4 : index
    %134 = memref.load %arg4[%c0_43, %c4_44] : memref<1x8xf32, #tpu.memory_space<smem>>
    %135 = vector.broadcast %131 : f32 to vector<16x7xf32>
    %136 = arith.mulf %29, %135 : vector<16x7xf32>
    %137 = vector.broadcast %132 : f32 to vector<16x7xf32>
    %138 = arith.mulf %30, %137 : vector<16x7xf32>
    %139 = arith.addf %136, %138 : vector<16x7xf32>
    %140 = vector.broadcast %133 : f32 to vector<16x7xf32>
    %141 = arith.mulf %31, %140 : vector<16x7xf32>
    %142 = arith.addf %139, %141 : vector<16x7xf32>
    %143 = vector.broadcast %134 : f32 to vector<16x7xf32>
    %144 = arith.addf %142, %143 : vector<16x7xf32>
    %145 = vector.broadcast %131 : f32 to vector<16x7xf32>
    %146 = arith.mulf %32, %145 : vector<16x7xf32>
    %147 = vector.broadcast %132 : f32 to vector<16x7xf32>
    %148 = arith.mulf %33, %147 : vector<16x7xf32>
    %149 = arith.addf %146, %148 : vector<16x7xf32>
    %150 = vector.broadcast %133 : f32 to vector<16x7xf32>
    %151 = arith.mulf %34, %150 : vector<16x7xf32>
    %152 = arith.addf %149, %151 : vector<16x7xf32>
    %153 = vector.broadcast %134 : f32 to vector<16x7xf32>
    %154 = arith.addf %152, %153 : vector<16x7xf32>
    %c0_45 = arith.constant 0 : index
    %c5 = arith.constant 5 : index
    %155 = memref.load %arg3[%c0_45, %c5] : memref<3x8xf32, #tpu.memory_space<smem>>
    %c1_46 = arith.constant 1 : index
    %c5_47 = arith.constant 5 : index
    %156 = memref.load %arg3[%c1_46, %c5_47] : memref<3x8xf32, #tpu.memory_space<smem>>
    %c2_48 = arith.constant 2 : index
    %c5_49 = arith.constant 5 : index
    %157 = memref.load %arg3[%c2_48, %c5_49] : memref<3x8xf32, #tpu.memory_space<smem>>
    %c0_50 = arith.constant 0 : index
    %c5_51 = arith.constant 5 : index
    %158 = memref.load %arg4[%c0_50, %c5_51] : memref<1x8xf32, #tpu.memory_space<smem>>
    %159 = vector.broadcast %155 : f32 to vector<16x7xf32>
    %160 = arith.mulf %29, %159 : vector<16x7xf32>
    %161 = vector.broadcast %156 : f32 to vector<16x7xf32>
    %162 = arith.mulf %30, %161 : vector<16x7xf32>
    %163 = arith.addf %160, %162 : vector<16x7xf32>
    %164 = vector.broadcast %157 : f32 to vector<16x7xf32>
    %165 = arith.mulf %31, %164 : vector<16x7xf32>
    %166 = arith.addf %163, %165 : vector<16x7xf32>
    %167 = vector.broadcast %158 : f32 to vector<16x7xf32>
    %168 = arith.addf %166, %167 : vector<16x7xf32>
    %169 = vector.broadcast %155 : f32 to vector<16x7xf32>
    %170 = arith.mulf %32, %169 : vector<16x7xf32>
    %171 = vector.broadcast %156 : f32 to vector<16x7xf32>
    %172 = arith.mulf %33, %171 : vector<16x7xf32>
    %173 = arith.addf %170, %172 : vector<16x7xf32>
    %174 = vector.broadcast %157 : f32 to vector<16x7xf32>
    %175 = arith.mulf %34, %174 : vector<16x7xf32>
    %176 = arith.addf %173, %175 : vector<16x7xf32>
    %177 = vector.broadcast %158 : f32 to vector<16x7xf32>
    %178 = arith.addf %176, %177 : vector<16x7xf32>
    %c0_52 = arith.constant 0 : index
    %c6 = arith.constant 6 : index
    %179 = memref.load %arg3[%c0_52, %c6] : memref<3x8xf32, #tpu.memory_space<smem>>
    %c1_53 = arith.constant 1 : index
    %c6_54 = arith.constant 6 : index
    %180 = memref.load %arg3[%c1_53, %c6_54] : memref<3x8xf32, #tpu.memory_space<smem>>
    %c2_55 = arith.constant 2 : index
    %c6_56 = arith.constant 6 : index
    %181 = memref.load %arg3[%c2_55, %c6_56] : memref<3x8xf32, #tpu.memory_space<smem>>
    %c0_57 = arith.constant 0 : index
    %c6_58 = arith.constant 6 : index
    %182 = memref.load %arg4[%c0_57, %c6_58] : memref<1x8xf32, #tpu.memory_space<smem>>
    %183 = vector.broadcast %179 : f32 to vector<16x7xf32>
    %184 = arith.mulf %29, %183 : vector<16x7xf32>
    %185 = vector.broadcast %180 : f32 to vector<16x7xf32>
    %186 = arith.mulf %30, %185 : vector<16x7xf32>
    %187 = arith.addf %184, %186 : vector<16x7xf32>
    %188 = vector.broadcast %181 : f32 to vector<16x7xf32>
    %189 = arith.mulf %31, %188 : vector<16x7xf32>
    %190 = arith.addf %187, %189 : vector<16x7xf32>
    %191 = vector.broadcast %182 : f32 to vector<16x7xf32>
    %192 = arith.addf %190, %191 : vector<16x7xf32>
    %193 = vector.broadcast %179 : f32 to vector<16x7xf32>
    %194 = arith.mulf %32, %193 : vector<16x7xf32>
    %195 = vector.broadcast %180 : f32 to vector<16x7xf32>
    %196 = arith.mulf %33, %195 : vector<16x7xf32>
    %197 = arith.addf %194, %196 : vector<16x7xf32>
    %198 = vector.broadcast %181 : f32 to vector<16x7xf32>
    %199 = arith.mulf %34, %198 : vector<16x7xf32>
    %200 = arith.addf %197, %199 : vector<16x7xf32>
    %201 = vector.broadcast %182 : f32 to vector<16x7xf32>
    %202 = arith.addf %200, %201 : vector<16x7xf32>
    %c0_59 = arith.constant 0 : index
    %c7 = arith.constant 7 : index
    %203 = memref.load %arg3[%c0_59, %c7] : memref<3x8xf32, #tpu.memory_space<smem>>
    %c1_60 = arith.constant 1 : index
    %c7_61 = arith.constant 7 : index
    %204 = memref.load %arg3[%c1_60, %c7_61] : memref<3x8xf32, #tpu.memory_space<smem>>
    %c2_62 = arith.constant 2 : index
    %c7_63 = arith.constant 7 : index
    %205 = memref.load %arg3[%c2_62, %c7_63] : memref<3x8xf32, #tpu.memory_space<smem>>
    %c0_64 = arith.constant 0 : index
    %c7_65 = arith.constant 7 : index
    %206 = memref.load %arg4[%c0_64, %c7_65] : memref<1x8xf32, #tpu.memory_space<smem>>
    %207 = vector.broadcast %203 : f32 to vector<16x7xf32>
    %208 = arith.mulf %29, %207 : vector<16x7xf32>
    %209 = vector.broadcast %204 : f32 to vector<16x7xf32>
    %210 = arith.mulf %30, %209 : vector<16x7xf32>
    %211 = arith.addf %208, %210 : vector<16x7xf32>
    %212 = vector.broadcast %205 : f32 to vector<16x7xf32>
    %213 = arith.mulf %31, %212 : vector<16x7xf32>
    %214 = arith.addf %211, %213 : vector<16x7xf32>
    %215 = vector.broadcast %206 : f32 to vector<16x7xf32>
    %216 = arith.addf %214, %215 : vector<16x7xf32>
    %217 = vector.broadcast %203 : f32 to vector<16x7xf32>
    %218 = arith.mulf %32, %217 : vector<16x7xf32>
    %219 = vector.broadcast %204 : f32 to vector<16x7xf32>
    %220 = arith.mulf %33, %219 : vector<16x7xf32>
    %221 = arith.addf %218, %220 : vector<16x7xf32>
    %222 = vector.broadcast %205 : f32 to vector<16x7xf32>
    %223 = arith.mulf %34, %222 : vector<16x7xf32>
    %224 = arith.addf %221, %223 : vector<16x7xf32>
    %225 = vector.broadcast %206 : f32 to vector<16x7xf32>
    %226 = arith.addf %224, %225 : vector<16x7xf32>
    %c0_66 = arith.constant 0 : index
    %c0_67 = arith.constant 0 : index
    %227 = memref.load %arg5[%c0_66, %c0_67] : memref<8x8xf32, #tpu.memory_space<smem>>
    %228 = vector.broadcast %227 : f32 to vector<16x7xf32>
    %229 = arith.mulf %48, %228 : vector<16x7xf32>
    %c1_68 = arith.constant 1 : index
    %c0_69 = arith.constant 0 : index
    %230 = memref.load %arg5[%c1_68, %c0_69] : memref<8x8xf32, #tpu.memory_space<smem>>
    %231 = vector.broadcast %230 : f32 to vector<16x7xf32>
    %232 = arith.mulf %72, %231 : vector<16x7xf32>
    %233 = arith.addf %229, %232 : vector<16x7xf32>
    %c2_70 = arith.constant 2 : index
    %c0_71 = arith.constant 0 : index
    %234 = memref.load %arg5[%c2_70, %c0_71] : memref<8x8xf32, #tpu.memory_space<smem>>
    %235 = vector.broadcast %234 : f32 to vector<16x7xf32>
    %236 = arith.mulf %96, %235 : vector<16x7xf32>
    %237 = arith.addf %233, %236 : vector<16x7xf32>
    %c3_72 = arith.constant 3 : index
    %c0_73 = arith.constant 0 : index
    %238 = memref.load %arg5[%c3_72, %c0_73] : memref<8x8xf32, #tpu.memory_space<smem>>
    %239 = vector.broadcast %238 : f32 to vector<16x7xf32>
    %240 = arith.mulf %120, %239 : vector<16x7xf32>
    %241 = arith.addf %237, %240 : vector<16x7xf32>
    %c4_74 = arith.constant 4 : index
    %c0_75 = arith.constant 0 : index
    %242 = memref.load %arg5[%c4_74, %c0_75] : memref<8x8xf32, #tpu.memory_space<smem>>
    %243 = vector.broadcast %242 : f32 to vector<16x7xf32>
    %244 = arith.mulf %144, %243 : vector<16x7xf32>
    %245 = arith.addf %241, %244 : vector<16x7xf32>
    %c5_76 = arith.constant 5 : index
    %c0_77 = arith.constant 0 : index
    %246 = memref.load %arg5[%c5_76, %c0_77] : memref<8x8xf32, #tpu.memory_space<smem>>
    %247 = vector.broadcast %246 : f32 to vector<16x7xf32>
    %248 = arith.mulf %168, %247 : vector<16x7xf32>
    %249 = arith.addf %245, %248 : vector<16x7xf32>
    %c6_78 = arith.constant 6 : index
    %c0_79 = arith.constant 0 : index
    %250 = memref.load %arg5[%c6_78, %c0_79] : memref<8x8xf32, #tpu.memory_space<smem>>
    %251 = vector.broadcast %250 : f32 to vector<16x7xf32>
    %252 = arith.mulf %192, %251 : vector<16x7xf32>
    %253 = arith.addf %249, %252 : vector<16x7xf32>
    %c7_80 = arith.constant 7 : index
    %c0_81 = arith.constant 0 : index
    %254 = memref.load %arg5[%c7_80, %c0_81] : memref<8x8xf32, #tpu.memory_space<smem>>
    %255 = vector.broadcast %254 : f32 to vector<16x7xf32>
    %256 = arith.mulf %216, %255 : vector<16x7xf32>
    %257 = arith.addf %253, %256 : vector<16x7xf32>
    %c0_82 = arith.constant 0 : index
    %c0_83 = arith.constant 0 : index
    %258 = memref.load %arg6[%c0_82, %c0_83] : memref<1x8xf32, #tpu.memory_space<smem>>
    %259 = vector.broadcast %258 : f32 to vector<16x7xf32>
    %260 = arith.addf %257, %259 : vector<16x7xf32>
    %c0_84 = arith.constant 0 : index
    %c1_85 = arith.constant 1 : index
    %261 = memref.load %arg5[%c0_84, %c1_85] : memref<8x8xf32, #tpu.memory_space<smem>>
    %262 = vector.broadcast %261 : f32 to vector<16x7xf32>
    %263 = arith.mulf %48, %262 : vector<16x7xf32>
    %c1_86 = arith.constant 1 : index
    %c1_87 = arith.constant 1 : index
    %264 = memref.load %arg5[%c1_86, %c1_87] : memref<8x8xf32, #tpu.memory_space<smem>>
    %265 = vector.broadcast %264 : f32 to vector<16x7xf32>
    %266 = arith.mulf %72, %265 : vector<16x7xf32>
    %267 = arith.addf %263, %266 : vector<16x7xf32>
    %c2_88 = arith.constant 2 : index
    %c1_89 = arith.constant 1 : index
    %268 = memref.load %arg5[%c2_88, %c1_89] : memref<8x8xf32, #tpu.memory_space<smem>>
    %269 = vector.broadcast %268 : f32 to vector<16x7xf32>
    %270 = arith.mulf %96, %269 : vector<16x7xf32>
    %271 = arith.addf %267, %270 : vector<16x7xf32>
    %c3_90 = arith.constant 3 : index
    %c1_91 = arith.constant 1 : index
    %272 = memref.load %arg5[%c3_90, %c1_91] : memref<8x8xf32, #tpu.memory_space<smem>>
    %273 = vector.broadcast %272 : f32 to vector<16x7xf32>
    %274 = arith.mulf %120, %273 : vector<16x7xf32>
    %275 = arith.addf %271, %274 : vector<16x7xf32>
    %c4_92 = arith.constant 4 : index
    %c1_93 = arith.constant 1 : index
    %276 = memref.load %arg5[%c4_92, %c1_93] : memref<8x8xf32, #tpu.memory_space<smem>>
    %277 = vector.broadcast %276 : f32 to vector<16x7xf32>
    %278 = arith.mulf %144, %277 : vector<16x7xf32>
    %279 = arith.addf %275, %278 : vector<16x7xf32>
    %c5_94 = arith.constant 5 : index
    %c1_95 = arith.constant 1 : index
    %280 = memref.load %arg5[%c5_94, %c1_95] : memref<8x8xf32, #tpu.memory_space<smem>>
    %281 = vector.broadcast %280 : f32 to vector<16x7xf32>
    %282 = arith.mulf %168, %281 : vector<16x7xf32>
    %283 = arith.addf %279, %282 : vector<16x7xf32>
    %c6_96 = arith.constant 6 : index
    %c1_97 = arith.constant 1 : index
    %284 = memref.load %arg5[%c6_96, %c1_97] : memref<8x8xf32, #tpu.memory_space<smem>>
    %285 = vector.broadcast %284 : f32 to vector<16x7xf32>
    %286 = arith.mulf %192, %285 : vector<16x7xf32>
    %287 = arith.addf %283, %286 : vector<16x7xf32>
    %c7_98 = arith.constant 7 : index
    %c1_99 = arith.constant 1 : index
    %288 = memref.load %arg5[%c7_98, %c1_99] : memref<8x8xf32, #tpu.memory_space<smem>>
    %289 = vector.broadcast %288 : f32 to vector<16x7xf32>
    %290 = arith.mulf %216, %289 : vector<16x7xf32>
    %291 = arith.addf %287, %290 : vector<16x7xf32>
    %c0_100 = arith.constant 0 : index
    %c1_101 = arith.constant 1 : index
    %292 = memref.load %arg6[%c0_100, %c1_101] : memref<1x8xf32, #tpu.memory_space<smem>>
    %293 = vector.broadcast %292 : f32 to vector<16x7xf32>
    %294 = arith.addf %291, %293 : vector<16x7xf32>
    %c0_102 = arith.constant 0 : index
    %c2_103 = arith.constant 2 : index
    %295 = memref.load %arg5[%c0_102, %c2_103] : memref<8x8xf32, #tpu.memory_space<smem>>
    %296 = vector.broadcast %295 : f32 to vector<16x7xf32>
    %297 = arith.mulf %48, %296 : vector<16x7xf32>
    %c1_104 = arith.constant 1 : index
    %c2_105 = arith.constant 2 : index
    %298 = memref.load %arg5[%c1_104, %c2_105] : memref<8x8xf32, #tpu.memory_space<smem>>
    %299 = vector.broadcast %298 : f32 to vector<16x7xf32>
    %300 = arith.mulf %72, %299 : vector<16x7xf32>
    %301 = arith.addf %297, %300 : vector<16x7xf32>
    %c2_106 = arith.constant 2 : index
    %c2_107 = arith.constant 2 : index
    %302 = memref.load %arg5[%c2_106, %c2_107] : memref<8x8xf32, #tpu.memory_space<smem>>
    %303 = vector.broadcast %302 : f32 to vector<16x7xf32>
    %304 = arith.mulf %96, %303 : vector<16x7xf32>
    %305 = arith.addf %301, %304 : vector<16x7xf32>
    %c3_108 = arith.constant 3 : index
    %c2_109 = arith.constant 2 : index
    %306 = memref.load %arg5[%c3_108, %c2_109] : memref<8x8xf32, #tpu.memory_space<smem>>
    %307 = vector.broadcast %306 : f32 to vector<16x7xf32>
    %308 = arith.mulf %120, %307 : vector<16x7xf32>
    %309 = arith.addf %305, %308 : vector<16x7xf32>
    %c4_110 = arith.constant 4 : index
    %c2_111 = arith.constant 2 : index
    %310 = memref.load %arg5[%c4_110, %c2_111] : memref<8x8xf32, #tpu.memory_space<smem>>
    %311 = vector.broadcast %310 : f32 to vector<16x7xf32>
    %312 = arith.mulf %144, %311 : vector<16x7xf32>
    %313 = arith.addf %309, %312 : vector<16x7xf32>
    %c5_112 = arith.constant 5 : index
    %c2_113 = arith.constant 2 : index
    %314 = memref.load %arg5[%c5_112, %c2_113] : memref<8x8xf32, #tpu.memory_space<smem>>
    %315 = vector.broadcast %314 : f32 to vector<16x7xf32>
    %316 = arith.mulf %168, %315 : vector<16x7xf32>
    %317 = arith.addf %313, %316 : vector<16x7xf32>
    %c6_114 = arith.constant 6 : index
    %c2_115 = arith.constant 2 : index
    %318 = memref.load %arg5[%c6_114, %c2_115] : memref<8x8xf32, #tpu.memory_space<smem>>
    %319 = vector.broadcast %318 : f32 to vector<16x7xf32>
    %320 = arith.mulf %192, %319 : vector<16x7xf32>
    %321 = arith.addf %317, %320 : vector<16x7xf32>
    %c7_116 = arith.constant 7 : index
    %c2_117 = arith.constant 2 : index
    %322 = memref.load %arg5[%c7_116, %c2_117] : memref<8x8xf32, #tpu.memory_space<smem>>
    %323 = vector.broadcast %322 : f32 to vector<16x7xf32>
    %324 = arith.mulf %216, %323 : vector<16x7xf32>
    %325 = arith.addf %321, %324 : vector<16x7xf32>
    %c0_118 = arith.constant 0 : index
    %c2_119 = arith.constant 2 : index
    %326 = memref.load %arg6[%c0_118, %c2_119] : memref<1x8xf32, #tpu.memory_space<smem>>
    %327 = vector.broadcast %326 : f32 to vector<16x7xf32>
    %328 = arith.addf %325, %327 : vector<16x7xf32>
    %c0_120 = arith.constant 0 : index
    %c3_121 = arith.constant 3 : index
    %329 = memref.load %arg5[%c0_120, %c3_121] : memref<8x8xf32, #tpu.memory_space<smem>>
    %330 = vector.broadcast %329 : f32 to vector<16x7xf32>
    %331 = arith.mulf %48, %330 : vector<16x7xf32>
    %c1_122 = arith.constant 1 : index
    %c3_123 = arith.constant 3 : index
    %332 = memref.load %arg5[%c1_122, %c3_123] : memref<8x8xf32, #tpu.memory_space<smem>>
    %333 = vector.broadcast %332 : f32 to vector<16x7xf32>
    %334 = arith.mulf %72, %333 : vector<16x7xf32>
    %335 = arith.addf %331, %334 : vector<16x7xf32>
    %c2_124 = arith.constant 2 : index
    %c3_125 = arith.constant 3 : index
    %336 = memref.load %arg5[%c2_124, %c3_125] : memref<8x8xf32, #tpu.memory_space<smem>>
    %337 = vector.broadcast %336 : f32 to vector<16x7xf32>
    %338 = arith.mulf %96, %337 : vector<16x7xf32>
    %339 = arith.addf %335, %338 : vector<16x7xf32>
    %c3_126 = arith.constant 3 : index
    %c3_127 = arith.constant 3 : index
    %340 = memref.load %arg5[%c3_126, %c3_127] : memref<8x8xf32, #tpu.memory_space<smem>>
    %341 = vector.broadcast %340 : f32 to vector<16x7xf32>
    %342 = arith.mulf %120, %341 : vector<16x7xf32>
    %343 = arith.addf %339, %342 : vector<16x7xf32>
    %c4_128 = arith.constant 4 : index
    %c3_129 = arith.constant 3 : index
    %344 = memref.load %arg5[%c4_128, %c3_129] : memref<8x8xf32, #tpu.memory_space<smem>>
    %345 = vector.broadcast %344 : f32 to vector<16x7xf32>
    %346 = arith.mulf %144, %345 : vector<16x7xf32>
    %347 = arith.addf %343, %346 : vector<16x7xf32>
    %c5_130 = arith.constant 5 : index
    %c3_131 = arith.constant 3 : index
    %348 = memref.load %arg5[%c5_130, %c3_131] : memref<8x8xf32, #tpu.memory_space<smem>>
    %349 = vector.broadcast %348 : f32 to vector<16x7xf32>
    %350 = arith.mulf %168, %349 : vector<16x7xf32>
    %351 = arith.addf %347, %350 : vector<16x7xf32>
    %c6_132 = arith.constant 6 : index
    %c3_133 = arith.constant 3 : index
    %352 = memref.load %arg5[%c6_132, %c3_133] : memref<8x8xf32, #tpu.memory_space<smem>>
    %353 = vector.broadcast %352 : f32 to vector<16x7xf32>
    %354 = arith.mulf %192, %353 : vector<16x7xf32>
    %355 = arith.addf %351, %354 : vector<16x7xf32>
    %c7_134 = arith.constant 7 : index
    %c3_135 = arith.constant 3 : index
    %356 = memref.load %arg5[%c7_134, %c3_135] : memref<8x8xf32, #tpu.memory_space<smem>>
    %357 = vector.broadcast %356 : f32 to vector<16x7xf32>
    %358 = arith.mulf %216, %357 : vector<16x7xf32>
    %359 = arith.addf %355, %358 : vector<16x7xf32>
    %c0_136 = arith.constant 0 : index
    %c3_137 = arith.constant 3 : index
    %360 = memref.load %arg6[%c0_136, %c3_137] : memref<1x8xf32, #tpu.memory_space<smem>>
    %361 = vector.broadcast %360 : f32 to vector<16x7xf32>
    %362 = arith.addf %359, %361 : vector<16x7xf32>
    %c0_138 = arith.constant 0 : index
    %c4_139 = arith.constant 4 : index
    %363 = memref.load %arg5[%c0_138, %c4_139] : memref<8x8xf32, #tpu.memory_space<smem>>
    %364 = vector.broadcast %363 : f32 to vector<16x7xf32>
    %365 = arith.mulf %48, %364 : vector<16x7xf32>
    %c1_140 = arith.constant 1 : index
    %c4_141 = arith.constant 4 : index
    %366 = memref.load %arg5[%c1_140, %c4_141] : memref<8x8xf32, #tpu.memory_space<smem>>
    %367 = vector.broadcast %366 : f32 to vector<16x7xf32>
    %368 = arith.mulf %72, %367 : vector<16x7xf32>
    %369 = arith.addf %365, %368 : vector<16x7xf32>
    %c2_142 = arith.constant 2 : index
    %c4_143 = arith.constant 4 : index
    %370 = memref.load %arg5[%c2_142, %c4_143] : memref<8x8xf32, #tpu.memory_space<smem>>
    %371 = vector.broadcast %370 : f32 to vector<16x7xf32>
    %372 = arith.mulf %96, %371 : vector<16x7xf32>
    %373 = arith.addf %369, %372 : vector<16x7xf32>
    %c3_144 = arith.constant 3 : index
    %c4_145 = arith.constant 4 : index
    %374 = memref.load %arg5[%c3_144, %c4_145] : memref<8x8xf32, #tpu.memory_space<smem>>
    %375 = vector.broadcast %374 : f32 to vector<16x7xf32>
    %376 = arith.mulf %120, %375 : vector<16x7xf32>
    %377 = arith.addf %373, %376 : vector<16x7xf32>
    %c4_146 = arith.constant 4 : index
    %c4_147 = arith.constant 4 : index
    %378 = memref.load %arg5[%c4_146, %c4_147] : memref<8x8xf32, #tpu.memory_space<smem>>
    %379 = vector.broadcast %378 : f32 to vector<16x7xf32>
    %380 = arith.mulf %144, %379 : vector<16x7xf32>
    %381 = arith.addf %377, %380 : vector<16x7xf32>
    %c5_148 = arith.constant 5 : index
    %c4_149 = arith.constant 4 : index
    %382 = memref.load %arg5[%c5_148, %c4_149] : memref<8x8xf32, #tpu.memory_space<smem>>
    %383 = vector.broadcast %382 : f32 to vector<16x7xf32>
    %384 = arith.mulf %168, %383 : vector<16x7xf32>
    %385 = arith.addf %381, %384 : vector<16x7xf32>
    %c6_150 = arith.constant 6 : index
    %c4_151 = arith.constant 4 : index
    %386 = memref.load %arg5[%c6_150, %c4_151] : memref<8x8xf32, #tpu.memory_space<smem>>
    %387 = vector.broadcast %386 : f32 to vector<16x7xf32>
    %388 = arith.mulf %192, %387 : vector<16x7xf32>
    %389 = arith.addf %385, %388 : vector<16x7xf32>
    %c7_152 = arith.constant 7 : index
    %c4_153 = arith.constant 4 : index
    %390 = memref.load %arg5[%c7_152, %c4_153] : memref<8x8xf32, #tpu.memory_space<smem>>
    %391 = vector.broadcast %390 : f32 to vector<16x7xf32>
    %392 = arith.mulf %216, %391 : vector<16x7xf32>
    %393 = arith.addf %389, %392 : vector<16x7xf32>
    %c0_154 = arith.constant 0 : index
    %c4_155 = arith.constant 4 : index
    %394 = memref.load %arg6[%c0_154, %c4_155] : memref<1x8xf32, #tpu.memory_space<smem>>
    %395 = vector.broadcast %394 : f32 to vector<16x7xf32>
    %396 = arith.addf %393, %395 : vector<16x7xf32>
    %c0_156 = arith.constant 0 : index
    %c5_157 = arith.constant 5 : index
    %397 = memref.load %arg5[%c0_156, %c5_157] : memref<8x8xf32, #tpu.memory_space<smem>>
    %398 = vector.broadcast %397 : f32 to vector<16x7xf32>
    %399 = arith.mulf %48, %398 : vector<16x7xf32>
    %c1_158 = arith.constant 1 : index
    %c5_159 = arith.constant 5 : index
    %400 = memref.load %arg5[%c1_158, %c5_159] : memref<8x8xf32, #tpu.memory_space<smem>>
    %401 = vector.broadcast %400 : f32 to vector<16x7xf32>
    %402 = arith.mulf %72, %401 : vector<16x7xf32>
    %403 = arith.addf %399, %402 : vector<16x7xf32>
    %c2_160 = arith.constant 2 : index
    %c5_161 = arith.constant 5 : index
    %404 = memref.load %arg5[%c2_160, %c5_161] : memref<8x8xf32, #tpu.memory_space<smem>>
    %405 = vector.broadcast %404 : f32 to vector<16x7xf32>
    %406 = arith.mulf %96, %405 : vector<16x7xf32>
    %407 = arith.addf %403, %406 : vector<16x7xf32>
    %c3_162 = arith.constant 3 : index
    %c5_163 = arith.constant 5 : index
    %408 = memref.load %arg5[%c3_162, %c5_163] : memref<8x8xf32, #tpu.memory_space<smem>>
    %409 = vector.broadcast %408 : f32 to vector<16x7xf32>
    %410 = arith.mulf %120, %409 : vector<16x7xf32>
    %411 = arith.addf %407, %410 : vector<16x7xf32>
    %c4_164 = arith.constant 4 : index
    %c5_165 = arith.constant 5 : index
    %412 = memref.load %arg5[%c4_164, %c5_165] : memref<8x8xf32, #tpu.memory_space<smem>>
    %413 = vector.broadcast %412 : f32 to vector<16x7xf32>
    %414 = arith.mulf %144, %413 : vector<16x7xf32>
    %415 = arith.addf %411, %414 : vector<16x7xf32>
    %c5_166 = arith.constant 5 : index
    %c5_167 = arith.constant 5 : index
    %416 = memref.load %arg5[%c5_166, %c5_167] : memref<8x8xf32, #tpu.memory_space<smem>>
    %417 = vector.broadcast %416 : f32 to vector<16x7xf32>
    %418 = arith.mulf %168, %417 : vector<16x7xf32>
    %419 = arith.addf %415, %418 : vector<16x7xf32>
    %c6_168 = arith.constant 6 : index
    %c5_169 = arith.constant 5 : index
    %420 = memref.load %arg5[%c6_168, %c5_169] : memref<8x8xf32, #tpu.memory_space<smem>>
    %421 = vector.broadcast %420 : f32 to vector<16x7xf32>
    %422 = arith.mulf %192, %421 : vector<16x7xf32>
    %423 = arith.addf %419, %422 : vector<16x7xf32>
    %c7_170 = arith.constant 7 : index
    %c5_171 = arith.constant 5 : index
    %424 = memref.load %arg5[%c7_170, %c5_171] : memref<8x8xf32, #tpu.memory_space<smem>>
    %425 = vector.broadcast %424 : f32 to vector<16x7xf32>
    %426 = arith.mulf %216, %425 : vector<16x7xf32>
    %427 = arith.addf %423, %426 : vector<16x7xf32>
    %c0_172 = arith.constant 0 : index
    %c5_173 = arith.constant 5 : index
    %428 = memref.load %arg6[%c0_172, %c5_173] : memref<1x8xf32, #tpu.memory_space<smem>>
    %429 = vector.broadcast %428 : f32 to vector<16x7xf32>
    %430 = arith.addf %427, %429 : vector<16x7xf32>
    %c0_174 = arith.constant 0 : index
    %c6_175 = arith.constant 6 : index
    %431 = memref.load %arg5[%c0_174, %c6_175] : memref<8x8xf32, #tpu.memory_space<smem>>
    %432 = vector.broadcast %431 : f32 to vector<16x7xf32>
    %433 = arith.mulf %48, %432 : vector<16x7xf32>
    %c1_176 = arith.constant 1 : index
    %c6_177 = arith.constant 6 : index
    %434 = memref.load %arg5[%c1_176, %c6_177] : memref<8x8xf32, #tpu.memory_space<smem>>
    %435 = vector.broadcast %434 : f32 to vector<16x7xf32>
    %436 = arith.mulf %72, %435 : vector<16x7xf32>
    %437 = arith.addf %433, %436 : vector<16x7xf32>
    %c2_178 = arith.constant 2 : index
    %c6_179 = arith.constant 6 : index
    %438 = memref.load %arg5[%c2_178, %c6_179] : memref<8x8xf32, #tpu.memory_space<smem>>
    %439 = vector.broadcast %438 : f32 to vector<16x7xf32>
    %440 = arith.mulf %96, %439 : vector<16x7xf32>
    %441 = arith.addf %437, %440 : vector<16x7xf32>
    %c3_180 = arith.constant 3 : index
    %c6_181 = arith.constant 6 : index
    %442 = memref.load %arg5[%c3_180, %c6_181] : memref<8x8xf32, #tpu.memory_space<smem>>
    %443 = vector.broadcast %442 : f32 to vector<16x7xf32>
    %444 = arith.mulf %120, %443 : vector<16x7xf32>
    %445 = arith.addf %441, %444 : vector<16x7xf32>
    %c4_182 = arith.constant 4 : index
    %c6_183 = arith.constant 6 : index
    %446 = memref.load %arg5[%c4_182, %c6_183] : memref<8x8xf32, #tpu.memory_space<smem>>
    %447 = vector.broadcast %446 : f32 to vector<16x7xf32>
    %448 = arith.mulf %144, %447 : vector<16x7xf32>
    %449 = arith.addf %445, %448 : vector<16x7xf32>
    %c5_184 = arith.constant 5 : index
    %c6_185 = arith.constant 6 : index
    %450 = memref.load %arg5[%c5_184, %c6_185] : memref<8x8xf32, #tpu.memory_space<smem>>
    %451 = vector.broadcast %450 : f32 to vector<16x7xf32>
    %452 = arith.mulf %168, %451 : vector<16x7xf32>
    %453 = arith.addf %449, %452 : vector<16x7xf32>
    %c6_186 = arith.constant 6 : index
    %c6_187 = arith.constant 6 : index
    %454 = memref.load %arg5[%c6_186, %c6_187] : memref<8x8xf32, #tpu.memory_space<smem>>
    %455 = vector.broadcast %454 : f32 to vector<16x7xf32>
    %456 = arith.mulf %192, %455 : vector<16x7xf32>
    %457 = arith.addf %453, %456 : vector<16x7xf32>
    %c7_188 = arith.constant 7 : index
    %c6_189 = arith.constant 6 : index
    %458 = memref.load %arg5[%c7_188, %c6_189] : memref<8x8xf32, #tpu.memory_space<smem>>
    %459 = vector.broadcast %458 : f32 to vector<16x7xf32>
    %460 = arith.mulf %216, %459 : vector<16x7xf32>
    %461 = arith.addf %457, %460 : vector<16x7xf32>
    %c0_190 = arith.constant 0 : index
    %c6_191 = arith.constant 6 : index
    %462 = memref.load %arg6[%c0_190, %c6_191] : memref<1x8xf32, #tpu.memory_space<smem>>
    %463 = vector.broadcast %462 : f32 to vector<16x7xf32>
    %464 = arith.addf %461, %463 : vector<16x7xf32>
    %c0_192 = arith.constant 0 : index
    %c7_193 = arith.constant 7 : index
    %465 = memref.load %arg5[%c0_192, %c7_193] : memref<8x8xf32, #tpu.memory_space<smem>>
    %466 = vector.broadcast %465 : f32 to vector<16x7xf32>
    %467 = arith.mulf %48, %466 : vector<16x7xf32>
    %c1_194 = arith.constant 1 : index
    %c7_195 = arith.constant 7 : index
    %468 = memref.load %arg5[%c1_194, %c7_195] : memref<8x8xf32, #tpu.memory_space<smem>>
    %469 = vector.broadcast %468 : f32 to vector<16x7xf32>
    %470 = arith.mulf %72, %469 : vector<16x7xf32>
    %471 = arith.addf %467, %470 : vector<16x7xf32>
    %c2_196 = arith.constant 2 : index
    %c7_197 = arith.constant 7 : index
    %472 = memref.load %arg5[%c2_196, %c7_197] : memref<8x8xf32, #tpu.memory_space<smem>>
    %473 = vector.broadcast %472 : f32 to vector<16x7xf32>
    %474 = arith.mulf %96, %473 : vector<16x7xf32>
    %475 = arith.addf %471, %474 : vector<16x7xf32>
    %c3_198 = arith.constant 3 : index
    %c7_199 = arith.constant 7 : index
    %476 = memref.load %arg5[%c3_198, %c7_199] : memref<8x8xf32, #tpu.memory_space<smem>>
    %477 = vector.broadcast %476 : f32 to vector<16x7xf32>
    %478 = arith.mulf %120, %477 : vector<16x7xf32>
    %479 = arith.addf %475, %478 : vector<16x7xf32>
    %c4_200 = arith.constant 4 : index
    %c7_201 = arith.constant 7 : index
    %480 = memref.load %arg5[%c4_200, %c7_201] : memref<8x8xf32, #tpu.memory_space<smem>>
    %481 = vector.broadcast %480 : f32 to vector<16x7xf32>
    %482 = arith.mulf %144, %481 : vector<16x7xf32>
    %483 = arith.addf %479, %482 : vector<16x7xf32>
    %c5_202 = arith.constant 5 : index
    %c7_203 = arith.constant 7 : index
    %484 = memref.load %arg5[%c5_202, %c7_203] : memref<8x8xf32, #tpu.memory_space<smem>>
    %485 = vector.broadcast %484 : f32 to vector<16x7xf32>
    %486 = arith.mulf %168, %485 : vector<16x7xf32>
    %487 = arith.addf %483, %486 : vector<16x7xf32>
    %c6_204 = arith.constant 6 : index
    %c7_205 = arith.constant 7 : index
    %488 = memref.load %arg5[%c6_204, %c7_205] : memref<8x8xf32, #tpu.memory_space<smem>>
    %489 = vector.broadcast %488 : f32 to vector<16x7xf32>
    %490 = arith.mulf %192, %489 : vector<16x7xf32>
    %491 = arith.addf %487, %490 : vector<16x7xf32>
    %c7_206 = arith.constant 7 : index
    %c7_207 = arith.constant 7 : index
    %492 = memref.load %arg5[%c7_206, %c7_207] : memref<8x8xf32, #tpu.memory_space<smem>>
    %493 = vector.broadcast %492 : f32 to vector<16x7xf32>
    %494 = arith.mulf %216, %493 : vector<16x7xf32>
    %495 = arith.addf %491, %494 : vector<16x7xf32>
    %c0_208 = arith.constant 0 : index
    %c7_209 = arith.constant 7 : index
    %496 = memref.load %arg6[%c0_208, %c7_209] : memref<1x8xf32, #tpu.memory_space<smem>>
    %497 = vector.broadcast %496 : f32 to vector<16x7xf32>
    %498 = arith.addf %495, %497 : vector<16x7xf32>
    %499 = vector.extract_strided_slice %58 {offsets = [0, 0], sizes = [16, 6], strides = [1, 1]} : vector<16x7xf32> to vector<16x6xf32>
    %500 = vector.extract_strided_slice %82 {offsets = [0, 0], sizes = [16, 6], strides = [1, 1]} : vector<16x7xf32> to vector<16x6xf32>
    %501 = vector.extract_strided_slice %106 {offsets = [0, 0], sizes = [16, 6], strides = [1, 1]} : vector<16x7xf32> to vector<16x6xf32>
    %502 = vector.extract_strided_slice %130 {offsets = [0, 0], sizes = [16, 6], strides = [1, 1]} : vector<16x7xf32> to vector<16x6xf32>
    %503 = vector.extract_strided_slice %154 {offsets = [0, 0], sizes = [16, 6], strides = [1, 1]} : vector<16x7xf32> to vector<16x6xf32>
    %504 = vector.extract_strided_slice %178 {offsets = [0, 0], sizes = [16, 6], strides = [1, 1]} : vector<16x7xf32> to vector<16x6xf32>
    %505 = vector.extract_strided_slice %202 {offsets = [0, 0], sizes = [16, 6], strides = [1, 1]} : vector<16x7xf32> to vector<16x6xf32>
    %506 = vector.extract_strided_slice %226 {offsets = [0, 0], sizes = [16, 6], strides = [1, 1]} : vector<16x7xf32> to vector<16x6xf32>
    %507 = vector.extract_strided_slice %48 {offsets = [0, 1], sizes = [16, 6], strides = [1, 1]} : vector<16x7xf32> to vector<16x6xf32>
    %508 = vector.extract_strided_slice %72 {offsets = [0, 1], sizes = [16, 6], strides = [1, 1]} : vector<16x7xf32> to vector<16x6xf32>
    %509 = vector.extract_strided_slice %96 {offsets = [0, 1], sizes = [16, 6], strides = [1, 1]} : vector<16x7xf32> to vector<16x6xf32>
    %510 = vector.extract_strided_slice %120 {offsets = [0, 1], sizes = [16, 6], strides = [1, 1]} : vector<16x7xf32> to vector<16x6xf32>
    %511 = vector.extract_strided_slice %144 {offsets = [0, 1], sizes = [16, 6], strides = [1, 1]} : vector<16x7xf32> to vector<16x6xf32>
    %512 = vector.extract_strided_slice %168 {offsets = [0, 1], sizes = [16, 6], strides = [1, 1]} : vector<16x7xf32> to vector<16x6xf32>
    %513 = vector.extract_strided_slice %192 {offsets = [0, 1], sizes = [16, 6], strides = [1, 1]} : vector<16x7xf32> to vector<16x6xf32>
    %514 = vector.extract_strided_slice %216 {offsets = [0, 1], sizes = [16, 6], strides = [1, 1]} : vector<16x7xf32> to vector<16x6xf32>
    %c0_210 = arith.constant 0 : index
    %c0_211 = arith.constant 0 : index
    %515 = memref.load %arg7[%c0_210, %c0_211] : memref<16x8xf32, #tpu.memory_space<smem>>
    %516 = vector.broadcast %515 : f32 to vector<16x7xf32>
    %517 = arith.mulf %48, %516 : vector<16x7xf32>
    %c8 = arith.constant 8 : index
    %c0_212 = arith.constant 0 : index
    %518 = memref.load %arg7[%c8, %c0_212] : memref<16x8xf32, #tpu.memory_space<smem>>
    %519 = vector.broadcast %518 : f32 to vector<16x7xf32>
    %520 = arith.mulf %58, %519 : vector<16x7xf32>
    %521 = arith.addf %517, %520 : vector<16x7xf32>
    %c0_213 = arith.constant 0 : index
    %c0_214 = arith.constant 0 : index
    %522 = memref.load %arg7[%c0_213, %c0_214] : memref<16x8xf32, #tpu.memory_space<smem>>
    %523 = vector.broadcast %522 : f32 to vector<16x6xf32>
    %524 = arith.mulf %499, %523 : vector<16x6xf32>
    %c8_215 = arith.constant 8 : index
    %c0_216 = arith.constant 0 : index
    %525 = memref.load %arg7[%c8_215, %c0_216] : memref<16x8xf32, #tpu.memory_space<smem>>
    %526 = vector.broadcast %525 : f32 to vector<16x6xf32>
    %527 = arith.mulf %507, %526 : vector<16x6xf32>
    %528 = arith.addf %524, %527 : vector<16x6xf32>
    %c1_217 = arith.constant 1 : index
    %c0_218 = arith.constant 0 : index
    %529 = memref.load %arg7[%c1_217, %c0_218] : memref<16x8xf32, #tpu.memory_space<smem>>
    %530 = vector.broadcast %529 : f32 to vector<16x7xf32>
    %531 = arith.mulf %72, %530 : vector<16x7xf32>
    %532 = arith.addf %521, %531 : vector<16x7xf32>
    %c9 = arith.constant 9 : index
    %c0_219 = arith.constant 0 : index
    %533 = memref.load %arg7[%c9, %c0_219] : memref<16x8xf32, #tpu.memory_space<smem>>
    %534 = vector.broadcast %533 : f32 to vector<16x7xf32>
    %535 = arith.mulf %82, %534 : vector<16x7xf32>
    %536 = arith.addf %532, %535 : vector<16x7xf32>
    %c1_220 = arith.constant 1 : index
    %c0_221 = arith.constant 0 : index
    %537 = memref.load %arg7[%c1_220, %c0_221] : memref<16x8xf32, #tpu.memory_space<smem>>
    %538 = vector.broadcast %537 : f32 to vector<16x6xf32>
    %539 = arith.mulf %500, %538 : vector<16x6xf32>
    %540 = arith.addf %528, %539 : vector<16x6xf32>
    %c9_222 = arith.constant 9 : index
    %c0_223 = arith.constant 0 : index
    %541 = memref.load %arg7[%c9_222, %c0_223] : memref<16x8xf32, #tpu.memory_space<smem>>
    %542 = vector.broadcast %541 : f32 to vector<16x6xf32>
    %543 = arith.mulf %508, %542 : vector<16x6xf32>
    %544 = arith.addf %540, %543 : vector<16x6xf32>
    %c2_224 = arith.constant 2 : index
    %c0_225 = arith.constant 0 : index
    %545 = memref.load %arg7[%c2_224, %c0_225] : memref<16x8xf32, #tpu.memory_space<smem>>
    %546 = vector.broadcast %545 : f32 to vector<16x7xf32>
    %547 = arith.mulf %96, %546 : vector<16x7xf32>
    %548 = arith.addf %536, %547 : vector<16x7xf32>
    %c10 = arith.constant 10 : index
    %c0_226 = arith.constant 0 : index
    %549 = memref.load %arg7[%c10, %c0_226] : memref<16x8xf32, #tpu.memory_space<smem>>
    %550 = vector.broadcast %549 : f32 to vector<16x7xf32>
    %551 = arith.mulf %106, %550 : vector<16x7xf32>
    %552 = arith.addf %548, %551 : vector<16x7xf32>
    %c2_227 = arith.constant 2 : index
    %c0_228 = arith.constant 0 : index
    %553 = memref.load %arg7[%c2_227, %c0_228] : memref<16x8xf32, #tpu.memory_space<smem>>
    %554 = vector.broadcast %553 : f32 to vector<16x6xf32>
    %555 = arith.mulf %501, %554 : vector<16x6xf32>
    %556 = arith.addf %544, %555 : vector<16x6xf32>
    %c10_229 = arith.constant 10 : index
    %c0_230 = arith.constant 0 : index
    %557 = memref.load %arg7[%c10_229, %c0_230] : memref<16x8xf32, #tpu.memory_space<smem>>
    %558 = vector.broadcast %557 : f32 to vector<16x6xf32>
    %559 = arith.mulf %509, %558 : vector<16x6xf32>
    %560 = arith.addf %556, %559 : vector<16x6xf32>
    %c3_231 = arith.constant 3 : index
    %c0_232 = arith.constant 0 : index
    %561 = memref.load %arg7[%c3_231, %c0_232] : memref<16x8xf32, #tpu.memory_space<smem>>
    %562 = vector.broadcast %561 : f32 to vector<16x7xf32>
    %563 = arith.mulf %120, %562 : vector<16x7xf32>
    %564 = arith.addf %552, %563 : vector<16x7xf32>
    %c11 = arith.constant 11 : index
    %c0_233 = arith.constant 0 : index
    %565 = memref.load %arg7[%c11, %c0_233] : memref<16x8xf32, #tpu.memory_space<smem>>
    %566 = vector.broadcast %565 : f32 to vector<16x7xf32>
    %567 = arith.mulf %130, %566 : vector<16x7xf32>
    %568 = arith.addf %564, %567 : vector<16x7xf32>
    %c3_234 = arith.constant 3 : index
    %c0_235 = arith.constant 0 : index
    %569 = memref.load %arg7[%c3_234, %c0_235] : memref<16x8xf32, #tpu.memory_space<smem>>
    %570 = vector.broadcast %569 : f32 to vector<16x6xf32>
    %571 = arith.mulf %502, %570 : vector<16x6xf32>
    %572 = arith.addf %560, %571 : vector<16x6xf32>
    %c11_236 = arith.constant 11 : index
    %c0_237 = arith.constant 0 : index
    %573 = memref.load %arg7[%c11_236, %c0_237] : memref<16x8xf32, #tpu.memory_space<smem>>
    %574 = vector.broadcast %573 : f32 to vector<16x6xf32>
    %575 = arith.mulf %510, %574 : vector<16x6xf32>
    %576 = arith.addf %572, %575 : vector<16x6xf32>
    %c4_238 = arith.constant 4 : index
    %c0_239 = arith.constant 0 : index
    %577 = memref.load %arg7[%c4_238, %c0_239] : memref<16x8xf32, #tpu.memory_space<smem>>
    %578 = vector.broadcast %577 : f32 to vector<16x7xf32>
    %579 = arith.mulf %144, %578 : vector<16x7xf32>
    %580 = arith.addf %568, %579 : vector<16x7xf32>
    %c12 = arith.constant 12 : index
    %c0_240 = arith.constant 0 : index
    %581 = memref.load %arg7[%c12, %c0_240] : memref<16x8xf32, #tpu.memory_space<smem>>
    %582 = vector.broadcast %581 : f32 to vector<16x7xf32>
    %583 = arith.mulf %154, %582 : vector<16x7xf32>
    %584 = arith.addf %580, %583 : vector<16x7xf32>
    %c4_241 = arith.constant 4 : index
    %c0_242 = arith.constant 0 : index
    %585 = memref.load %arg7[%c4_241, %c0_242] : memref<16x8xf32, #tpu.memory_space<smem>>
    %586 = vector.broadcast %585 : f32 to vector<16x6xf32>
    %587 = arith.mulf %503, %586 : vector<16x6xf32>
    %588 = arith.addf %576, %587 : vector<16x6xf32>
    %c12_243 = arith.constant 12 : index
    %c0_244 = arith.constant 0 : index
    %589 = memref.load %arg7[%c12_243, %c0_244] : memref<16x8xf32, #tpu.memory_space<smem>>
    %590 = vector.broadcast %589 : f32 to vector<16x6xf32>
    %591 = arith.mulf %511, %590 : vector<16x6xf32>
    %592 = arith.addf %588, %591 : vector<16x6xf32>
    %c5_245 = arith.constant 5 : index
    %c0_246 = arith.constant 0 : index
    %593 = memref.load %arg7[%c5_245, %c0_246] : memref<16x8xf32, #tpu.memory_space<smem>>
    %594 = vector.broadcast %593 : f32 to vector<16x7xf32>
    %595 = arith.mulf %168, %594 : vector<16x7xf32>
    %596 = arith.addf %584, %595 : vector<16x7xf32>
    %c13 = arith.constant 13 : index
    %c0_247 = arith.constant 0 : index
    %597 = memref.load %arg7[%c13, %c0_247] : memref<16x8xf32, #tpu.memory_space<smem>>
    %598 = vector.broadcast %597 : f32 to vector<16x7xf32>
    %599 = arith.mulf %178, %598 : vector<16x7xf32>
    %600 = arith.addf %596, %599 : vector<16x7xf32>
    %c5_248 = arith.constant 5 : index
    %c0_249 = arith.constant 0 : index
    %601 = memref.load %arg7[%c5_248, %c0_249] : memref<16x8xf32, #tpu.memory_space<smem>>
    %602 = vector.broadcast %601 : f32 to vector<16x6xf32>
    %603 = arith.mulf %504, %602 : vector<16x6xf32>
    %604 = arith.addf %592, %603 : vector<16x6xf32>
    %c13_250 = arith.constant 13 : index
    %c0_251 = arith.constant 0 : index
    %605 = memref.load %arg7[%c13_250, %c0_251] : memref<16x8xf32, #tpu.memory_space<smem>>
    %606 = vector.broadcast %605 : f32 to vector<16x6xf32>
    %607 = arith.mulf %512, %606 : vector<16x6xf32>
    %608 = arith.addf %604, %607 : vector<16x6xf32>
    %c6_252 = arith.constant 6 : index
    %c0_253 = arith.constant 0 : index
    %609 = memref.load %arg7[%c6_252, %c0_253] : memref<16x8xf32, #tpu.memory_space<smem>>
    %610 = vector.broadcast %609 : f32 to vector<16x7xf32>
    %611 = arith.mulf %192, %610 : vector<16x7xf32>
    %612 = arith.addf %600, %611 : vector<16x7xf32>
    %c14 = arith.constant 14 : index
    %c0_254 = arith.constant 0 : index
    %613 = memref.load %arg7[%c14, %c0_254] : memref<16x8xf32, #tpu.memory_space<smem>>
    %614 = vector.broadcast %613 : f32 to vector<16x7xf32>
    %615 = arith.mulf %202, %614 : vector<16x7xf32>
    %616 = arith.addf %612, %615 : vector<16x7xf32>
    %c6_255 = arith.constant 6 : index
    %c0_256 = arith.constant 0 : index
    %617 = memref.load %arg7[%c6_255, %c0_256] : memref<16x8xf32, #tpu.memory_space<smem>>
    %618 = vector.broadcast %617 : f32 to vector<16x6xf32>
    %619 = arith.mulf %505, %618 : vector<16x6xf32>
    %620 = arith.addf %608, %619 : vector<16x6xf32>
    %c14_257 = arith.constant 14 : index
    %c0_258 = arith.constant 0 : index
    %621 = memref.load %arg7[%c14_257, %c0_258] : memref<16x8xf32, #tpu.memory_space<smem>>
    %622 = vector.broadcast %621 : f32 to vector<16x6xf32>
    %623 = arith.mulf %513, %622 : vector<16x6xf32>
    %624 = arith.addf %620, %623 : vector<16x6xf32>
    %c7_259 = arith.constant 7 : index
    %c0_260 = arith.constant 0 : index
    %625 = memref.load %arg7[%c7_259, %c0_260] : memref<16x8xf32, #tpu.memory_space<smem>>
    %626 = vector.broadcast %625 : f32 to vector<16x7xf32>
    %627 = arith.mulf %216, %626 : vector<16x7xf32>
    %628 = arith.addf %616, %627 : vector<16x7xf32>
    %c15 = arith.constant 15 : index
    %c0_261 = arith.constant 0 : index
    %629 = memref.load %arg7[%c15, %c0_261] : memref<16x8xf32, #tpu.memory_space<smem>>
    %630 = vector.broadcast %629 : f32 to vector<16x7xf32>
    %631 = arith.mulf %226, %630 : vector<16x7xf32>
    %632 = arith.addf %628, %631 : vector<16x7xf32>
    %c7_262 = arith.constant 7 : index
    %c0_263 = arith.constant 0 : index
    %633 = memref.load %arg7[%c7_262, %c0_263] : memref<16x8xf32, #tpu.memory_space<smem>>
    %634 = vector.broadcast %633 : f32 to vector<16x6xf32>
    %635 = arith.mulf %506, %634 : vector<16x6xf32>
    %636 = arith.addf %624, %635 : vector<16x6xf32>
    %c15_264 = arith.constant 15 : index
    %c0_265 = arith.constant 0 : index
    %637 = memref.load %arg7[%c15_264, %c0_265] : memref<16x8xf32, #tpu.memory_space<smem>>
    %638 = vector.broadcast %637 : f32 to vector<16x6xf32>
    %639 = arith.mulf %514, %638 : vector<16x6xf32>
    %640 = arith.addf %636, %639 : vector<16x6xf32>
    %c0_266 = arith.constant 0 : index
    %c0_267 = arith.constant 0 : index
    %641 = memref.load %arg8[%c0_266, %c0_267] : memref<1x8xf32, #tpu.memory_space<smem>>
    %642 = vector.broadcast %641 : f32 to vector<16x7xf32>
    %643 = arith.addf %632, %642 : vector<16x7xf32>
    %c0_268 = arith.constant 0 : index
    %c0_269 = arith.constant 0 : index
    %644 = memref.load %arg8[%c0_268, %c0_269] : memref<1x8xf32, #tpu.memory_space<smem>>
    %645 = vector.broadcast %644 : f32 to vector<16x6xf32>
    %646 = arith.addf %640, %645 : vector<16x6xf32>
    %c0_270 = arith.constant 0 : index
    %c1_271 = arith.constant 1 : index
    %647 = memref.load %arg7[%c0_270, %c1_271] : memref<16x8xf32, #tpu.memory_space<smem>>
    %648 = vector.broadcast %647 : f32 to vector<16x7xf32>
    %649 = arith.mulf %48, %648 : vector<16x7xf32>
    %c8_272 = arith.constant 8 : index
    %c1_273 = arith.constant 1 : index
    %650 = memref.load %arg7[%c8_272, %c1_273] : memref<16x8xf32, #tpu.memory_space<smem>>
    %651 = vector.broadcast %650 : f32 to vector<16x7xf32>
    %652 = arith.mulf %58, %651 : vector<16x7xf32>
    %653 = arith.addf %649, %652 : vector<16x7xf32>
    %c0_274 = arith.constant 0 : index
    %c1_275 = arith.constant 1 : index
    %654 = memref.load %arg7[%c0_274, %c1_275] : memref<16x8xf32, #tpu.memory_space<smem>>
    %655 = vector.broadcast %654 : f32 to vector<16x6xf32>
    %656 = arith.mulf %499, %655 : vector<16x6xf32>
    %c8_276 = arith.constant 8 : index
    %c1_277 = arith.constant 1 : index
    %657 = memref.load %arg7[%c8_276, %c1_277] : memref<16x8xf32, #tpu.memory_space<smem>>
    %658 = vector.broadcast %657 : f32 to vector<16x6xf32>
    %659 = arith.mulf %507, %658 : vector<16x6xf32>
    %660 = arith.addf %656, %659 : vector<16x6xf32>
    %c1_278 = arith.constant 1 : index
    %c1_279 = arith.constant 1 : index
    %661 = memref.load %arg7[%c1_278, %c1_279] : memref<16x8xf32, #tpu.memory_space<smem>>
    %662 = vector.broadcast %661 : f32 to vector<16x7xf32>
    %663 = arith.mulf %72, %662 : vector<16x7xf32>
    %664 = arith.addf %653, %663 : vector<16x7xf32>
    %c9_280 = arith.constant 9 : index
    %c1_281 = arith.constant 1 : index
    %665 = memref.load %arg7[%c9_280, %c1_281] : memref<16x8xf32, #tpu.memory_space<smem>>
    %666 = vector.broadcast %665 : f32 to vector<16x7xf32>
    %667 = arith.mulf %82, %666 : vector<16x7xf32>
    %668 = arith.addf %664, %667 : vector<16x7xf32>
    %c1_282 = arith.constant 1 : index
    %c1_283 = arith.constant 1 : index
    %669 = memref.load %arg7[%c1_282, %c1_283] : memref<16x8xf32, #tpu.memory_space<smem>>
    %670 = vector.broadcast %669 : f32 to vector<16x6xf32>
    %671 = arith.mulf %500, %670 : vector<16x6xf32>
    %672 = arith.addf %660, %671 : vector<16x6xf32>
    %c9_284 = arith.constant 9 : index
    %c1_285 = arith.constant 1 : index
    %673 = memref.load %arg7[%c9_284, %c1_285] : memref<16x8xf32, #tpu.memory_space<smem>>
    %674 = vector.broadcast %673 : f32 to vector<16x6xf32>
    %675 = arith.mulf %508, %674 : vector<16x6xf32>
    %676 = arith.addf %672, %675 : vector<16x6xf32>
    %c2_286 = arith.constant 2 : index
    %c1_287 = arith.constant 1 : index
    %677 = memref.load %arg7[%c2_286, %c1_287] : memref<16x8xf32, #tpu.memory_space<smem>>
    %678 = vector.broadcast %677 : f32 to vector<16x7xf32>
    %679 = arith.mulf %96, %678 : vector<16x7xf32>
    %680 = arith.addf %668, %679 : vector<16x7xf32>
    %c10_288 = arith.constant 10 : index
    %c1_289 = arith.constant 1 : index
    %681 = memref.load %arg7[%c10_288, %c1_289] : memref<16x8xf32, #tpu.memory_space<smem>>
    %682 = vector.broadcast %681 : f32 to vector<16x7xf32>
    %683 = arith.mulf %106, %682 : vector<16x7xf32>
    %684 = arith.addf %680, %683 : vector<16x7xf32>
    %c2_290 = arith.constant 2 : index
    %c1_291 = arith.constant 1 : index
    %685 = memref.load %arg7[%c2_290, %c1_291] : memref<16x8xf32, #tpu.memory_space<smem>>
    %686 = vector.broadcast %685 : f32 to vector<16x6xf32>
    %687 = arith.mulf %501, %686 : vector<16x6xf32>
    %688 = arith.addf %676, %687 : vector<16x6xf32>
    %c10_292 = arith.constant 10 : index
    %c1_293 = arith.constant 1 : index
    %689 = memref.load %arg7[%c10_292, %c1_293] : memref<16x8xf32, #tpu.memory_space<smem>>
    %690 = vector.broadcast %689 : f32 to vector<16x6xf32>
    %691 = arith.mulf %509, %690 : vector<16x6xf32>
    %692 = arith.addf %688, %691 : vector<16x6xf32>
    %c3_294 = arith.constant 3 : index
    %c1_295 = arith.constant 1 : index
    %693 = memref.load %arg7[%c3_294, %c1_295] : memref<16x8xf32, #tpu.memory_space<smem>>
    %694 = vector.broadcast %693 : f32 to vector<16x7xf32>
    %695 = arith.mulf %120, %694 : vector<16x7xf32>
    %696 = arith.addf %684, %695 : vector<16x7xf32>
    %c11_296 = arith.constant 11 : index
    %c1_297 = arith.constant 1 : index
    %697 = memref.load %arg7[%c11_296, %c1_297] : memref<16x8xf32, #tpu.memory_space<smem>>
    %698 = vector.broadcast %697 : f32 to vector<16x7xf32>
    %699 = arith.mulf %130, %698 : vector<16x7xf32>
    %700 = arith.addf %696, %699 : vector<16x7xf32>
    %c3_298 = arith.constant 3 : index
    %c1_299 = arith.constant 1 : index
    %701 = memref.load %arg7[%c3_298, %c1_299] : memref<16x8xf32, #tpu.memory_space<smem>>
    %702 = vector.broadcast %701 : f32 to vector<16x6xf32>
    %703 = arith.mulf %502, %702 : vector<16x6xf32>
    %704 = arith.addf %692, %703 : vector<16x6xf32>
    %c11_300 = arith.constant 11 : index
    %c1_301 = arith.constant 1 : index
    %705 = memref.load %arg7[%c11_300, %c1_301] : memref<16x8xf32, #tpu.memory_space<smem>>
    %706 = vector.broadcast %705 : f32 to vector<16x6xf32>
    %707 = arith.mulf %510, %706 : vector<16x6xf32>
    %708 = arith.addf %704, %707 : vector<16x6xf32>
    %c4_302 = arith.constant 4 : index
    %c1_303 = arith.constant 1 : index
    %709 = memref.load %arg7[%c4_302, %c1_303] : memref<16x8xf32, #tpu.memory_space<smem>>
    %710 = vector.broadcast %709 : f32 to vector<16x7xf32>
    %711 = arith.mulf %144, %710 : vector<16x7xf32>
    %712 = arith.addf %700, %711 : vector<16x7xf32>
    %c12_304 = arith.constant 12 : index
    %c1_305 = arith.constant 1 : index
    %713 = memref.load %arg7[%c12_304, %c1_305] : memref<16x8xf32, #tpu.memory_space<smem>>
    %714 = vector.broadcast %713 : f32 to vector<16x7xf32>
    %715 = arith.mulf %154, %714 : vector<16x7xf32>
    %716 = arith.addf %712, %715 : vector<16x7xf32>
    %c4_306 = arith.constant 4 : index
    %c1_307 = arith.constant 1 : index
    %717 = memref.load %arg7[%c4_306, %c1_307] : memref<16x8xf32, #tpu.memory_space<smem>>
    %718 = vector.broadcast %717 : f32 to vector<16x6xf32>
    %719 = arith.mulf %503, %718 : vector<16x6xf32>
    %720 = arith.addf %708, %719 : vector<16x6xf32>
    %c12_308 = arith.constant 12 : index
    %c1_309 = arith.constant 1 : index
    %721 = memref.load %arg7[%c12_308, %c1_309] : memref<16x8xf32, #tpu.memory_space<smem>>
    %722 = vector.broadcast %721 : f32 to vector<16x6xf32>
    %723 = arith.mulf %511, %722 : vector<16x6xf32>
    %724 = arith.addf %720, %723 : vector<16x6xf32>
    %c5_310 = arith.constant 5 : index
    %c1_311 = arith.constant 1 : index
    %725 = memref.load %arg7[%c5_310, %c1_311] : memref<16x8xf32, #tpu.memory_space<smem>>
    %726 = vector.broadcast %725 : f32 to vector<16x7xf32>
    %727 = arith.mulf %168, %726 : vector<16x7xf32>
    %728 = arith.addf %716, %727 : vector<16x7xf32>
    %c13_312 = arith.constant 13 : index
    %c1_313 = arith.constant 1 : index
    %729 = memref.load %arg7[%c13_312, %c1_313] : memref<16x8xf32, #tpu.memory_space<smem>>
    %730 = vector.broadcast %729 : f32 to vector<16x7xf32>
    %731 = arith.mulf %178, %730 : vector<16x7xf32>
    %732 = arith.addf %728, %731 : vector<16x7xf32>
    %c5_314 = arith.constant 5 : index
    %c1_315 = arith.constant 1 : index
    %733 = memref.load %arg7[%c5_314, %c1_315] : memref<16x8xf32, #tpu.memory_space<smem>>
    %734 = vector.broadcast %733 : f32 to vector<16x6xf32>
    %735 = arith.mulf %504, %734 : vector<16x6xf32>
    %736 = arith.addf %724, %735 : vector<16x6xf32>
    %c13_316 = arith.constant 13 : index
    %c1_317 = arith.constant 1 : index
    %737 = memref.load %arg7[%c13_316, %c1_317] : memref<16x8xf32, #tpu.memory_space<smem>>
    %738 = vector.broadcast %737 : f32 to vector<16x6xf32>
    %739 = arith.mulf %512, %738 : vector<16x6xf32>
    %740 = arith.addf %736, %739 : vector<16x6xf32>
    %c6_318 = arith.constant 6 : index
    %c1_319 = arith.constant 1 : index
    %741 = memref.load %arg7[%c6_318, %c1_319] : memref<16x8xf32, #tpu.memory_space<smem>>
    %742 = vector.broadcast %741 : f32 to vector<16x7xf32>
    %743 = arith.mulf %192, %742 : vector<16x7xf32>
    %744 = arith.addf %732, %743 : vector<16x7xf32>
    %c14_320 = arith.constant 14 : index
    %c1_321 = arith.constant 1 : index
    %745 = memref.load %arg7[%c14_320, %c1_321] : memref<16x8xf32, #tpu.memory_space<smem>>
    %746 = vector.broadcast %745 : f32 to vector<16x7xf32>
    %747 = arith.mulf %202, %746 : vector<16x7xf32>
    %748 = arith.addf %744, %747 : vector<16x7xf32>
    %c6_322 = arith.constant 6 : index
    %c1_323 = arith.constant 1 : index
    %749 = memref.load %arg7[%c6_322, %c1_323] : memref<16x8xf32, #tpu.memory_space<smem>>
    %750 = vector.broadcast %749 : f32 to vector<16x6xf32>
    %751 = arith.mulf %505, %750 : vector<16x6xf32>
    %752 = arith.addf %740, %751 : vector<16x6xf32>
    %c14_324 = arith.constant 14 : index
    %c1_325 = arith.constant 1 : index
    %753 = memref.load %arg7[%c14_324, %c1_325] : memref<16x8xf32, #tpu.memory_space<smem>>
    %754 = vector.broadcast %753 : f32 to vector<16x6xf32>
    %755 = arith.mulf %513, %754 : vector<16x6xf32>
    %756 = arith.addf %752, %755 : vector<16x6xf32>
    %c7_326 = arith.constant 7 : index
    %c1_327 = arith.constant 1 : index
    %757 = memref.load %arg7[%c7_326, %c1_327] : memref<16x8xf32, #tpu.memory_space<smem>>
    %758 = vector.broadcast %757 : f32 to vector<16x7xf32>
    %759 = arith.mulf %216, %758 : vector<16x7xf32>
    %760 = arith.addf %748, %759 : vector<16x7xf32>
    %c15_328 = arith.constant 15 : index
    %c1_329 = arith.constant 1 : index
    %761 = memref.load %arg7[%c15_328, %c1_329] : memref<16x8xf32, #tpu.memory_space<smem>>
    %762 = vector.broadcast %761 : f32 to vector<16x7xf32>
    %763 = arith.mulf %226, %762 : vector<16x7xf32>
    %764 = arith.addf %760, %763 : vector<16x7xf32>
    %c7_330 = arith.constant 7 : index
    %c1_331 = arith.constant 1 : index
    %765 = memref.load %arg7[%c7_330, %c1_331] : memref<16x8xf32, #tpu.memory_space<smem>>
    %766 = vector.broadcast %765 : f32 to vector<16x6xf32>
    %767 = arith.mulf %506, %766 : vector<16x6xf32>
    %768 = arith.addf %756, %767 : vector<16x6xf32>
    %c15_332 = arith.constant 15 : index
    %c1_333 = arith.constant 1 : index
    %769 = memref.load %arg7[%c15_332, %c1_333] : memref<16x8xf32, #tpu.memory_space<smem>>
    %770 = vector.broadcast %769 : f32 to vector<16x6xf32>
    %771 = arith.mulf %514, %770 : vector<16x6xf32>
    %772 = arith.addf %768, %771 : vector<16x6xf32>
    %c0_334 = arith.constant 0 : index
    %c1_335 = arith.constant 1 : index
    %773 = memref.load %arg8[%c0_334, %c1_335] : memref<1x8xf32, #tpu.memory_space<smem>>
    %774 = vector.broadcast %773 : f32 to vector<16x7xf32>
    %775 = arith.addf %764, %774 : vector<16x7xf32>
    %c0_336 = arith.constant 0 : index
    %c1_337 = arith.constant 1 : index
    %776 = memref.load %arg8[%c0_336, %c1_337] : memref<1x8xf32, #tpu.memory_space<smem>>
    %777 = vector.broadcast %776 : f32 to vector<16x6xf32>
    %778 = arith.addf %772, %777 : vector<16x6xf32>
    %c0_338 = arith.constant 0 : index
    %c2_339 = arith.constant 2 : index
    %779 = memref.load %arg7[%c0_338, %c2_339] : memref<16x8xf32, #tpu.memory_space<smem>>
    %780 = vector.broadcast %779 : f32 to vector<16x7xf32>
    %781 = arith.mulf %48, %780 : vector<16x7xf32>
    %c8_340 = arith.constant 8 : index
    %c2_341 = arith.constant 2 : index
    %782 = memref.load %arg7[%c8_340, %c2_341] : memref<16x8xf32, #tpu.memory_space<smem>>
    %783 = vector.broadcast %782 : f32 to vector<16x7xf32>
    %784 = arith.mulf %58, %783 : vector<16x7xf32>
    %785 = arith.addf %781, %784 : vector<16x7xf32>
    %c0_342 = arith.constant 0 : index
    %c2_343 = arith.constant 2 : index
    %786 = memref.load %arg7[%c0_342, %c2_343] : memref<16x8xf32, #tpu.memory_space<smem>>
    %787 = vector.broadcast %786 : f32 to vector<16x6xf32>
    %788 = arith.mulf %499, %787 : vector<16x6xf32>
    %c8_344 = arith.constant 8 : index
    %c2_345 = arith.constant 2 : index
    %789 = memref.load %arg7[%c8_344, %c2_345] : memref<16x8xf32, #tpu.memory_space<smem>>
    %790 = vector.broadcast %789 : f32 to vector<16x6xf32>
    %791 = arith.mulf %507, %790 : vector<16x6xf32>
    %792 = arith.addf %788, %791 : vector<16x6xf32>
    %c1_346 = arith.constant 1 : index
    %c2_347 = arith.constant 2 : index
    %793 = memref.load %arg7[%c1_346, %c2_347] : memref<16x8xf32, #tpu.memory_space<smem>>
    %794 = vector.broadcast %793 : f32 to vector<16x7xf32>
    %795 = arith.mulf %72, %794 : vector<16x7xf32>
    %796 = arith.addf %785, %795 : vector<16x7xf32>
    %c9_348 = arith.constant 9 : index
    %c2_349 = arith.constant 2 : index
    %797 = memref.load %arg7[%c9_348, %c2_349] : memref<16x8xf32, #tpu.memory_space<smem>>
    %798 = vector.broadcast %797 : f32 to vector<16x7xf32>
    %799 = arith.mulf %82, %798 : vector<16x7xf32>
    %800 = arith.addf %796, %799 : vector<16x7xf32>
    %c1_350 = arith.constant 1 : index
    %c2_351 = arith.constant 2 : index
    %801 = memref.load %arg7[%c1_350, %c2_351] : memref<16x8xf32, #tpu.memory_space<smem>>
    %802 = vector.broadcast %801 : f32 to vector<16x6xf32>
    %803 = arith.mulf %500, %802 : vector<16x6xf32>
    %804 = arith.addf %792, %803 : vector<16x6xf32>
    %c9_352 = arith.constant 9 : index
    %c2_353 = arith.constant 2 : index
    %805 = memref.load %arg7[%c9_352, %c2_353] : memref<16x8xf32, #tpu.memory_space<smem>>
    %806 = vector.broadcast %805 : f32 to vector<16x6xf32>
    %807 = arith.mulf %508, %806 : vector<16x6xf32>
    %808 = arith.addf %804, %807 : vector<16x6xf32>
    %c2_354 = arith.constant 2 : index
    %c2_355 = arith.constant 2 : index
    %809 = memref.load %arg7[%c2_354, %c2_355] : memref<16x8xf32, #tpu.memory_space<smem>>
    %810 = vector.broadcast %809 : f32 to vector<16x7xf32>
    %811 = arith.mulf %96, %810 : vector<16x7xf32>
    %812 = arith.addf %800, %811 : vector<16x7xf32>
    %c10_356 = arith.constant 10 : index
    %c2_357 = arith.constant 2 : index
    %813 = memref.load %arg7[%c10_356, %c2_357] : memref<16x8xf32, #tpu.memory_space<smem>>
    %814 = vector.broadcast %813 : f32 to vector<16x7xf32>
    %815 = arith.mulf %106, %814 : vector<16x7xf32>
    %816 = arith.addf %812, %815 : vector<16x7xf32>
    %c2_358 = arith.constant 2 : index
    %c2_359 = arith.constant 2 : index
    %817 = memref.load %arg7[%c2_358, %c2_359] : memref<16x8xf32, #tpu.memory_space<smem>>
    %818 = vector.broadcast %817 : f32 to vector<16x6xf32>
    %819 = arith.mulf %501, %818 : vector<16x6xf32>
    %820 = arith.addf %808, %819 : vector<16x6xf32>
    %c10_360 = arith.constant 10 : index
    %c2_361 = arith.constant 2 : index
    %821 = memref.load %arg7[%c10_360, %c2_361] : memref<16x8xf32, #tpu.memory_space<smem>>
    %822 = vector.broadcast %821 : f32 to vector<16x6xf32>
    %823 = arith.mulf %509, %822 : vector<16x6xf32>
    %824 = arith.addf %820, %823 : vector<16x6xf32>
    %c3_362 = arith.constant 3 : index
    %c2_363 = arith.constant 2 : index
    %825 = memref.load %arg7[%c3_362, %c2_363] : memref<16x8xf32, #tpu.memory_space<smem>>
    %826 = vector.broadcast %825 : f32 to vector<16x7xf32>
    %827 = arith.mulf %120, %826 : vector<16x7xf32>
    %828 = arith.addf %816, %827 : vector<16x7xf32>
    %c11_364 = arith.constant 11 : index
    %c2_365 = arith.constant 2 : index
    %829 = memref.load %arg7[%c11_364, %c2_365] : memref<16x8xf32, #tpu.memory_space<smem>>
    %830 = vector.broadcast %829 : f32 to vector<16x7xf32>
    %831 = arith.mulf %130, %830 : vector<16x7xf32>
    %832 = arith.addf %828, %831 : vector<16x7xf32>
    %c3_366 = arith.constant 3 : index
    %c2_367 = arith.constant 2 : index
    %833 = memref.load %arg7[%c3_366, %c2_367] : memref<16x8xf32, #tpu.memory_space<smem>>
    %834 = vector.broadcast %833 : f32 to vector<16x6xf32>
    %835 = arith.mulf %502, %834 : vector<16x6xf32>
    %836 = arith.addf %824, %835 : vector<16x6xf32>
    %c11_368 = arith.constant 11 : index
    %c2_369 = arith.constant 2 : index
    %837 = memref.load %arg7[%c11_368, %c2_369] : memref<16x8xf32, #tpu.memory_space<smem>>
    %838 = vector.broadcast %837 : f32 to vector<16x6xf32>
    %839 = arith.mulf %510, %838 : vector<16x6xf32>
    %840 = arith.addf %836, %839 : vector<16x6xf32>
    %c4_370 = arith.constant 4 : index
    %c2_371 = arith.constant 2 : index
    %841 = memref.load %arg7[%c4_370, %c2_371] : memref<16x8xf32, #tpu.memory_space<smem>>
    %842 = vector.broadcast %841 : f32 to vector<16x7xf32>
    %843 = arith.mulf %144, %842 : vector<16x7xf32>
    %844 = arith.addf %832, %843 : vector<16x7xf32>
    %c12_372 = arith.constant 12 : index
    %c2_373 = arith.constant 2 : index
    %845 = memref.load %arg7[%c12_372, %c2_373] : memref<16x8xf32, #tpu.memory_space<smem>>
    %846 = vector.broadcast %845 : f32 to vector<16x7xf32>
    %847 = arith.mulf %154, %846 : vector<16x7xf32>
    %848 = arith.addf %844, %847 : vector<16x7xf32>
    %c4_374 = arith.constant 4 : index
    %c2_375 = arith.constant 2 : index
    %849 = memref.load %arg7[%c4_374, %c2_375] : memref<16x8xf32, #tpu.memory_space<smem>>
    %850 = vector.broadcast %849 : f32 to vector<16x6xf32>
    %851 = arith.mulf %503, %850 : vector<16x6xf32>
    %852 = arith.addf %840, %851 : vector<16x6xf32>
    %c12_376 = arith.constant 12 : index
    %c2_377 = arith.constant 2 : index
    %853 = memref.load %arg7[%c12_376, %c2_377] : memref<16x8xf32, #tpu.memory_space<smem>>
    %854 = vector.broadcast %853 : f32 to vector<16x6xf32>
    %855 = arith.mulf %511, %854 : vector<16x6xf32>
    %856 = arith.addf %852, %855 : vector<16x6xf32>
    %c5_378 = arith.constant 5 : index
    %c2_379 = arith.constant 2 : index
    %857 = memref.load %arg7[%c5_378, %c2_379] : memref<16x8xf32, #tpu.memory_space<smem>>
    %858 = vector.broadcast %857 : f32 to vector<16x7xf32>
    %859 = arith.mulf %168, %858 : vector<16x7xf32>
    %860 = arith.addf %848, %859 : vector<16x7xf32>
    %c13_380 = arith.constant 13 : index
    %c2_381 = arith.constant 2 : index
    %861 = memref.load %arg7[%c13_380, %c2_381] : memref<16x8xf32, #tpu.memory_space<smem>>
    %862 = vector.broadcast %861 : f32 to vector<16x7xf32>
    %863 = arith.mulf %178, %862 : vector<16x7xf32>
    %864 = arith.addf %860, %863 : vector<16x7xf32>
    %c5_382 = arith.constant 5 : index
    %c2_383 = arith.constant 2 : index
    %865 = memref.load %arg7[%c5_382, %c2_383] : memref<16x8xf32, #tpu.memory_space<smem>>
    %866 = vector.broadcast %865 : f32 to vector<16x6xf32>
    %867 = arith.mulf %504, %866 : vector<16x6xf32>
    %868 = arith.addf %856, %867 : vector<16x6xf32>
    %c13_384 = arith.constant 13 : index
    %c2_385 = arith.constant 2 : index
    %869 = memref.load %arg7[%c13_384, %c2_385] : memref<16x8xf32, #tpu.memory_space<smem>>
    %870 = vector.broadcast %869 : f32 to vector<16x6xf32>
    %871 = arith.mulf %512, %870 : vector<16x6xf32>
    %872 = arith.addf %868, %871 : vector<16x6xf32>
    %c6_386 = arith.constant 6 : index
    %c2_387 = arith.constant 2 : index
    %873 = memref.load %arg7[%c6_386, %c2_387] : memref<16x8xf32, #tpu.memory_space<smem>>
    %874 = vector.broadcast %873 : f32 to vector<16x7xf32>
    %875 = arith.mulf %192, %874 : vector<16x7xf32>
    %876 = arith.addf %864, %875 : vector<16x7xf32>
    %c14_388 = arith.constant 14 : index
    %c2_389 = arith.constant 2 : index
    %877 = memref.load %arg7[%c14_388, %c2_389] : memref<16x8xf32, #tpu.memory_space<smem>>
    %878 = vector.broadcast %877 : f32 to vector<16x7xf32>
    %879 = arith.mulf %202, %878 : vector<16x7xf32>
    %880 = arith.addf %876, %879 : vector<16x7xf32>
    %c6_390 = arith.constant 6 : index
    %c2_391 = arith.constant 2 : index
    %881 = memref.load %arg7[%c6_390, %c2_391] : memref<16x8xf32, #tpu.memory_space<smem>>
    %882 = vector.broadcast %881 : f32 to vector<16x6xf32>
    %883 = arith.mulf %505, %882 : vector<16x6xf32>
    %884 = arith.addf %872, %883 : vector<16x6xf32>
    %c14_392 = arith.constant 14 : index
    %c2_393 = arith.constant 2 : index
    %885 = memref.load %arg7[%c14_392, %c2_393] : memref<16x8xf32, #tpu.memory_space<smem>>
    %886 = vector.broadcast %885 : f32 to vector<16x6xf32>
    %887 = arith.mulf %513, %886 : vector<16x6xf32>
    %888 = arith.addf %884, %887 : vector<16x6xf32>
    %c7_394 = arith.constant 7 : index
    %c2_395 = arith.constant 2 : index
    %889 = memref.load %arg7[%c7_394, %c2_395] : memref<16x8xf32, #tpu.memory_space<smem>>
    %890 = vector.broadcast %889 : f32 to vector<16x7xf32>
    %891 = arith.mulf %216, %890 : vector<16x7xf32>
    %892 = arith.addf %880, %891 : vector<16x7xf32>
    %c15_396 = arith.constant 15 : index
    %c2_397 = arith.constant 2 : index
    %893 = memref.load %arg7[%c15_396, %c2_397] : memref<16x8xf32, #tpu.memory_space<smem>>
    %894 = vector.broadcast %893 : f32 to vector<16x7xf32>
    %895 = arith.mulf %226, %894 : vector<16x7xf32>
    %896 = arith.addf %892, %895 : vector<16x7xf32>
    %c7_398 = arith.constant 7 : index
    %c2_399 = arith.constant 2 : index
    %897 = memref.load %arg7[%c7_398, %c2_399] : memref<16x8xf32, #tpu.memory_space<smem>>
    %898 = vector.broadcast %897 : f32 to vector<16x6xf32>
    %899 = arith.mulf %506, %898 : vector<16x6xf32>
    %900 = arith.addf %888, %899 : vector<16x6xf32>
    %c15_400 = arith.constant 15 : index
    %c2_401 = arith.constant 2 : index
    %901 = memref.load %arg7[%c15_400, %c2_401] : memref<16x8xf32, #tpu.memory_space<smem>>
    %902 = vector.broadcast %901 : f32 to vector<16x6xf32>
    %903 = arith.mulf %514, %902 : vector<16x6xf32>
    %904 = arith.addf %900, %903 : vector<16x6xf32>
    %c0_402 = arith.constant 0 : index
    %c2_403 = arith.constant 2 : index
    %905 = memref.load %arg8[%c0_402, %c2_403] : memref<1x8xf32, #tpu.memory_space<smem>>
    %906 = vector.broadcast %905 : f32 to vector<16x7xf32>
    %907 = arith.addf %896, %906 : vector<16x7xf32>
    %c0_404 = arith.constant 0 : index
    %c2_405 = arith.constant 2 : index
    %908 = memref.load %arg8[%c0_404, %c2_405] : memref<1x8xf32, #tpu.memory_space<smem>>
    %909 = vector.broadcast %908 : f32 to vector<16x6xf32>
    %910 = arith.addf %904, %909 : vector<16x6xf32>
    %c0_406 = arith.constant 0 : index
    %c3_407 = arith.constant 3 : index
    %911 = memref.load %arg7[%c0_406, %c3_407] : memref<16x8xf32, #tpu.memory_space<smem>>
    %912 = vector.broadcast %911 : f32 to vector<16x7xf32>
    %913 = arith.mulf %48, %912 : vector<16x7xf32>
    %c8_408 = arith.constant 8 : index
    %c3_409 = arith.constant 3 : index
    %914 = memref.load %arg7[%c8_408, %c3_409] : memref<16x8xf32, #tpu.memory_space<smem>>
    %915 = vector.broadcast %914 : f32 to vector<16x7xf32>
    %916 = arith.mulf %58, %915 : vector<16x7xf32>
    %917 = arith.addf %913, %916 : vector<16x7xf32>
    %c0_410 = arith.constant 0 : index
    %c3_411 = arith.constant 3 : index
    %918 = memref.load %arg7[%c0_410, %c3_411] : memref<16x8xf32, #tpu.memory_space<smem>>
    %919 = vector.broadcast %918 : f32 to vector<16x6xf32>
    %920 = arith.mulf %499, %919 : vector<16x6xf32>
    %c8_412 = arith.constant 8 : index
    %c3_413 = arith.constant 3 : index
    %921 = memref.load %arg7[%c8_412, %c3_413] : memref<16x8xf32, #tpu.memory_space<smem>>
    %922 = vector.broadcast %921 : f32 to vector<16x6xf32>
    %923 = arith.mulf %507, %922 : vector<16x6xf32>
    %924 = arith.addf %920, %923 : vector<16x6xf32>
    %c1_414 = arith.constant 1 : index
    %c3_415 = arith.constant 3 : index
    %925 = memref.load %arg7[%c1_414, %c3_415] : memref<16x8xf32, #tpu.memory_space<smem>>
    %926 = vector.broadcast %925 : f32 to vector<16x7xf32>
    %927 = arith.mulf %72, %926 : vector<16x7xf32>
    %928 = arith.addf %917, %927 : vector<16x7xf32>
    %c9_416 = arith.constant 9 : index
    %c3_417 = arith.constant 3 : index
    %929 = memref.load %arg7[%c9_416, %c3_417] : memref<16x8xf32, #tpu.memory_space<smem>>
    %930 = vector.broadcast %929 : f32 to vector<16x7xf32>
    %931 = arith.mulf %82, %930 : vector<16x7xf32>
    %932 = arith.addf %928, %931 : vector<16x7xf32>
    %c1_418 = arith.constant 1 : index
    %c3_419 = arith.constant 3 : index
    %933 = memref.load %arg7[%c1_418, %c3_419] : memref<16x8xf32, #tpu.memory_space<smem>>
    %934 = vector.broadcast %933 : f32 to vector<16x6xf32>
    %935 = arith.mulf %500, %934 : vector<16x6xf32>
    %936 = arith.addf %924, %935 : vector<16x6xf32>
    %c9_420 = arith.constant 9 : index
    %c3_421 = arith.constant 3 : index
    %937 = memref.load %arg7[%c9_420, %c3_421] : memref<16x8xf32, #tpu.memory_space<smem>>
    %938 = vector.broadcast %937 : f32 to vector<16x6xf32>
    %939 = arith.mulf %508, %938 : vector<16x6xf32>
    %940 = arith.addf %936, %939 : vector<16x6xf32>
    %c2_422 = arith.constant 2 : index
    %c3_423 = arith.constant 3 : index
    %941 = memref.load %arg7[%c2_422, %c3_423] : memref<16x8xf32, #tpu.memory_space<smem>>
    %942 = vector.broadcast %941 : f32 to vector<16x7xf32>
    %943 = arith.mulf %96, %942 : vector<16x7xf32>
    %944 = arith.addf %932, %943 : vector<16x7xf32>
    %c10_424 = arith.constant 10 : index
    %c3_425 = arith.constant 3 : index
    %945 = memref.load %arg7[%c10_424, %c3_425] : memref<16x8xf32, #tpu.memory_space<smem>>
    %946 = vector.broadcast %945 : f32 to vector<16x7xf32>
    %947 = arith.mulf %106, %946 : vector<16x7xf32>
    %948 = arith.addf %944, %947 : vector<16x7xf32>
    %c2_426 = arith.constant 2 : index
    %c3_427 = arith.constant 3 : index
    %949 = memref.load %arg7[%c2_426, %c3_427] : memref<16x8xf32, #tpu.memory_space<smem>>
    %950 = vector.broadcast %949 : f32 to vector<16x6xf32>
    %951 = arith.mulf %501, %950 : vector<16x6xf32>
    %952 = arith.addf %940, %951 : vector<16x6xf32>
    %c10_428 = arith.constant 10 : index
    %c3_429 = arith.constant 3 : index
    %953 = memref.load %arg7[%c10_428, %c3_429] : memref<16x8xf32, #tpu.memory_space<smem>>
    %954 = vector.broadcast %953 : f32 to vector<16x6xf32>
    %955 = arith.mulf %509, %954 : vector<16x6xf32>
    %956 = arith.addf %952, %955 : vector<16x6xf32>
    %c3_430 = arith.constant 3 : index
    %c3_431 = arith.constant 3 : index
    %957 = memref.load %arg7[%c3_430, %c3_431] : memref<16x8xf32, #tpu.memory_space<smem>>
    %958 = vector.broadcast %957 : f32 to vector<16x7xf32>
    %959 = arith.mulf %120, %958 : vector<16x7xf32>
    %960 = arith.addf %948, %959 : vector<16x7xf32>
    %c11_432 = arith.constant 11 : index
    %c3_433 = arith.constant 3 : index
    %961 = memref.load %arg7[%c11_432, %c3_433] : memref<16x8xf32, #tpu.memory_space<smem>>
    %962 = vector.broadcast %961 : f32 to vector<16x7xf32>
    %963 = arith.mulf %130, %962 : vector<16x7xf32>
    %964 = arith.addf %960, %963 : vector<16x7xf32>
    %c3_434 = arith.constant 3 : index
    %c3_435 = arith.constant 3 : index
    %965 = memref.load %arg7[%c3_434, %c3_435] : memref<16x8xf32, #tpu.memory_space<smem>>
    %966 = vector.broadcast %965 : f32 to vector<16x6xf32>
    %967 = arith.mulf %502, %966 : vector<16x6xf32>
    %968 = arith.addf %956, %967 : vector<16x6xf32>
    %c11_436 = arith.constant 11 : index
    %c3_437 = arith.constant 3 : index
    %969 = memref.load %arg7[%c11_436, %c3_437] : memref<16x8xf32, #tpu.memory_space<smem>>
    %970 = vector.broadcast %969 : f32 to vector<16x6xf32>
    %971 = arith.mulf %510, %970 : vector<16x6xf32>
    %972 = arith.addf %968, %971 : vector<16x6xf32>
    %c4_438 = arith.constant 4 : index
    %c3_439 = arith.constant 3 : index
    %973 = memref.load %arg7[%c4_438, %c3_439] : memref<16x8xf32, #tpu.memory_space<smem>>
    %974 = vector.broadcast %973 : f32 to vector<16x7xf32>
    %975 = arith.mulf %144, %974 : vector<16x7xf32>
    %976 = arith.addf %964, %975 : vector<16x7xf32>
    %c12_440 = arith.constant 12 : index
    %c3_441 = arith.constant 3 : index
    %977 = memref.load %arg7[%c12_440, %c3_441] : memref<16x8xf32, #tpu.memory_space<smem>>
    %978 = vector.broadcast %977 : f32 to vector<16x7xf32>
    %979 = arith.mulf %154, %978 : vector<16x7xf32>
    %980 = arith.addf %976, %979 : vector<16x7xf32>
    %c4_442 = arith.constant 4 : index
    %c3_443 = arith.constant 3 : index
    %981 = memref.load %arg7[%c4_442, %c3_443] : memref<16x8xf32, #tpu.memory_space<smem>>
    %982 = vector.broadcast %981 : f32 to vector<16x6xf32>
    %983 = arith.mulf %503, %982 : vector<16x6xf32>
    %984 = arith.addf %972, %983 : vector<16x6xf32>
    %c12_444 = arith.constant 12 : index
    %c3_445 = arith.constant 3 : index
    %985 = memref.load %arg7[%c12_444, %c3_445] : memref<16x8xf32, #tpu.memory_space<smem>>
    %986 = vector.broadcast %985 : f32 to vector<16x6xf32>
    %987 = arith.mulf %511, %986 : vector<16x6xf32>
    %988 = arith.addf %984, %987 : vector<16x6xf32>
    %c5_446 = arith.constant 5 : index
    %c3_447 = arith.constant 3 : index
    %989 = memref.load %arg7[%c5_446, %c3_447] : memref<16x8xf32, #tpu.memory_space<smem>>
    %990 = vector.broadcast %989 : f32 to vector<16x7xf32>
    %991 = arith.mulf %168, %990 : vector<16x7xf32>
    %992 = arith.addf %980, %991 : vector<16x7xf32>
    %c13_448 = arith.constant 13 : index
    %c3_449 = arith.constant 3 : index
    %993 = memref.load %arg7[%c13_448, %c3_449] : memref<16x8xf32, #tpu.memory_space<smem>>
    %994 = vector.broadcast %993 : f32 to vector<16x7xf32>
    %995 = arith.mulf %178, %994 : vector<16x7xf32>
    %996 = arith.addf %992, %995 : vector<16x7xf32>
    %c5_450 = arith.constant 5 : index
    %c3_451 = arith.constant 3 : index
    %997 = memref.load %arg7[%c5_450, %c3_451] : memref<16x8xf32, #tpu.memory_space<smem>>
    %998 = vector.broadcast %997 : f32 to vector<16x6xf32>
    %999 = arith.mulf %504, %998 : vector<16x6xf32>
    %1000 = arith.addf %988, %999 : vector<16x6xf32>
    %c13_452 = arith.constant 13 : index
    %c3_453 = arith.constant 3 : index
    %1001 = memref.load %arg7[%c13_452, %c3_453] : memref<16x8xf32, #tpu.memory_space<smem>>
    %1002 = vector.broadcast %1001 : f32 to vector<16x6xf32>
    %1003 = arith.mulf %512, %1002 : vector<16x6xf32>
    %1004 = arith.addf %1000, %1003 : vector<16x6xf32>
    %c6_454 = arith.constant 6 : index
    %c3_455 = arith.constant 3 : index
    %1005 = memref.load %arg7[%c6_454, %c3_455] : memref<16x8xf32, #tpu.memory_space<smem>>
    %1006 = vector.broadcast %1005 : f32 to vector<16x7xf32>
    %1007 = arith.mulf %192, %1006 : vector<16x7xf32>
    %1008 = arith.addf %996, %1007 : vector<16x7xf32>
    %c14_456 = arith.constant 14 : index
    %c3_457 = arith.constant 3 : index
    %1009 = memref.load %arg7[%c14_456, %c3_457] : memref<16x8xf32, #tpu.memory_space<smem>>
    %1010 = vector.broadcast %1009 : f32 to vector<16x7xf32>
    %1011 = arith.mulf %202, %1010 : vector<16x7xf32>
    %1012 = arith.addf %1008, %1011 : vector<16x7xf32>
    %c6_458 = arith.constant 6 : index
    %c3_459 = arith.constant 3 : index
    %1013 = memref.load %arg7[%c6_458, %c3_459] : memref<16x8xf32, #tpu.memory_space<smem>>
    %1014 = vector.broadcast %1013 : f32 to vector<16x6xf32>
    %1015 = arith.mulf %505, %1014 : vector<16x6xf32>
    %1016 = arith.addf %1004, %1015 : vector<16x6xf32>
    %c14_460 = arith.constant 14 : index
    %c3_461 = arith.constant 3 : index
    %1017 = memref.load %arg7[%c14_460, %c3_461] : memref<16x8xf32, #tpu.memory_space<smem>>
    %1018 = vector.broadcast %1017 : f32 to vector<16x6xf32>
    %1019 = arith.mulf %513, %1018 : vector<16x6xf32>
    %1020 = arith.addf %1016, %1019 : vector<16x6xf32>
    %c7_462 = arith.constant 7 : index
    %c3_463 = arith.constant 3 : index
    %1021 = memref.load %arg7[%c7_462, %c3_463] : memref<16x8xf32, #tpu.memory_space<smem>>
    %1022 = vector.broadcast %1021 : f32 to vector<16x7xf32>
    %1023 = arith.mulf %216, %1022 : vector<16x7xf32>
    %1024 = arith.addf %1012, %1023 : vector<16x7xf32>
    %c15_464 = arith.constant 15 : index
    %c3_465 = arith.constant 3 : index
    %1025 = memref.load %arg7[%c15_464, %c3_465] : memref<16x8xf32, #tpu.memory_space<smem>>
    %1026 = vector.broadcast %1025 : f32 to vector<16x7xf32>
    %1027 = arith.mulf %226, %1026 : vector<16x7xf32>
    %1028 = arith.addf %1024, %1027 : vector<16x7xf32>
    %c7_466 = arith.constant 7 : index
    %c3_467 = arith.constant 3 : index
    %1029 = memref.load %arg7[%c7_466, %c3_467] : memref<16x8xf32, #tpu.memory_space<smem>>
    %1030 = vector.broadcast %1029 : f32 to vector<16x6xf32>
    %1031 = arith.mulf %506, %1030 : vector<16x6xf32>
    %1032 = arith.addf %1020, %1031 : vector<16x6xf32>
    %c15_468 = arith.constant 15 : index
    %c3_469 = arith.constant 3 : index
    %1033 = memref.load %arg7[%c15_468, %c3_469] : memref<16x8xf32, #tpu.memory_space<smem>>
    %1034 = vector.broadcast %1033 : f32 to vector<16x6xf32>
    %1035 = arith.mulf %514, %1034 : vector<16x6xf32>
    %1036 = arith.addf %1032, %1035 : vector<16x6xf32>
    %c0_470 = arith.constant 0 : index
    %c3_471 = arith.constant 3 : index
    %1037 = memref.load %arg8[%c0_470, %c3_471] : memref<1x8xf32, #tpu.memory_space<smem>>
    %1038 = vector.broadcast %1037 : f32 to vector<16x7xf32>
    %1039 = arith.addf %1028, %1038 : vector<16x7xf32>
    %c0_472 = arith.constant 0 : index
    %c3_473 = arith.constant 3 : index
    %1040 = memref.load %arg8[%c0_472, %c3_473] : memref<1x8xf32, #tpu.memory_space<smem>>
    %1041 = vector.broadcast %1040 : f32 to vector<16x6xf32>
    %1042 = arith.addf %1036, %1041 : vector<16x6xf32>
    %c0_474 = arith.constant 0 : index
    %c4_475 = arith.constant 4 : index
    %1043 = memref.load %arg7[%c0_474, %c4_475] : memref<16x8xf32, #tpu.memory_space<smem>>
    %1044 = vector.broadcast %1043 : f32 to vector<16x7xf32>
    %1045 = arith.mulf %48, %1044 : vector<16x7xf32>
    %c8_476 = arith.constant 8 : index
    %c4_477 = arith.constant 4 : index
    %1046 = memref.load %arg7[%c8_476, %c4_477] : memref<16x8xf32, #tpu.memory_space<smem>>
    %1047 = vector.broadcast %1046 : f32 to vector<16x7xf32>
    %1048 = arith.mulf %58, %1047 : vector<16x7xf32>
    %1049 = arith.addf %1045, %1048 : vector<16x7xf32>
    %c0_478 = arith.constant 0 : index
    %c4_479 = arith.constant 4 : index
    %1050 = memref.load %arg7[%c0_478, %c4_479] : memref<16x8xf32, #tpu.memory_space<smem>>
    %1051 = vector.broadcast %1050 : f32 to vector<16x6xf32>
    %1052 = arith.mulf %499, %1051 : vector<16x6xf32>
    %c8_480 = arith.constant 8 : index
    %c4_481 = arith.constant 4 : index
    %1053 = memref.load %arg7[%c8_480, %c4_481] : memref<16x8xf32, #tpu.memory_space<smem>>
    %1054 = vector.broadcast %1053 : f32 to vector<16x6xf32>
    %1055 = arith.mulf %507, %1054 : vector<16x6xf32>
    %1056 = arith.addf %1052, %1055 : vector<16x6xf32>
    %c1_482 = arith.constant 1 : index
    %c4_483 = arith.constant 4 : index
    %1057 = memref.load %arg7[%c1_482, %c4_483] : memref<16x8xf32, #tpu.memory_space<smem>>
    %1058 = vector.broadcast %1057 : f32 to vector<16x7xf32>
    %1059 = arith.mulf %72, %1058 : vector<16x7xf32>
    %1060 = arith.addf %1049, %1059 : vector<16x7xf32>
    %c9_484 = arith.constant 9 : index
    %c4_485 = arith.constant 4 : index
    %1061 = memref.load %arg7[%c9_484, %c4_485] : memref<16x8xf32, #tpu.memory_space<smem>>
    %1062 = vector.broadcast %1061 : f32 to vector<16x7xf32>
    %1063 = arith.mulf %82, %1062 : vector<16x7xf32>
    %1064 = arith.addf %1060, %1063 : vector<16x7xf32>
    %c1_486 = arith.constant 1 : index
    %c4_487 = arith.constant 4 : index
    %1065 = memref.load %arg7[%c1_486, %c4_487] : memref<16x8xf32, #tpu.memory_space<smem>>
    %1066 = vector.broadcast %1065 : f32 to vector<16x6xf32>
    %1067 = arith.mulf %500, %1066 : vector<16x6xf32>
    %1068 = arith.addf %1056, %1067 : vector<16x6xf32>
    %c9_488 = arith.constant 9 : index
    %c4_489 = arith.constant 4 : index
    %1069 = memref.load %arg7[%c9_488, %c4_489] : memref<16x8xf32, #tpu.memory_space<smem>>
    %1070 = vector.broadcast %1069 : f32 to vector<16x6xf32>
    %1071 = arith.mulf %508, %1070 : vector<16x6xf32>
    %1072 = arith.addf %1068, %1071 : vector<16x6xf32>
    %c2_490 = arith.constant 2 : index
    %c4_491 = arith.constant 4 : index
    %1073 = memref.load %arg7[%c2_490, %c4_491] : memref<16x8xf32, #tpu.memory_space<smem>>
    %1074 = vector.broadcast %1073 : f32 to vector<16x7xf32>
    %1075 = arith.mulf %96, %1074 : vector<16x7xf32>
    %1076 = arith.addf %1064, %1075 : vector<16x7xf32>
    %c10_492 = arith.constant 10 : index
    %c4_493 = arith.constant 4 : index
    %1077 = memref.load %arg7[%c10_492, %c4_493] : memref<16x8xf32, #tpu.memory_space<smem>>
    %1078 = vector.broadcast %1077 : f32 to vector<16x7xf32>
    %1079 = arith.mulf %106, %1078 : vector<16x7xf32>
    %1080 = arith.addf %1076, %1079 : vector<16x7xf32>
    %c2_494 = arith.constant 2 : index
    %c4_495 = arith.constant 4 : index
    %1081 = memref.load %arg7[%c2_494, %c4_495] : memref<16x8xf32, #tpu.memory_space<smem>>
    %1082 = vector.broadcast %1081 : f32 to vector<16x6xf32>
    %1083 = arith.mulf %501, %1082 : vector<16x6xf32>
    %1084 = arith.addf %1072, %1083 : vector<16x6xf32>
    %c10_496 = arith.constant 10 : index
    %c4_497 = arith.constant 4 : index
    %1085 = memref.load %arg7[%c10_496, %c4_497] : memref<16x8xf32, #tpu.memory_space<smem>>
    %1086 = vector.broadcast %1085 : f32 to vector<16x6xf32>
    %1087 = arith.mulf %509, %1086 : vector<16x6xf32>
    %1088 = arith.addf %1084, %1087 : vector<16x6xf32>
    %c3_498 = arith.constant 3 : index
    %c4_499 = arith.constant 4 : index
    %1089 = memref.load %arg7[%c3_498, %c4_499] : memref<16x8xf32, #tpu.memory_space<smem>>
    %1090 = vector.broadcast %1089 : f32 to vector<16x7xf32>
    %1091 = arith.mulf %120, %1090 : vector<16x7xf32>
    %1092 = arith.addf %1080, %1091 : vector<16x7xf32>
    %c11_500 = arith.constant 11 : index
    %c4_501 = arith.constant 4 : index
    %1093 = memref.load %arg7[%c11_500, %c4_501] : memref<16x8xf32, #tpu.memory_space<smem>>
    %1094 = vector.broadcast %1093 : f32 to vector<16x7xf32>
    %1095 = arith.mulf %130, %1094 : vector<16x7xf32>
    %1096 = arith.addf %1092, %1095 : vector<16x7xf32>
    %c3_502 = arith.constant 3 : index
    %c4_503 = arith.constant 4 : index
    %1097 = memref.load %arg7[%c3_502, %c4_503] : memref<16x8xf32, #tpu.memory_space<smem>>
    %1098 = vector.broadcast %1097 : f32 to vector<16x6xf32>
    %1099 = arith.mulf %502, %1098 : vector<16x6xf32>
    %1100 = arith.addf %1088, %1099 : vector<16x6xf32>
    %c11_504 = arith.constant 11 : index
    %c4_505 = arith.constant 4 : index
    %1101 = memref.load %arg7[%c11_504, %c4_505] : memref<16x8xf32, #tpu.memory_space<smem>>
    %1102 = vector.broadcast %1101 : f32 to vector<16x6xf32>
    %1103 = arith.mulf %510, %1102 : vector<16x6xf32>
    %1104 = arith.addf %1100, %1103 : vector<16x6xf32>
    %c4_506 = arith.constant 4 : index
    %c4_507 = arith.constant 4 : index
    %1105 = memref.load %arg7[%c4_506, %c4_507] : memref<16x8xf32, #tpu.memory_space<smem>>
    %1106 = vector.broadcast %1105 : f32 to vector<16x7xf32>
    %1107 = arith.mulf %144, %1106 : vector<16x7xf32>
    %1108 = arith.addf %1096, %1107 : vector<16x7xf32>
    %c12_508 = arith.constant 12 : index
    %c4_509 = arith.constant 4 : index
    %1109 = memref.load %arg7[%c12_508, %c4_509] : memref<16x8xf32, #tpu.memory_space<smem>>
    %1110 = vector.broadcast %1109 : f32 to vector<16x7xf32>
    %1111 = arith.mulf %154, %1110 : vector<16x7xf32>
    %1112 = arith.addf %1108, %1111 : vector<16x7xf32>
    %c4_510 = arith.constant 4 : index
    %c4_511 = arith.constant 4 : index
    %1113 = memref.load %arg7[%c4_510, %c4_511] : memref<16x8xf32, #tpu.memory_space<smem>>
    %1114 = vector.broadcast %1113 : f32 to vector<16x6xf32>
    %1115 = arith.mulf %503, %1114 : vector<16x6xf32>
    %1116 = arith.addf %1104, %1115 : vector<16x6xf32>
    %c12_512 = arith.constant 12 : index
    %c4_513 = arith.constant 4 : index
    %1117 = memref.load %arg7[%c12_512, %c4_513] : memref<16x8xf32, #tpu.memory_space<smem>>
    %1118 = vector.broadcast %1117 : f32 to vector<16x6xf32>
    %1119 = arith.mulf %511, %1118 : vector<16x6xf32>
    %1120 = arith.addf %1116, %1119 : vector<16x6xf32>
    %c5_514 = arith.constant 5 : index
    %c4_515 = arith.constant 4 : index
    %1121 = memref.load %arg7[%c5_514, %c4_515] : memref<16x8xf32, #tpu.memory_space<smem>>
    %1122 = vector.broadcast %1121 : f32 to vector<16x7xf32>
    %1123 = arith.mulf %168, %1122 : vector<16x7xf32>
    %1124 = arith.addf %1112, %1123 : vector<16x7xf32>
    %c13_516 = arith.constant 13 : index
    %c4_517 = arith.constant 4 : index
    %1125 = memref.load %arg7[%c13_516, %c4_517] : memref<16x8xf32, #tpu.memory_space<smem>>
    %1126 = vector.broadcast %1125 : f32 to vector<16x7xf32>
    %1127 = arith.mulf %178, %1126 : vector<16x7xf32>
    %1128 = arith.addf %1124, %1127 : vector<16x7xf32>
    %c5_518 = arith.constant 5 : index
    %c4_519 = arith.constant 4 : index
    %1129 = memref.load %arg7[%c5_518, %c4_519] : memref<16x8xf32, #tpu.memory_space<smem>>
    %1130 = vector.broadcast %1129 : f32 to vector<16x6xf32>
    %1131 = arith.mulf %504, %1130 : vector<16x6xf32>
    %1132 = arith.addf %1120, %1131 : vector<16x6xf32>
    %c13_520 = arith.constant 13 : index
    %c4_521 = arith.constant 4 : index
    %1133 = memref.load %arg7[%c13_520, %c4_521] : memref<16x8xf32, #tpu.memory_space<smem>>
    %1134 = vector.broadcast %1133 : f32 to vector<16x6xf32>
    %1135 = arith.mulf %512, %1134 : vector<16x6xf32>
    %1136 = arith.addf %1132, %1135 : vector<16x6xf32>
    %c6_522 = arith.constant 6 : index
    %c4_523 = arith.constant 4 : index
    %1137 = memref.load %arg7[%c6_522, %c4_523] : memref<16x8xf32, #tpu.memory_space<smem>>
    %1138 = vector.broadcast %1137 : f32 to vector<16x7xf32>
    %1139 = arith.mulf %192, %1138 : vector<16x7xf32>
    %1140 = arith.addf %1128, %1139 : vector<16x7xf32>
    %c14_524 = arith.constant 14 : index
    %c4_525 = arith.constant 4 : index
    %1141 = memref.load %arg7[%c14_524, %c4_525] : memref<16x8xf32, #tpu.memory_space<smem>>
    %1142 = vector.broadcast %1141 : f32 to vector<16x7xf32>
    %1143 = arith.mulf %202, %1142 : vector<16x7xf32>
    %1144 = arith.addf %1140, %1143 : vector<16x7xf32>
    %c6_526 = arith.constant 6 : index
    %c4_527 = arith.constant 4 : index
    %1145 = memref.load %arg7[%c6_526, %c4_527] : memref<16x8xf32, #tpu.memory_space<smem>>
    %1146 = vector.broadcast %1145 : f32 to vector<16x6xf32>
    %1147 = arith.mulf %505, %1146 : vector<16x6xf32>
    %1148 = arith.addf %1136, %1147 : vector<16x6xf32>
    %c14_528 = arith.constant 14 : index
    %c4_529 = arith.constant 4 : index
    %1149 = memref.load %arg7[%c14_528, %c4_529] : memref<16x8xf32, #tpu.memory_space<smem>>
    %1150 = vector.broadcast %1149 : f32 to vector<16x6xf32>
    %1151 = arith.mulf %513, %1150 : vector<16x6xf32>
    %1152 = arith.addf %1148, %1151 : vector<16x6xf32>
    %c7_530 = arith.constant 7 : index
    %c4_531 = arith.constant 4 : index
    %1153 = memref.load %arg7[%c7_530, %c4_531] : memref<16x8xf32, #tpu.memory_space<smem>>
    %1154 = vector.broadcast %1153 : f32 to vector<16x7xf32>
    %1155 = arith.mulf %216, %1154 : vector<16x7xf32>
    %1156 = arith.addf %1144, %1155 : vector<16x7xf32>
    %c15_532 = arith.constant 15 : index
    %c4_533 = arith.constant 4 : index
    %1157 = memref.load %arg7[%c15_532, %c4_533] : memref<16x8xf32, #tpu.memory_space<smem>>
    %1158 = vector.broadcast %1157 : f32 to vector<16x7xf32>
    %1159 = arith.mulf %226, %1158 : vector<16x7xf32>
    %1160 = arith.addf %1156, %1159 : vector<16x7xf32>
    %c7_534 = arith.constant 7 : index
    %c4_535 = arith.constant 4 : index
    %1161 = memref.load %arg7[%c7_534, %c4_535] : memref<16x8xf32, #tpu.memory_space<smem>>
    %1162 = vector.broadcast %1161 : f32 to vector<16x6xf32>
    %1163 = arith.mulf %506, %1162 : vector<16x6xf32>
    %1164 = arith.addf %1152, %1163 : vector<16x6xf32>
    %c15_536 = arith.constant 15 : index
    %c4_537 = arith.constant 4 : index
    %1165 = memref.load %arg7[%c15_536, %c4_537] : memref<16x8xf32, #tpu.memory_space<smem>>
    %1166 = vector.broadcast %1165 : f32 to vector<16x6xf32>
    %1167 = arith.mulf %514, %1166 : vector<16x6xf32>
    %1168 = arith.addf %1164, %1167 : vector<16x6xf32>
    %c0_538 = arith.constant 0 : index
    %c4_539 = arith.constant 4 : index
    %1169 = memref.load %arg8[%c0_538, %c4_539] : memref<1x8xf32, #tpu.memory_space<smem>>
    %1170 = vector.broadcast %1169 : f32 to vector<16x7xf32>
    %1171 = arith.addf %1160, %1170 : vector<16x7xf32>
    %c0_540 = arith.constant 0 : index
    %c4_541 = arith.constant 4 : index
    %1172 = memref.load %arg8[%c0_540, %c4_541] : memref<1x8xf32, #tpu.memory_space<smem>>
    %1173 = vector.broadcast %1172 : f32 to vector<16x6xf32>
    %1174 = arith.addf %1168, %1173 : vector<16x6xf32>
    %c0_542 = arith.constant 0 : index
    %c5_543 = arith.constant 5 : index
    %1175 = memref.load %arg7[%c0_542, %c5_543] : memref<16x8xf32, #tpu.memory_space<smem>>
    %1176 = vector.broadcast %1175 : f32 to vector<16x7xf32>
    %1177 = arith.mulf %48, %1176 : vector<16x7xf32>
    %c8_544 = arith.constant 8 : index
    %c5_545 = arith.constant 5 : index
    %1178 = memref.load %arg7[%c8_544, %c5_545] : memref<16x8xf32, #tpu.memory_space<smem>>
    %1179 = vector.broadcast %1178 : f32 to vector<16x7xf32>
    %1180 = arith.mulf %58, %1179 : vector<16x7xf32>
    %1181 = arith.addf %1177, %1180 : vector<16x7xf32>
    %c0_546 = arith.constant 0 : index
    %c5_547 = arith.constant 5 : index
    %1182 = memref.load %arg7[%c0_546, %c5_547] : memref<16x8xf32, #tpu.memory_space<smem>>
    %1183 = vector.broadcast %1182 : f32 to vector<16x6xf32>
    %1184 = arith.mulf %499, %1183 : vector<16x6xf32>
    %c8_548 = arith.constant 8 : index
    %c5_549 = arith.constant 5 : index
    %1185 = memref.load %arg7[%c8_548, %c5_549] : memref<16x8xf32, #tpu.memory_space<smem>>
    %1186 = vector.broadcast %1185 : f32 to vector<16x6xf32>
    %1187 = arith.mulf %507, %1186 : vector<16x6xf32>
    %1188 = arith.addf %1184, %1187 : vector<16x6xf32>
    %c1_550 = arith.constant 1 : index
    %c5_551 = arith.constant 5 : index
    %1189 = memref.load %arg7[%c1_550, %c5_551] : memref<16x8xf32, #tpu.memory_space<smem>>
    %1190 = vector.broadcast %1189 : f32 to vector<16x7xf32>
    %1191 = arith.mulf %72, %1190 : vector<16x7xf32>
    %1192 = arith.addf %1181, %1191 : vector<16x7xf32>
    %c9_552 = arith.constant 9 : index
    %c5_553 = arith.constant 5 : index
    %1193 = memref.load %arg7[%c9_552, %c5_553] : memref<16x8xf32, #tpu.memory_space<smem>>
    %1194 = vector.broadcast %1193 : f32 to vector<16x7xf32>
    %1195 = arith.mulf %82, %1194 : vector<16x7xf32>
    %1196 = arith.addf %1192, %1195 : vector<16x7xf32>
    %c1_554 = arith.constant 1 : index
    %c5_555 = arith.constant 5 : index
    %1197 = memref.load %arg7[%c1_554, %c5_555] : memref<16x8xf32, #tpu.memory_space<smem>>
    %1198 = vector.broadcast %1197 : f32 to vector<16x6xf32>
    %1199 = arith.mulf %500, %1198 : vector<16x6xf32>
    %1200 = arith.addf %1188, %1199 : vector<16x6xf32>
    %c9_556 = arith.constant 9 : index
    %c5_557 = arith.constant 5 : index
    %1201 = memref.load %arg7[%c9_556, %c5_557] : memref<16x8xf32, #tpu.memory_space<smem>>
    %1202 = vector.broadcast %1201 : f32 to vector<16x6xf32>
    %1203 = arith.mulf %508, %1202 : vector<16x6xf32>
    %1204 = arith.addf %1200, %1203 : vector<16x6xf32>
    %c2_558 = arith.constant 2 : index
    %c5_559 = arith.constant 5 : index
    %1205 = memref.load %arg7[%c2_558, %c5_559] : memref<16x8xf32, #tpu.memory_space<smem>>
    %1206 = vector.broadcast %1205 : f32 to vector<16x7xf32>
    %1207 = arith.mulf %96, %1206 : vector<16x7xf32>
    %1208 = arith.addf %1196, %1207 : vector<16x7xf32>
    %c10_560 = arith.constant 10 : index
    %c5_561 = arith.constant 5 : index
    %1209 = memref.load %arg7[%c10_560, %c5_561] : memref<16x8xf32, #tpu.memory_space<smem>>
    %1210 = vector.broadcast %1209 : f32 to vector<16x7xf32>
    %1211 = arith.mulf %106, %1210 : vector<16x7xf32>
    %1212 = arith.addf %1208, %1211 : vector<16x7xf32>
    %c2_562 = arith.constant 2 : index
    %c5_563 = arith.constant 5 : index
    %1213 = memref.load %arg7[%c2_562, %c5_563] : memref<16x8xf32, #tpu.memory_space<smem>>
    %1214 = vector.broadcast %1213 : f32 to vector<16x6xf32>
    %1215 = arith.mulf %501, %1214 : vector<16x6xf32>
    %1216 = arith.addf %1204, %1215 : vector<16x6xf32>
    %c10_564 = arith.constant 10 : index
    %c5_565 = arith.constant 5 : index
    %1217 = memref.load %arg7[%c10_564, %c5_565] : memref<16x8xf32, #tpu.memory_space<smem>>
    %1218 = vector.broadcast %1217 : f32 to vector<16x6xf32>
    %1219 = arith.mulf %509, %1218 : vector<16x6xf32>
    %1220 = arith.addf %1216, %1219 : vector<16x6xf32>
    %c3_566 = arith.constant 3 : index
    %c5_567 = arith.constant 5 : index
    %1221 = memref.load %arg7[%c3_566, %c5_567] : memref<16x8xf32, #tpu.memory_space<smem>>
    %1222 = vector.broadcast %1221 : f32 to vector<16x7xf32>
    %1223 = arith.mulf %120, %1222 : vector<16x7xf32>
    %1224 = arith.addf %1212, %1223 : vector<16x7xf32>
    %c11_568 = arith.constant 11 : index
    %c5_569 = arith.constant 5 : index
    %1225 = memref.load %arg7[%c11_568, %c5_569] : memref<16x8xf32, #tpu.memory_space<smem>>
    %1226 = vector.broadcast %1225 : f32 to vector<16x7xf32>
    %1227 = arith.mulf %130, %1226 : vector<16x7xf32>
    %1228 = arith.addf %1224, %1227 : vector<16x7xf32>
    %c3_570 = arith.constant 3 : index
    %c5_571 = arith.constant 5 : index
    %1229 = memref.load %arg7[%c3_570, %c5_571] : memref<16x8xf32, #tpu.memory_space<smem>>
    %1230 = vector.broadcast %1229 : f32 to vector<16x6xf32>
    %1231 = arith.mulf %502, %1230 : vector<16x6xf32>
    %1232 = arith.addf %1220, %1231 : vector<16x6xf32>
    %c11_572 = arith.constant 11 : index
    %c5_573 = arith.constant 5 : index
    %1233 = memref.load %arg7[%c11_572, %c5_573] : memref<16x8xf32, #tpu.memory_space<smem>>
    %1234 = vector.broadcast %1233 : f32 to vector<16x6xf32>
    %1235 = arith.mulf %510, %1234 : vector<16x6xf32>
    %1236 = arith.addf %1232, %1235 : vector<16x6xf32>
    %c4_574 = arith.constant 4 : index
    %c5_575 = arith.constant 5 : index
    %1237 = memref.load %arg7[%c4_574, %c5_575] : memref<16x8xf32, #tpu.memory_space<smem>>
    %1238 = vector.broadcast %1237 : f32 to vector<16x7xf32>
    %1239 = arith.mulf %144, %1238 : vector<16x7xf32>
    %1240 = arith.addf %1228, %1239 : vector<16x7xf32>
    %c12_576 = arith.constant 12 : index
    %c5_577 = arith.constant 5 : index
    %1241 = memref.load %arg7[%c12_576, %c5_577] : memref<16x8xf32, #tpu.memory_space<smem>>
    %1242 = vector.broadcast %1241 : f32 to vector<16x7xf32>
    %1243 = arith.mulf %154, %1242 : vector<16x7xf32>
    %1244 = arith.addf %1240, %1243 : vector<16x7xf32>
    %c4_578 = arith.constant 4 : index
    %c5_579 = arith.constant 5 : index
    %1245 = memref.load %arg7[%c4_578, %c5_579] : memref<16x8xf32, #tpu.memory_space<smem>>
    %1246 = vector.broadcast %1245 : f32 to vector<16x6xf32>
    %1247 = arith.mulf %503, %1246 : vector<16x6xf32>
    %1248 = arith.addf %1236, %1247 : vector<16x6xf32>
    %c12_580 = arith.constant 12 : index
    %c5_581 = arith.constant 5 : index
    %1249 = memref.load %arg7[%c12_580, %c5_581] : memref<16x8xf32, #tpu.memory_space<smem>>
    %1250 = vector.broadcast %1249 : f32 to vector<16x6xf32>
    %1251 = arith.mulf %511, %1250 : vector<16x6xf32>
    %1252 = arith.addf %1248, %1251 : vector<16x6xf32>
    %c5_582 = arith.constant 5 : index
    %c5_583 = arith.constant 5 : index
    %1253 = memref.load %arg7[%c5_582, %c5_583] : memref<16x8xf32, #tpu.memory_space<smem>>
    %1254 = vector.broadcast %1253 : f32 to vector<16x7xf32>
    %1255 = arith.mulf %168, %1254 : vector<16x7xf32>
    %1256 = arith.addf %1244, %1255 : vector<16x7xf32>
    %c13_584 = arith.constant 13 : index
    %c5_585 = arith.constant 5 : index
    %1257 = memref.load %arg7[%c13_584, %c5_585] : memref<16x8xf32, #tpu.memory_space<smem>>
    %1258 = vector.broadcast %1257 : f32 to vector<16x7xf32>
    %1259 = arith.mulf %178, %1258 : vector<16x7xf32>
    %1260 = arith.addf %1256, %1259 : vector<16x7xf32>
    %c5_586 = arith.constant 5 : index
    %c5_587 = arith.constant 5 : index
    %1261 = memref.load %arg7[%c5_586, %c5_587] : memref<16x8xf32, #tpu.memory_space<smem>>
    %1262 = vector.broadcast %1261 : f32 to vector<16x6xf32>
    %1263 = arith.mulf %504, %1262 : vector<16x6xf32>
    %1264 = arith.addf %1252, %1263 : vector<16x6xf32>
    %c13_588 = arith.constant 13 : index
    %c5_589 = arith.constant 5 : index
    %1265 = memref.load %arg7[%c13_588, %c5_589] : memref<16x8xf32, #tpu.memory_space<smem>>
    %1266 = vector.broadcast %1265 : f32 to vector<16x6xf32>
    %1267 = arith.mulf %512, %1266 : vector<16x6xf32>
    %1268 = arith.addf %1264, %1267 : vector<16x6xf32>
    %c6_590 = arith.constant 6 : index
    %c5_591 = arith.constant 5 : index
    %1269 = memref.load %arg7[%c6_590, %c5_591] : memref<16x8xf32, #tpu.memory_space<smem>>
    %1270 = vector.broadcast %1269 : f32 to vector<16x7xf32>
    %1271 = arith.mulf %192, %1270 : vector<16x7xf32>
    %1272 = arith.addf %1260, %1271 : vector<16x7xf32>
    %c14_592 = arith.constant 14 : index
    %c5_593 = arith.constant 5 : index
    %1273 = memref.load %arg7[%c14_592, %c5_593] : memref<16x8xf32, #tpu.memory_space<smem>>
    %1274 = vector.broadcast %1273 : f32 to vector<16x7xf32>
    %1275 = arith.mulf %202, %1274 : vector<16x7xf32>
    %1276 = arith.addf %1272, %1275 : vector<16x7xf32>
    %c6_594 = arith.constant 6 : index
    %c5_595 = arith.constant 5 : index
    %1277 = memref.load %arg7[%c6_594, %c5_595] : memref<16x8xf32, #tpu.memory_space<smem>>
    %1278 = vector.broadcast %1277 : f32 to vector<16x6xf32>
    %1279 = arith.mulf %505, %1278 : vector<16x6xf32>
    %1280 = arith.addf %1268, %1279 : vector<16x6xf32>
    %c14_596 = arith.constant 14 : index
    %c5_597 = arith.constant 5 : index
    %1281 = memref.load %arg7[%c14_596, %c5_597] : memref<16x8xf32, #tpu.memory_space<smem>>
    %1282 = vector.broadcast %1281 : f32 to vector<16x6xf32>
    %1283 = arith.mulf %513, %1282 : vector<16x6xf32>
    %1284 = arith.addf %1280, %1283 : vector<16x6xf32>
    %c7_598 = arith.constant 7 : index
    %c5_599 = arith.constant 5 : index
    %1285 = memref.load %arg7[%c7_598, %c5_599] : memref<16x8xf32, #tpu.memory_space<smem>>
    %1286 = vector.broadcast %1285 : f32 to vector<16x7xf32>
    %1287 = arith.mulf %216, %1286 : vector<16x7xf32>
    %1288 = arith.addf %1276, %1287 : vector<16x7xf32>
    %c15_600 = arith.constant 15 : index
    %c5_601 = arith.constant 5 : index
    %1289 = memref.load %arg7[%c15_600, %c5_601] : memref<16x8xf32, #tpu.memory_space<smem>>
    %1290 = vector.broadcast %1289 : f32 to vector<16x7xf32>
    %1291 = arith.mulf %226, %1290 : vector<16x7xf32>
    %1292 = arith.addf %1288, %1291 : vector<16x7xf32>
    %c7_602 = arith.constant 7 : index
    %c5_603 = arith.constant 5 : index
    %1293 = memref.load %arg7[%c7_602, %c5_603] : memref<16x8xf32, #tpu.memory_space<smem>>
    %1294 = vector.broadcast %1293 : f32 to vector<16x6xf32>
    %1295 = arith.mulf %506, %1294 : vector<16x6xf32>
    %1296 = arith.addf %1284, %1295 : vector<16x6xf32>
    %c15_604 = arith.constant 15 : index
    %c5_605 = arith.constant 5 : index
    %1297 = memref.load %arg7[%c15_604, %c5_605] : memref<16x8xf32, #tpu.memory_space<smem>>
    %1298 = vector.broadcast %1297 : f32 to vector<16x6xf32>
    %1299 = arith.mulf %514, %1298 : vector<16x6xf32>
    %1300 = arith.addf %1296, %1299 : vector<16x6xf32>
    %c0_606 = arith.constant 0 : index
    %c5_607 = arith.constant 5 : index
    %1301 = memref.load %arg8[%c0_606, %c5_607] : memref<1x8xf32, #tpu.memory_space<smem>>
    %1302 = vector.broadcast %1301 : f32 to vector<16x7xf32>
    %1303 = arith.addf %1292, %1302 : vector<16x7xf32>
    %c0_608 = arith.constant 0 : index
    %c5_609 = arith.constant 5 : index
    %1304 = memref.load %arg8[%c0_608, %c5_609] : memref<1x8xf32, #tpu.memory_space<smem>>
    %1305 = vector.broadcast %1304 : f32 to vector<16x6xf32>
    %1306 = arith.addf %1300, %1305 : vector<16x6xf32>
    %c0_610 = arith.constant 0 : index
    %c6_611 = arith.constant 6 : index
    %1307 = memref.load %arg7[%c0_610, %c6_611] : memref<16x8xf32, #tpu.memory_space<smem>>
    %1308 = vector.broadcast %1307 : f32 to vector<16x7xf32>
    %1309 = arith.mulf %48, %1308 : vector<16x7xf32>
    %c8_612 = arith.constant 8 : index
    %c6_613 = arith.constant 6 : index
    %1310 = memref.load %arg7[%c8_612, %c6_613] : memref<16x8xf32, #tpu.memory_space<smem>>
    %1311 = vector.broadcast %1310 : f32 to vector<16x7xf32>
    %1312 = arith.mulf %58, %1311 : vector<16x7xf32>
    %1313 = arith.addf %1309, %1312 : vector<16x7xf32>
    %c0_614 = arith.constant 0 : index
    %c6_615 = arith.constant 6 : index
    %1314 = memref.load %arg7[%c0_614, %c6_615] : memref<16x8xf32, #tpu.memory_space<smem>>
    %1315 = vector.broadcast %1314 : f32 to vector<16x6xf32>
    %1316 = arith.mulf %499, %1315 : vector<16x6xf32>
    %c8_616 = arith.constant 8 : index
    %c6_617 = arith.constant 6 : index
    %1317 = memref.load %arg7[%c8_616, %c6_617] : memref<16x8xf32, #tpu.memory_space<smem>>
    %1318 = vector.broadcast %1317 : f32 to vector<16x6xf32>
    %1319 = arith.mulf %507, %1318 : vector<16x6xf32>
    %1320 = arith.addf %1316, %1319 : vector<16x6xf32>
    %c1_618 = arith.constant 1 : index
    %c6_619 = arith.constant 6 : index
    %1321 = memref.load %arg7[%c1_618, %c6_619] : memref<16x8xf32, #tpu.memory_space<smem>>
    %1322 = vector.broadcast %1321 : f32 to vector<16x7xf32>
    %1323 = arith.mulf %72, %1322 : vector<16x7xf32>
    %1324 = arith.addf %1313, %1323 : vector<16x7xf32>
    %c9_620 = arith.constant 9 : index
    %c6_621 = arith.constant 6 : index
    %1325 = memref.load %arg7[%c9_620, %c6_621] : memref<16x8xf32, #tpu.memory_space<smem>>
    %1326 = vector.broadcast %1325 : f32 to vector<16x7xf32>
    %1327 = arith.mulf %82, %1326 : vector<16x7xf32>
    %1328 = arith.addf %1324, %1327 : vector<16x7xf32>
    %c1_622 = arith.constant 1 : index
    %c6_623 = arith.constant 6 : index
    %1329 = memref.load %arg7[%c1_622, %c6_623] : memref<16x8xf32, #tpu.memory_space<smem>>
    %1330 = vector.broadcast %1329 : f32 to vector<16x6xf32>
    %1331 = arith.mulf %500, %1330 : vector<16x6xf32>
    %1332 = arith.addf %1320, %1331 : vector<16x6xf32>
    %c9_624 = arith.constant 9 : index
    %c6_625 = arith.constant 6 : index
    %1333 = memref.load %arg7[%c9_624, %c6_625] : memref<16x8xf32, #tpu.memory_space<smem>>
    %1334 = vector.broadcast %1333 : f32 to vector<16x6xf32>
    %1335 = arith.mulf %508, %1334 : vector<16x6xf32>
    %1336 = arith.addf %1332, %1335 : vector<16x6xf32>
    %c2_626 = arith.constant 2 : index
    %c6_627 = arith.constant 6 : index
    %1337 = memref.load %arg7[%c2_626, %c6_627] : memref<16x8xf32, #tpu.memory_space<smem>>
    %1338 = vector.broadcast %1337 : f32 to vector<16x7xf32>
    %1339 = arith.mulf %96, %1338 : vector<16x7xf32>
    %1340 = arith.addf %1328, %1339 : vector<16x7xf32>
    %c10_628 = arith.constant 10 : index
    %c6_629 = arith.constant 6 : index
    %1341 = memref.load %arg7[%c10_628, %c6_629] : memref<16x8xf32, #tpu.memory_space<smem>>
    %1342 = vector.broadcast %1341 : f32 to vector<16x7xf32>
    %1343 = arith.mulf %106, %1342 : vector<16x7xf32>
    %1344 = arith.addf %1340, %1343 : vector<16x7xf32>
    %c2_630 = arith.constant 2 : index
    %c6_631 = arith.constant 6 : index
    %1345 = memref.load %arg7[%c2_630, %c6_631] : memref<16x8xf32, #tpu.memory_space<smem>>
    %1346 = vector.broadcast %1345 : f32 to vector<16x6xf32>
    %1347 = arith.mulf %501, %1346 : vector<16x6xf32>
    %1348 = arith.addf %1336, %1347 : vector<16x6xf32>
    %c10_632 = arith.constant 10 : index
    %c6_633 = arith.constant 6 : index
    %1349 = memref.load %arg7[%c10_632, %c6_633] : memref<16x8xf32, #tpu.memory_space<smem>>
    %1350 = vector.broadcast %1349 : f32 to vector<16x6xf32>
    %1351 = arith.mulf %509, %1350 : vector<16x6xf32>
    %1352 = arith.addf %1348, %1351 : vector<16x6xf32>
    %c3_634 = arith.constant 3 : index
    %c6_635 = arith.constant 6 : index
    %1353 = memref.load %arg7[%c3_634, %c6_635] : memref<16x8xf32, #tpu.memory_space<smem>>
    %1354 = vector.broadcast %1353 : f32 to vector<16x7xf32>
    %1355 = arith.mulf %120, %1354 : vector<16x7xf32>
    %1356 = arith.addf %1344, %1355 : vector<16x7xf32>
    %c11_636 = arith.constant 11 : index
    %c6_637 = arith.constant 6 : index
    %1357 = memref.load %arg7[%c11_636, %c6_637] : memref<16x8xf32, #tpu.memory_space<smem>>
    %1358 = vector.broadcast %1357 : f32 to vector<16x7xf32>
    %1359 = arith.mulf %130, %1358 : vector<16x7xf32>
    %1360 = arith.addf %1356, %1359 : vector<16x7xf32>
    %c3_638 = arith.constant 3 : index
    %c6_639 = arith.constant 6 : index
    %1361 = memref.load %arg7[%c3_638, %c6_639] : memref<16x8xf32, #tpu.memory_space<smem>>
    %1362 = vector.broadcast %1361 : f32 to vector<16x6xf32>
    %1363 = arith.mulf %502, %1362 : vector<16x6xf32>
    %1364 = arith.addf %1352, %1363 : vector<16x6xf32>
    %c11_640 = arith.constant 11 : index
    %c6_641 = arith.constant 6 : index
    %1365 = memref.load %arg7[%c11_640, %c6_641] : memref<16x8xf32, #tpu.memory_space<smem>>
    %1366 = vector.broadcast %1365 : f32 to vector<16x6xf32>
    %1367 = arith.mulf %510, %1366 : vector<16x6xf32>
    %1368 = arith.addf %1364, %1367 : vector<16x6xf32>
    %c4_642 = arith.constant 4 : index
    %c6_643 = arith.constant 6 : index
    %1369 = memref.load %arg7[%c4_642, %c6_643] : memref<16x8xf32, #tpu.memory_space<smem>>
    %1370 = vector.broadcast %1369 : f32 to vector<16x7xf32>
    %1371 = arith.mulf %144, %1370 : vector<16x7xf32>
    %1372 = arith.addf %1360, %1371 : vector<16x7xf32>
    %c12_644 = arith.constant 12 : index
    %c6_645 = arith.constant 6 : index
    %1373 = memref.load %arg7[%c12_644, %c6_645] : memref<16x8xf32, #tpu.memory_space<smem>>
    %1374 = vector.broadcast %1373 : f32 to vector<16x7xf32>
    %1375 = arith.mulf %154, %1374 : vector<16x7xf32>
    %1376 = arith.addf %1372, %1375 : vector<16x7xf32>
    %c4_646 = arith.constant 4 : index
    %c6_647 = arith.constant 6 : index
    %1377 = memref.load %arg7[%c4_646, %c6_647] : memref<16x8xf32, #tpu.memory_space<smem>>
    %1378 = vector.broadcast %1377 : f32 to vector<16x6xf32>
    %1379 = arith.mulf %503, %1378 : vector<16x6xf32>
    %1380 = arith.addf %1368, %1379 : vector<16x6xf32>
    %c12_648 = arith.constant 12 : index
    %c6_649 = arith.constant 6 : index
    %1381 = memref.load %arg7[%c12_648, %c6_649] : memref<16x8xf32, #tpu.memory_space<smem>>
    %1382 = vector.broadcast %1381 : f32 to vector<16x6xf32>
    %1383 = arith.mulf %511, %1382 : vector<16x6xf32>
    %1384 = arith.addf %1380, %1383 : vector<16x6xf32>
    %c5_650 = arith.constant 5 : index
    %c6_651 = arith.constant 6 : index
    %1385 = memref.load %arg7[%c5_650, %c6_651] : memref<16x8xf32, #tpu.memory_space<smem>>
    %1386 = vector.broadcast %1385 : f32 to vector<16x7xf32>
    %1387 = arith.mulf %168, %1386 : vector<16x7xf32>
    %1388 = arith.addf %1376, %1387 : vector<16x7xf32>
    %c13_652 = arith.constant 13 : index
    %c6_653 = arith.constant 6 : index
    %1389 = memref.load %arg7[%c13_652, %c6_653] : memref<16x8xf32, #tpu.memory_space<smem>>
    %1390 = vector.broadcast %1389 : f32 to vector<16x7xf32>
    %1391 = arith.mulf %178, %1390 : vector<16x7xf32>
    %1392 = arith.addf %1388, %1391 : vector<16x7xf32>
    %c5_654 = arith.constant 5 : index
    %c6_655 = arith.constant 6 : index
    %1393 = memref.load %arg7[%c5_654, %c6_655] : memref<16x8xf32, #tpu.memory_space<smem>>
    %1394 = vector.broadcast %1393 : f32 to vector<16x6xf32>
    %1395 = arith.mulf %504, %1394 : vector<16x6xf32>
    %1396 = arith.addf %1384, %1395 : vector<16x6xf32>
    %c13_656 = arith.constant 13 : index
    %c6_657 = arith.constant 6 : index
    %1397 = memref.load %arg7[%c13_656, %c6_657] : memref<16x8xf32, #tpu.memory_space<smem>>
    %1398 = vector.broadcast %1397 : f32 to vector<16x6xf32>
    %1399 = arith.mulf %512, %1398 : vector<16x6xf32>
    %1400 = arith.addf %1396, %1399 : vector<16x6xf32>
    %c6_658 = arith.constant 6 : index
    %c6_659 = arith.constant 6 : index
    %1401 = memref.load %arg7[%c6_658, %c6_659] : memref<16x8xf32, #tpu.memory_space<smem>>
    %1402 = vector.broadcast %1401 : f32 to vector<16x7xf32>
    %1403 = arith.mulf %192, %1402 : vector<16x7xf32>
    %1404 = arith.addf %1392, %1403 : vector<16x7xf32>
    %c14_660 = arith.constant 14 : index
    %c6_661 = arith.constant 6 : index
    %1405 = memref.load %arg7[%c14_660, %c6_661] : memref<16x8xf32, #tpu.memory_space<smem>>
    %1406 = vector.broadcast %1405 : f32 to vector<16x7xf32>
    %1407 = arith.mulf %202, %1406 : vector<16x7xf32>
    %1408 = arith.addf %1404, %1407 : vector<16x7xf32>
    %c6_662 = arith.constant 6 : index
    %c6_663 = arith.constant 6 : index
    %1409 = memref.load %arg7[%c6_662, %c6_663] : memref<16x8xf32, #tpu.memory_space<smem>>
    %1410 = vector.broadcast %1409 : f32 to vector<16x6xf32>
    %1411 = arith.mulf %505, %1410 : vector<16x6xf32>
    %1412 = arith.addf %1400, %1411 : vector<16x6xf32>
    %c14_664 = arith.constant 14 : index
    %c6_665 = arith.constant 6 : index
    %1413 = memref.load %arg7[%c14_664, %c6_665] : memref<16x8xf32, #tpu.memory_space<smem>>
    %1414 = vector.broadcast %1413 : f32 to vector<16x6xf32>
    %1415 = arith.mulf %513, %1414 : vector<16x6xf32>
    %1416 = arith.addf %1412, %1415 : vector<16x6xf32>
    %c7_666 = arith.constant 7 : index
    %c6_667 = arith.constant 6 : index
    %1417 = memref.load %arg7[%c7_666, %c6_667] : memref<16x8xf32, #tpu.memory_space<smem>>
    %1418 = vector.broadcast %1417 : f32 to vector<16x7xf32>
    %1419 = arith.mulf %216, %1418 : vector<16x7xf32>
    %1420 = arith.addf %1408, %1419 : vector<16x7xf32>
    %c15_668 = arith.constant 15 : index
    %c6_669 = arith.constant 6 : index
    %1421 = memref.load %arg7[%c15_668, %c6_669] : memref<16x8xf32, #tpu.memory_space<smem>>
    %1422 = vector.broadcast %1421 : f32 to vector<16x7xf32>
    %1423 = arith.mulf %226, %1422 : vector<16x7xf32>
    %1424 = arith.addf %1420, %1423 : vector<16x7xf32>
    %c7_670 = arith.constant 7 : index
    %c6_671 = arith.constant 6 : index
    %1425 = memref.load %arg7[%c7_670, %c6_671] : memref<16x8xf32, #tpu.memory_space<smem>>
    %1426 = vector.broadcast %1425 : f32 to vector<16x6xf32>
    %1427 = arith.mulf %506, %1426 : vector<16x6xf32>
    %1428 = arith.addf %1416, %1427 : vector<16x6xf32>
    %c15_672 = arith.constant 15 : index
    %c6_673 = arith.constant 6 : index
    %1429 = memref.load %arg7[%c15_672, %c6_673] : memref<16x8xf32, #tpu.memory_space<smem>>
    %1430 = vector.broadcast %1429 : f32 to vector<16x6xf32>
    %1431 = arith.mulf %514, %1430 : vector<16x6xf32>
    %1432 = arith.addf %1428, %1431 : vector<16x6xf32>
    %c0_674 = arith.constant 0 : index
    %c6_675 = arith.constant 6 : index
    %1433 = memref.load %arg8[%c0_674, %c6_675] : memref<1x8xf32, #tpu.memory_space<smem>>
    %1434 = vector.broadcast %1433 : f32 to vector<16x7xf32>
    %1435 = arith.addf %1424, %1434 : vector<16x7xf32>
    %c0_676 = arith.constant 0 : index
    %c6_677 = arith.constant 6 : index
    %1436 = memref.load %arg8[%c0_676, %c6_677] : memref<1x8xf32, #tpu.memory_space<smem>>
    %1437 = vector.broadcast %1436 : f32 to vector<16x6xf32>
    %1438 = arith.addf %1432, %1437 : vector<16x6xf32>
    %c0_678 = arith.constant 0 : index
    %c7_679 = arith.constant 7 : index
    %1439 = memref.load %arg7[%c0_678, %c7_679] : memref<16x8xf32, #tpu.memory_space<smem>>
    %1440 = vector.broadcast %1439 : f32 to vector<16x7xf32>
    %1441 = arith.mulf %48, %1440 : vector<16x7xf32>
    %c8_680 = arith.constant 8 : index
    %c7_681 = arith.constant 7 : index
    %1442 = memref.load %arg7[%c8_680, %c7_681] : memref<16x8xf32, #tpu.memory_space<smem>>
    %1443 = vector.broadcast %1442 : f32 to vector<16x7xf32>
    %1444 = arith.mulf %58, %1443 : vector<16x7xf32>
    %1445 = arith.addf %1441, %1444 : vector<16x7xf32>
    %c0_682 = arith.constant 0 : index
    %c7_683 = arith.constant 7 : index
    %1446 = memref.load %arg7[%c0_682, %c7_683] : memref<16x8xf32, #tpu.memory_space<smem>>
    %1447 = vector.broadcast %1446 : f32 to vector<16x6xf32>
    %1448 = arith.mulf %499, %1447 : vector<16x6xf32>
    %c8_684 = arith.constant 8 : index
    %c7_685 = arith.constant 7 : index
    %1449 = memref.load %arg7[%c8_684, %c7_685] : memref<16x8xf32, #tpu.memory_space<smem>>
    %1450 = vector.broadcast %1449 : f32 to vector<16x6xf32>
    %1451 = arith.mulf %507, %1450 : vector<16x6xf32>
    %1452 = arith.addf %1448, %1451 : vector<16x6xf32>
    %c1_686 = arith.constant 1 : index
    %c7_687 = arith.constant 7 : index
    %1453 = memref.load %arg7[%c1_686, %c7_687] : memref<16x8xf32, #tpu.memory_space<smem>>
    %1454 = vector.broadcast %1453 : f32 to vector<16x7xf32>
    %1455 = arith.mulf %72, %1454 : vector<16x7xf32>
    %1456 = arith.addf %1445, %1455 : vector<16x7xf32>
    %c9_688 = arith.constant 9 : index
    %c7_689 = arith.constant 7 : index
    %1457 = memref.load %arg7[%c9_688, %c7_689] : memref<16x8xf32, #tpu.memory_space<smem>>
    %1458 = vector.broadcast %1457 : f32 to vector<16x7xf32>
    %1459 = arith.mulf %82, %1458 : vector<16x7xf32>
    %1460 = arith.addf %1456, %1459 : vector<16x7xf32>
    %c1_690 = arith.constant 1 : index
    %c7_691 = arith.constant 7 : index
    %1461 = memref.load %arg7[%c1_690, %c7_691] : memref<16x8xf32, #tpu.memory_space<smem>>
    %1462 = vector.broadcast %1461 : f32 to vector<16x6xf32>
    %1463 = arith.mulf %500, %1462 : vector<16x6xf32>
    %1464 = arith.addf %1452, %1463 : vector<16x6xf32>
    %c9_692 = arith.constant 9 : index
    %c7_693 = arith.constant 7 : index
    %1465 = memref.load %arg7[%c9_692, %c7_693] : memref<16x8xf32, #tpu.memory_space<smem>>
    %1466 = vector.broadcast %1465 : f32 to vector<16x6xf32>
    %1467 = arith.mulf %508, %1466 : vector<16x6xf32>
    %1468 = arith.addf %1464, %1467 : vector<16x6xf32>
    %c2_694 = arith.constant 2 : index
    %c7_695 = arith.constant 7 : index
    %1469 = memref.load %arg7[%c2_694, %c7_695] : memref<16x8xf32, #tpu.memory_space<smem>>
    %1470 = vector.broadcast %1469 : f32 to vector<16x7xf32>
    %1471 = arith.mulf %96, %1470 : vector<16x7xf32>
    %1472 = arith.addf %1460, %1471 : vector<16x7xf32>
    %c10_696 = arith.constant 10 : index
    %c7_697 = arith.constant 7 : index
    %1473 = memref.load %arg7[%c10_696, %c7_697] : memref<16x8xf32, #tpu.memory_space<smem>>
    %1474 = vector.broadcast %1473 : f32 to vector<16x7xf32>
    %1475 = arith.mulf %106, %1474 : vector<16x7xf32>
    %1476 = arith.addf %1472, %1475 : vector<16x7xf32>
    %c2_698 = arith.constant 2 : index
    %c7_699 = arith.constant 7 : index
    %1477 = memref.load %arg7[%c2_698, %c7_699] : memref<16x8xf32, #tpu.memory_space<smem>>
    %1478 = vector.broadcast %1477 : f32 to vector<16x6xf32>
    %1479 = arith.mulf %501, %1478 : vector<16x6xf32>
    %1480 = arith.addf %1468, %1479 : vector<16x6xf32>
    %c10_700 = arith.constant 10 : index
    %c7_701 = arith.constant 7 : index
    %1481 = memref.load %arg7[%c10_700, %c7_701] : memref<16x8xf32, #tpu.memory_space<smem>>
    %1482 = vector.broadcast %1481 : f32 to vector<16x6xf32>
    %1483 = arith.mulf %509, %1482 : vector<16x6xf32>
    %1484 = arith.addf %1480, %1483 : vector<16x6xf32>
    %c3_702 = arith.constant 3 : index
    %c7_703 = arith.constant 7 : index
    %1485 = memref.load %arg7[%c3_702, %c7_703] : memref<16x8xf32, #tpu.memory_space<smem>>
    %1486 = vector.broadcast %1485 : f32 to vector<16x7xf32>
    %1487 = arith.mulf %120, %1486 : vector<16x7xf32>
    %1488 = arith.addf %1476, %1487 : vector<16x7xf32>
    %c11_704 = arith.constant 11 : index
    %c7_705 = arith.constant 7 : index
    %1489 = memref.load %arg7[%c11_704, %c7_705] : memref<16x8xf32, #tpu.memory_space<smem>>
    %1490 = vector.broadcast %1489 : f32 to vector<16x7xf32>
    %1491 = arith.mulf %130, %1490 : vector<16x7xf32>
    %1492 = arith.addf %1488, %1491 : vector<16x7xf32>
    %c3_706 = arith.constant 3 : index
    %c7_707 = arith.constant 7 : index
    %1493 = memref.load %arg7[%c3_706, %c7_707] : memref<16x8xf32, #tpu.memory_space<smem>>
    %1494 = vector.broadcast %1493 : f32 to vector<16x6xf32>
    %1495 = arith.mulf %502, %1494 : vector<16x6xf32>
    %1496 = arith.addf %1484, %1495 : vector<16x6xf32>
    %c11_708 = arith.constant 11 : index
    %c7_709 = arith.constant 7 : index
    %1497 = memref.load %arg7[%c11_708, %c7_709] : memref<16x8xf32, #tpu.memory_space<smem>>
    %1498 = vector.broadcast %1497 : f32 to vector<16x6xf32>
    %1499 = arith.mulf %510, %1498 : vector<16x6xf32>
    %1500 = arith.addf %1496, %1499 : vector<16x6xf32>
    %c4_710 = arith.constant 4 : index
    %c7_711 = arith.constant 7 : index
    %1501 = memref.load %arg7[%c4_710, %c7_711] : memref<16x8xf32, #tpu.memory_space<smem>>
    %1502 = vector.broadcast %1501 : f32 to vector<16x7xf32>
    %1503 = arith.mulf %144, %1502 : vector<16x7xf32>
    %1504 = arith.addf %1492, %1503 : vector<16x7xf32>
    %c12_712 = arith.constant 12 : index
    %c7_713 = arith.constant 7 : index
    %1505 = memref.load %arg7[%c12_712, %c7_713] : memref<16x8xf32, #tpu.memory_space<smem>>
    %1506 = vector.broadcast %1505 : f32 to vector<16x7xf32>
    %1507 = arith.mulf %154, %1506 : vector<16x7xf32>
    %1508 = arith.addf %1504, %1507 : vector<16x7xf32>
    %c4_714 = arith.constant 4 : index
    %c7_715 = arith.constant 7 : index
    %1509 = memref.load %arg7[%c4_714, %c7_715] : memref<16x8xf32, #tpu.memory_space<smem>>
    %1510 = vector.broadcast %1509 : f32 to vector<16x6xf32>
    %1511 = arith.mulf %503, %1510 : vector<16x6xf32>
    %1512 = arith.addf %1500, %1511 : vector<16x6xf32>
    %c12_716 = arith.constant 12 : index
    %c7_717 = arith.constant 7 : index
    %1513 = memref.load %arg7[%c12_716, %c7_717] : memref<16x8xf32, #tpu.memory_space<smem>>
    %1514 = vector.broadcast %1513 : f32 to vector<16x6xf32>
    %1515 = arith.mulf %511, %1514 : vector<16x6xf32>
    %1516 = arith.addf %1512, %1515 : vector<16x6xf32>
    %c5_718 = arith.constant 5 : index
    %c7_719 = arith.constant 7 : index
    %1517 = memref.load %arg7[%c5_718, %c7_719] : memref<16x8xf32, #tpu.memory_space<smem>>
    %1518 = vector.broadcast %1517 : f32 to vector<16x7xf32>
    %1519 = arith.mulf %168, %1518 : vector<16x7xf32>
    %1520 = arith.addf %1508, %1519 : vector<16x7xf32>
    %c13_720 = arith.constant 13 : index
    %c7_721 = arith.constant 7 : index
    %1521 = memref.load %arg7[%c13_720, %c7_721] : memref<16x8xf32, #tpu.memory_space<smem>>
    %1522 = vector.broadcast %1521 : f32 to vector<16x7xf32>
    %1523 = arith.mulf %178, %1522 : vector<16x7xf32>
    %1524 = arith.addf %1520, %1523 : vector<16x7xf32>
    %c5_722 = arith.constant 5 : index
    %c7_723 = arith.constant 7 : index
    %1525 = memref.load %arg7[%c5_722, %c7_723] : memref<16x8xf32, #tpu.memory_space<smem>>
    %1526 = vector.broadcast %1525 : f32 to vector<16x6xf32>
    %1527 = arith.mulf %504, %1526 : vector<16x6xf32>
    %1528 = arith.addf %1516, %1527 : vector<16x6xf32>
    %c13_724 = arith.constant 13 : index
    %c7_725 = arith.constant 7 : index
    %1529 = memref.load %arg7[%c13_724, %c7_725] : memref<16x8xf32, #tpu.memory_space<smem>>
    %1530 = vector.broadcast %1529 : f32 to vector<16x6xf32>
    %1531 = arith.mulf %512, %1530 : vector<16x6xf32>
    %1532 = arith.addf %1528, %1531 : vector<16x6xf32>
    %c6_726 = arith.constant 6 : index
    %c7_727 = arith.constant 7 : index
    %1533 = memref.load %arg7[%c6_726, %c7_727] : memref<16x8xf32, #tpu.memory_space<smem>>
    %1534 = vector.broadcast %1533 : f32 to vector<16x7xf32>
    %1535 = arith.mulf %192, %1534 : vector<16x7xf32>
    %1536 = arith.addf %1524, %1535 : vector<16x7xf32>
    %c14_728 = arith.constant 14 : index
    %c7_729 = arith.constant 7 : index
    %1537 = memref.load %arg7[%c14_728, %c7_729] : memref<16x8xf32, #tpu.memory_space<smem>>
    %1538 = vector.broadcast %1537 : f32 to vector<16x7xf32>
    %1539 = arith.mulf %202, %1538 : vector<16x7xf32>
    %1540 = arith.addf %1536, %1539 : vector<16x7xf32>
    %c6_730 = arith.constant 6 : index
    %c7_731 = arith.constant 7 : index
    %1541 = memref.load %arg7[%c6_730, %c7_731] : memref<16x8xf32, #tpu.memory_space<smem>>
    %1542 = vector.broadcast %1541 : f32 to vector<16x6xf32>
    %1543 = arith.mulf %505, %1542 : vector<16x6xf32>
    %1544 = arith.addf %1532, %1543 : vector<16x6xf32>
    %c14_732 = arith.constant 14 : index
    %c7_733 = arith.constant 7 : index
    %1545 = memref.load %arg7[%c14_732, %c7_733] : memref<16x8xf32, #tpu.memory_space<smem>>
    %1546 = vector.broadcast %1545 : f32 to vector<16x6xf32>
    %1547 = arith.mulf %513, %1546 : vector<16x6xf32>
    %1548 = arith.addf %1544, %1547 : vector<16x6xf32>
    %c7_734 = arith.constant 7 : index
    %c7_735 = arith.constant 7 : index
    %1549 = memref.load %arg7[%c7_734, %c7_735] : memref<16x8xf32, #tpu.memory_space<smem>>
    %1550 = vector.broadcast %1549 : f32 to vector<16x7xf32>
    %1551 = arith.mulf %216, %1550 : vector<16x7xf32>
    %1552 = arith.addf %1540, %1551 : vector<16x7xf32>
    %c15_736 = arith.constant 15 : index
    %c7_737 = arith.constant 7 : index
    %1553 = memref.load %arg7[%c15_736, %c7_737] : memref<16x8xf32, #tpu.memory_space<smem>>
    %1554 = vector.broadcast %1553 : f32 to vector<16x7xf32>
    %1555 = arith.mulf %226, %1554 : vector<16x7xf32>
    %1556 = arith.addf %1552, %1555 : vector<16x7xf32>
    %c7_738 = arith.constant 7 : index
    %c7_739 = arith.constant 7 : index
    %1557 = memref.load %arg7[%c7_738, %c7_739] : memref<16x8xf32, #tpu.memory_space<smem>>
    %1558 = vector.broadcast %1557 : f32 to vector<16x6xf32>
    %1559 = arith.mulf %506, %1558 : vector<16x6xf32>
    %1560 = arith.addf %1548, %1559 : vector<16x6xf32>
    %c15_740 = arith.constant 15 : index
    %c7_741 = arith.constant 7 : index
    %1561 = memref.load %arg7[%c15_740, %c7_741] : memref<16x8xf32, #tpu.memory_space<smem>>
    %1562 = vector.broadcast %1561 : f32 to vector<16x6xf32>
    %1563 = arith.mulf %514, %1562 : vector<16x6xf32>
    %1564 = arith.addf %1560, %1563 : vector<16x6xf32>
    %c0_742 = arith.constant 0 : index
    %c7_743 = arith.constant 7 : index
    %1565 = memref.load %arg8[%c0_742, %c7_743] : memref<1x8xf32, #tpu.memory_space<smem>>
    %1566 = vector.broadcast %1565 : f32 to vector<16x7xf32>
    %1567 = arith.addf %1556, %1566 : vector<16x7xf32>
    %c0_744 = arith.constant 0 : index
    %c7_745 = arith.constant 7 : index
    %1568 = memref.load %arg8[%c0_744, %c7_745] : memref<1x8xf32, #tpu.memory_space<smem>>
    %1569 = vector.broadcast %1568 : f32 to vector<16x6xf32>
    %1570 = arith.addf %1564, %1569 : vector<16x6xf32>
    %cst_746 = arith.constant 0.000000e+00 : f32
    %1571 = vector.broadcast %cst_746 : f32 to vector<16x16xf32>
    %1572 = tpu.concatenate %48, %58, %72, %82, %96, %106, %120, %130, %144, %154, %168, %178, %192, %202, %216, %226 in 1 : vector<16x7xf32>, vector<16x7xf32>, vector<16x7xf32>, vector<16x7xf32>, vector<16x7xf32>, vector<16x7xf32>, vector<16x7xf32>, vector<16x7xf32>, vector<16x7xf32>, vector<16x7xf32>, vector<16x7xf32>, vector<16x7xf32>, vector<16x7xf32>, vector<16x7xf32>, vector<16x7xf32>, vector<16x7xf32> -> vector<16x112xf32>
    %1573 = tpu.concatenate %1572, %1571 in 1 : vector<16x112xf32>, vector<16x16xf32> -> vector<16x128xf32>
    %c0_747 = arith.constant 0 : index
    %c0_748 = arith.constant 0 : index
    %1574 = vector.load %arg9[%c0_747, %c0_748] : memref<16x128xf32, #tpu.memory_space<vmem>>, vector<16x128xf32>
    tpu.vector_store %arg9[%c0_747, %c0_748], %1573 {strides = array<i32>} : memref<16x128xf32, #tpu.memory_space<vmem>>, vector<16x128xf32>,
    %1575 = vector.extract_strided_slice %643 {offsets = [0, 0], sizes = [16, 6], strides = [1, 1]} : vector<16x7xf32> to vector<16x6xf32>
    %1576 = arith.maximumf %1575, %646 : vector<16x6xf32>
    %1577 = vector.extract_strided_slice %643 {offsets = [0, 1], sizes = [16, 6], strides = [1, 1]} : vector<16x7xf32> to vector<16x6xf32>
    %1578 = arith.maximumf %1576, %1577 : vector<16x6xf32>
    %1579 = vector.extract_strided_slice %260 {offsets = [0, 1], sizes = [16, 6], strides = [1, 1]} : vector<16x7xf32> to vector<16x6xf32>
    %1580 = arith.addf %1578, %1579 : vector<16x6xf32>
    %cst_749 = arith.constant 0.000000e+00 : f32
    %1581 = vector.broadcast %cst_749 : f32 to vector<16x6xf32>
    %1582 = arith.maximumf %1580, %1581 : vector<16x6xf32>
    %1583 = vector.extract_strided_slice %775 {offsets = [0, 0], sizes = [16, 6], strides = [1, 1]} : vector<16x7xf32> to vector<16x6xf32>
    %1584 = arith.maximumf %1583, %778 : vector<16x6xf32>
    %1585 = vector.extract_strided_slice %775 {offsets = [0, 1], sizes = [16, 6], strides = [1, 1]} : vector<16x7xf32> to vector<16x6xf32>
    %1586 = arith.maximumf %1584, %1585 : vector<16x6xf32>
    %1587 = vector.extract_strided_slice %294 {offsets = [0, 1], sizes = [16, 6], strides = [1, 1]} : vector<16x7xf32> to vector<16x6xf32>
    %1588 = arith.addf %1586, %1587 : vector<16x6xf32>
    %cst_750 = arith.constant 0.000000e+00 : f32
    %1589 = vector.broadcast %cst_750 : f32 to vector<16x6xf32>
    %1590 = arith.maximumf %1588, %1589 : vector<16x6xf32>
    %1591 = vector.extract_strided_slice %907 {offsets = [0, 0], sizes = [16, 6], strides = [1, 1]} : vector<16x7xf32> to vector<16x6xf32>
    %1592 = arith.maximumf %1591, %910 : vector<16x6xf32>
    %1593 = vector.extract_strided_slice %907 {offsets = [0, 1], sizes = [16, 6], strides = [1, 1]} : vector<16x7xf32> to vector<16x6xf32>
    %1594 = arith.maximumf %1592, %1593 : vector<16x6xf32>
    %1595 = vector.extract_strided_slice %328 {offsets = [0, 1], sizes = [16, 6], strides = [1, 1]} : vector<16x7xf32> to vector<16x6xf32>
    %1596 = arith.addf %1594, %1595 : vector<16x6xf32>
    %cst_751 = arith.constant 0.000000e+00 : f32
    %1597 = vector.broadcast %cst_751 : f32 to vector<16x6xf32>
    %1598 = arith.maximumf %1596, %1597 : vector<16x6xf32>
    %1599 = vector.extract_strided_slice %1039 {offsets = [0, 0], sizes = [16, 6], strides = [1, 1]} : vector<16x7xf32> to vector<16x6xf32>
    %1600 = arith.maximumf %1599, %1042 : vector<16x6xf32>
    %1601 = vector.extract_strided_slice %1039 {offsets = [0, 1], sizes = [16, 6], strides = [1, 1]} : vector<16x7xf32> to vector<16x6xf32>
    %1602 = arith.maximumf %1600, %1601 : vector<16x6xf32>
    %1603 = vector.extract_strided_slice %362 {offsets = [0, 1], sizes = [16, 6], strides = [1, 1]} : vector<16x7xf32> to vector<16x6xf32>
    %1604 = arith.addf %1602, %1603 : vector<16x6xf32>
    %cst_752 = arith.constant 0.000000e+00 : f32
    %1605 = vector.broadcast %cst_752 : f32 to vector<16x6xf32>
    %1606 = arith.maximumf %1604, %1605 : vector<16x6xf32>
    %1607 = vector.extract_strided_slice %1171 {offsets = [0, 0], sizes = [16, 6], strides = [1, 1]} : vector<16x7xf32> to vector<16x6xf32>
    %1608 = arith.maximumf %1607, %1174 : vector<16x6xf32>
    %1609 = vector.extract_strided_slice %1171 {offsets = [0, 1], sizes = [16, 6], strides = [1, 1]} : vector<16x7xf32> to vector<16x6xf32>
    %1610 = arith.maximumf %1608, %1609 : vector<16x6xf32>
    %1611 = vector.extract_strided_slice %396 {offsets = [0, 1], sizes = [16, 6], strides = [1, 1]} : vector<16x7xf32> to vector<16x6xf32>
    %1612 = arith.addf %1610, %1611 : vector<16x6xf32>
    %cst_753 = arith.constant 0.000000e+00 : f32
    %1613 = vector.broadcast %cst_753 : f32 to vector<16x6xf32>
    %1614 = arith.maximumf %1612, %1613 : vector<16x6xf32>
    %1615 = vector.extract_strided_slice %1303 {offsets = [0, 0], sizes = [16, 6], strides = [1, 1]} : vector<16x7xf32> to vector<16x6xf32>
    %1616 = arith.maximumf %1615, %1306 : vector<16x6xf32>
    %1617 = vector.extract_strided_slice %1303 {offsets = [0, 1], sizes = [16, 6], strides = [1, 1]} : vector<16x7xf32> to vector<16x6xf32>
    %1618 = arith.maximumf %1616, %1617 : vector<16x6xf32>
    %1619 = vector.extract_strided_slice %430 {offsets = [0, 1], sizes = [16, 6], strides = [1, 1]} : vector<16x7xf32> to vector<16x6xf32>
    %1620 = arith.addf %1618, %1619 : vector<16x6xf32>
    %cst_754 = arith.constant 0.000000e+00 : f32
    %1621 = vector.broadcast %cst_754 : f32 to vector<16x6xf32>
    %1622 = arith.maximumf %1620, %1621 : vector<16x6xf32>
    %1623 = vector.extract_strided_slice %1435 {offsets = [0, 0], sizes = [16, 6], strides = [1, 1]} : vector<16x7xf32> to vector<16x6xf32>
    %1624 = arith.maximumf %1623, %1438 : vector<16x6xf32>
    %1625 = vector.extract_strided_slice %1435 {offsets = [0, 1], sizes = [16, 6], strides = [1, 1]} : vector<16x7xf32> to vector<16x6xf32>
    %1626 = arith.maximumf %1624, %1625 : vector<16x6xf32>
    %1627 = vector.extract_strided_slice %464 {offsets = [0, 1], sizes = [16, 6], strides = [1, 1]} : vector<16x7xf32> to vector<16x6xf32>
    %1628 = arith.addf %1626, %1627 : vector<16x6xf32>
    %cst_755 = arith.constant 0.000000e+00 : f32
    %1629 = vector.broadcast %cst_755 : f32 to vector<16x6xf32>
    %1630 = arith.maximumf %1628, %1629 : vector<16x6xf32>
    %1631 = vector.extract_strided_slice %1567 {offsets = [0, 0], sizes = [16, 6], strides = [1, 1]} : vector<16x7xf32> to vector<16x6xf32>
    %1632 = arith.maximumf %1631, %1570 : vector<16x6xf32>
    %1633 = vector.extract_strided_slice %1567 {offsets = [0, 1], sizes = [16, 6], strides = [1, 1]} : vector<16x7xf32> to vector<16x6xf32>
    %1634 = arith.maximumf %1632, %1633 : vector<16x6xf32>
    %1635 = vector.extract_strided_slice %498 {offsets = [0, 1], sizes = [16, 6], strides = [1, 1]} : vector<16x7xf32> to vector<16x6xf32>
    %1636 = arith.addf %1634, %1635 : vector<16x6xf32>
    %cst_756 = arith.constant 0.000000e+00 : f32
    %1637 = vector.broadcast %cst_756 : f32 to vector<16x6xf32>
    %1638 = arith.maximumf %1636, %1637 : vector<16x6xf32>
    %cst_757 = arith.constant 0.000000e+00 : f32
    %1639 = vector.broadcast %cst_757 : f32 to vector<16x80xf32>
    %1640 = tpu.concatenate %1582, %1590, %1598, %1606, %1614, %1622, %1630, %1638, %1639 in 1 : vector<16x6xf32>, vector<16x6xf32>, vector<16x6xf32>, vector<16x6xf32>, vector<16x6xf32>, vector<16x6xf32>, vector<16x6xf32>, vector<16x6xf32>, vector<16x80xf32> -> vector<16x128xf32>
    %c0_758 = arith.constant 0 : index
    %c0_759 = arith.constant 0 : index
    %1641 = vector.load %arg10[%c0_758, %c0_759] : memref<16x128xf32, #tpu.memory_space<vmem>>, vector<16x128xf32>
    tpu.vector_store %arg10[%c0_758, %c0_759], %1640 {strides = array<i32>} : memref<16x128xf32, #tpu.memory_space<vmem>>, vector<16x128xf32>,
    return
  }
  func.func @transform_0(%arg0: i32) -> (i32, i32) {
    %c0_i32 = arith.constant 0 : i32
    %c0_i32_0 = arith.constant 0 : i32
    return %arg0, %c0_i32 : i32, i32
  }
  func.func @transform_1(%arg0: i32) -> (i32, i32) {
    %c0_i32 = arith.constant 0 : i32
    %c0_i32_0 = arith.constant 0 : i32
    return %arg0, %c0_i32 : i32, i32
  }
  func.func @transform_2(%arg0: i32) -> (i32, i32) {
    %c0_i32 = arith.constant 0 : i32
    %c0_i32_0 = arith.constant 0 : i32
    %c0_i32_1 = arith.constant 0 : i32
    return %c0_i32, %c0_i32_0 : i32, i32
  }
  func.func @transform_3(%arg0: i32) -> (i32, i32) {
    %c0_i32 = arith.constant 0 : i32
    %c0_i32_0 = arith.constant 0 : i32
    %c0_i32_1 = arith.constant 0 : i32
    return %c0_i32, %c0_i32_0 : i32, i32
  }
  func.func @transform_4(%arg0: i32) -> (i32, i32) {
    %c0_i32 = arith.constant 0 : i32
    %c0_i32_0 = arith.constant 0 : i32
    %c0_i32_1 = arith.constant 0 : i32
    return %c0_i32, %c0_i32_0 : i32, i32
  }
  func.func @transform_5(%arg0: i32) -> (i32, i32) {
    %c0_i32 = arith.constant 0 : i32
    %c0_i32_0 = arith.constant 0 : i32
    %c0_i32_1 = arith.constant 0 : i32
    return %c0_i32, %c0_i32_0 : i32, i32
  }
  func.func @transform_6(%arg0: i32) -> (i32, i32) {
    %c0_i32 = arith.constant 0 : i32
    %c0_i32_0 = arith.constant 0 : i32
    %c0_i32_1 = arith.constant 0 : i32
    return %c0_i32, %c0_i32_0 : i32, i32
  }
  func.func @transform_7(%arg0: i32) -> (i32, i32) {
    %c0_i32 = arith.constant 0 : i32
    %c0_i32_0 = arith.constant 0 : i32
    %c0_i32_1 = arith.constant 0 : i32
    return %c0_i32, %c0_i32_0 : i32, i32
  }
  func.func @transform_8(%arg0: i32) -> (i32, i32) {
    %c0_i32 = arith.constant 0 : i32
    %c0_i32_0 = arith.constant 0 : i32
    return %arg0, %c0_i32 : i32, i32
  }
  func.func @transform_9(%arg0: i32) -> (i32, i32) {
    %c0_i32 = arith.constant 0 : i32
    %c0_i32_0 = arith.constant 0 : i32
    return %arg0, %c0_i32 : i32, i32
  }
}

</mosaic_0001>

<llo_original>
// kernel: tpu_custom_call.1
$region0: #{tpu_custom_call.1}
  #allocation0 [shape = 'u32[]', space=smem, size = 0x4, offset = 0x4, fixed_abs, tag = 'smem constant byte address 0x4 - core index']
  #allocation1 [shape = 'u32[144,128]{1,0:T(1,128)}', space=vmem, size = 0x12000, scoped, tag = 'internal scratch']
  %s0 = inlined_call_operand.vmem [shape: f32[16,8], index: 0, kind: input, shape index: {}]
  %s1 = inlined_call_operand.vmem [shape: f32[16,8], index: 1, kind: input, shape index: {}]
  %s2 = inlined_call_operand.vmem [shape: f32[3,8], index: 2, kind: input, shape index: {}]
  %s3 = inlined_call_operand.vmem [shape: f32[1,8], index: 3, kind: input, shape index: {}]
  %s4 = inlined_call_operand.vmem [shape: f32[8,8], index: 4, kind: input, shape index: {}]
  %s5 = inlined_call_operand.vmem [shape: f32[1,8], index: 5, kind: input, shape index: {}]
  %s6 = inlined_call_operand.vmem [shape: f32[16,8], index: 6, kind: input, shape index: {}]
  %s7 = inlined_call_operand.vmem [shape: f32[1,8], index: 7, kind: input, shape index: {}]
  %s8 = inlined_call_operand.hbm [shape: f32[16,128], index: 8, kind: output, shape index: {0}]
  %s9 = inlined_call_operand.hbm [shape: f32[16,128], index: 9, kind: output, shape index: {1}]
  %10 = xla_tuple %s8, %s9
  %s11 = sld [smem:[#allocation0]]
  $region74: #{tpu_custom_call.1} parent=0
    _
  %s13 = ssub.s32 1, %s11
  %s14 = scalar_select 0, %s13, %s11
  $region1: #{tpu_custom_call.1} parent=0
    #allocation2 [shape = 'u8[2048]{0}', space=smem, size = 0x800, scoped, tag = 'input window, operand 2, single buffered']
    #allocation3 [shape = 's32[1]{0}', space=sflag, size = 0x4, scoped, tag = 'scoped memory for tpu_custom_call.1']
    #allocation4 [shape = 's32[1]{0}', space=sflag, size = 0x4, scoped, tag = 'scoped memory for tpu_custom_call.1']
    #allocation5 [shape = 'u8[512]{0}', space=smem, size = 0x200, scoped, tag = 'input window, operand 3, single buffered']
    #allocation6 [shape = 's32[1]{0}', space=sflag, size = 0x4, scoped, tag = 'scoped memory for tpu_custom_call.1']
    #allocation7 [shape = 'u8[4096]{0}', space=smem, size = 0x1000, scoped, tag = 'input window, operand 4, single buffered']
    #allocation8 [shape = 'u8[512]{0}', space=smem, size = 0x200, scoped, tag = 'input window, operand 5, single buffered']
    #allocation9 [shape = 's32[1]{0}', space=sflag, size = 0x4, scoped, tag = 'scoped memory for tpu_custom_call.1']
    #allocation10 [shape = 'u8[8192]{0}', space=smem, size = 0x2000, scoped, tag = 'input window, operand 6, single buffered']
    #allocation11 [shape = 'u8[512]{0}', space=smem, size = 0x200, scoped, tag = 'input window, operand 7, single buffered']
    #allocation12 [shape = 's32[1]{0}', space=sflag, size = 0x4, scoped, tag = 'scoped memory for tpu_custom_call.1']
    #allocation13 [shape = 'u8[8192]{0}', space=vmem, size = 0x2000, scoped, tag = 'output window, operand 0, single buffered']
    #allocation14 [shape = 'u8[8192]{0}', space=vmem, size = 0x2000, scoped, tag = 'output window, operand 1, single buffered']
    #allocation15 [shape = 's32[1]{0}', space=sflag, size = 0x4, scoped, tag = 'scoped memory for tpu_custom_call.1']
    %15 = vsyncpa [#allocation4], 0
    %16 = vsyncpa [#allocation6], 0
    %17 = vsyncpa [#allocation9], 0
    %18 = vsyncpa [#allocation12], 0
    %19 = vsyncpa [#allocation3], 0
    %20 = vsyncpa [#allocation15], 0
    // Predicated region
    $region2: #{tpu_custom_call.1} parent=1 // pred_check
      _
    $region3: #{tpu_custom_call.1} parent=1 // pred_check_branch
      %22 = sbr.rel (0) target = $region5
    $region4: #{tpu_custom_call.1} parent=1 // pred_region
      _
    $region5: #{tpu_custom_call.1} parent=1 // pred_fallthru
      _
    // Predicated region
    $region6: #{tpu_custom_call.1} parent=1 // pred_check
      _
    $region7: #{tpu_custom_call.1} parent=1 // pred_check_branch
      %24 = sbr.rel (0) target = $region9
    $region8: #{tpu_custom_call.1} parent=1 // pred_region
      _
    $region9: #{tpu_custom_call.1} parent=1 // pred_fallthru
      _
    // Predicated region
    $region10: #{tpu_custom_call.1} parent=1 // pred_check
      _
    $region11: #{tpu_custom_call.1} parent=1 // pred_check_branch
      %26 = sbr.rel (0) target = $region13
    $region12: #{tpu_custom_call.1} parent=1 // pred_region
      %s28 = ssub.s32 64, 64
      %29 = vsyncadd [#allocation4], %s28
      %s31 = sshll.u32 %s2, 4
      %s32 = int_to_ptr.vmem [resolvable:$true] %s31
      %34 = dma.vmem_to_smem %s32, 64, [#allocation2], [#allocation4]
    $region13: #{tpu_custom_call.1} parent=1 // pred_fallthru
      _
    // Predicated region
    $region14: #{tpu_custom_call.1} parent=1 // pred_check
      _
    $region15: #{tpu_custom_call.1} parent=1 // pred_check_branch
      %36 = sbr.rel (0) target = $region17
    $region16: #{tpu_custom_call.1} parent=1 // pred_region
      %s38 = ssub.s32 16, 16
      %39 = vsyncadd [#allocation6], %s38
      %s41 = sshll.u32 %s3, 4
      %s42 = int_to_ptr.vmem [resolvable:$true] %s41
      %44 = dma.vmem_to_smem %s42, 16, [#allocation5], [#allocation6]
    $region17: #{tpu_custom_call.1} parent=1 // pred_fallthru
      _
    // Predicated region
    $region18: #{tpu_custom_call.1} parent=1 // pred_check
      _
    $region19: #{tpu_custom_call.1} parent=1 // pred_check_branch
      %46 = sbr.rel (0) target = $region21
    $region20: #{tpu_custom_call.1} parent=1 // pred_region
      %s48 = ssub.s32 128, 128
      %49 = vsyncadd [#allocation6], %s48
      %s51 = sshll.u32 %s4, 4
      %s52 = int_to_ptr.vmem [resolvable:$true] %s51
      %54 = dma.vmem_to_smem %s52, 128, [#allocation7], [#allocation6]
    $region21: #{tpu_custom_call.1} parent=1 // pred_fallthru
      _
    // Predicated region
    $region22: #{tpu_custom_call.1} parent=1 // pred_check
      _
    $region23: #{tpu_custom_call.1} parent=1 // pred_check_branch
      %56 = sbr.rel (0) target = $region25
    $region24: #{tpu_custom_call.1} parent=1 // pred_region
      %s58 = ssub.s32 16, 16
      %59 = vsyncadd [#allocation9], %s58
      %s61 = sshll.u32 %s5, 4
      %s62 = int_to_ptr.vmem [resolvable:$true] %s61
      %64 = dma.vmem_to_smem %s62, 16, [#allocation8], [#allocation9]
    $region25: #{tpu_custom_call.1} parent=1 // pred_fallthru
      _
    // Predicated region
    $region26: #{tpu_custom_call.1} parent=1 // pred_check
      _
    $region27: #{tpu_custom_call.1} parent=1 // pred_check_branch
      %66 = sbr.rel (0) target = $region29
    $region28: #{tpu_custom_call.1} parent=1 // pred_region
      %s68 = ssub.s32 256, 256
      %69 = vsyncadd [#allocation9], %s68
      %s70 = sshll.u32 %s6, 4
      %s71 = int_to_ptr.vmem [resolvable:$true] %s70
      %76 = dma.vmem_to_smem %s71, 256, [#allocation10], [#allocation9], 128, 128, 8
    $region29: #{tpu_custom_call.1} parent=1 // pred_fallthru
      _
    // Predicated region
    $region30: #{tpu_custom_call.1} parent=1 // pred_check
      _
    $region31: #{tpu_custom_call.1} parent=1 // pred_check_branch
      %78 = sbr.rel (0) target = $region33
    $region32: #{tpu_custom_call.1} parent=1 // pred_region
      %s80 = ssub.s32 16, 16
      %81 = vsyncadd [#allocation12], %s80
      %s83 = sshll.u32 %s7, 4
      %s84 = int_to_ptr.vmem [resolvable:$true] %s83
      %86 = dma.vmem_to_smem %s84, 16, [#allocation11], [#allocation12]
    $region33: #{tpu_custom_call.1} parent=1 // pred_fallthru
      _
    // Predicated region
    $region34: #{tpu_custom_call.1} parent=1 // pred_check
      _
    $region35: #{tpu_custom_call.1} parent=1 // pred_check_branch
      %88 = sbr.rel (0) target = $region37
    $region36: #{tpu_custom_call.1} parent=1 // pred_region
      %89 = dma.done [#allocation4], 64
    $region37: #{tpu_custom_call.1} parent=1 // pred_fallthru
      _
    // Predicated region
    $region38: #{tpu_custom_call.1} parent=1 // pred_check
      _
    $region39: #{tpu_custom_call.1} parent=1 // pred_check_branch
      %91 = sbr.rel (0) target = $region41
    $region40: #{tpu_custom_call.1} parent=1 // pred_region
      %92 = dma.done [#allocation6], 16
    $region41: #{tpu_custom_call.1} parent=1 // pred_fallthru
      _
    // Predicated region
    $region42: #{tpu_custom_call.1} parent=1 // pred_check
      _
    $region43: #{tpu_custom_call.1} parent=1 // pred_check_branch
      %94 = sbr.rel (0) target = $region45
    $region44: #{tpu_custom_call.1} parent=1 // pred_region
      %95 = dma.done [#allocation6], 128
    $region45: #{tpu_custom_call.1} parent=1 // pred_fallthru
      _
    // Predicated region
    $region46: #{tpu_custom_call.1} parent=1 // pred_check
      _
    $region47: #{tpu_custom_call.1} parent=1 // pred_check_branch
      %97 = sbr.rel (0) target = $region49
    $region48: #{tpu_custom_call.1} parent=1 // pred_region
      %98 = dma.done [#allocation9], 16
    $region49: #{tpu_custom_call.1} parent=1 // pred_fallthru
      _
    // Predicated region
    $region50: #{tpu_custom_call.1} parent=1 // pred_check
      _
    $region51: #{tpu_custom_call.1} parent=1 // pred_check_branch
      %100 = sbr.rel (0) target = $region53
    $region52: #{tpu_custom_call.1} parent=1 // pred_region
      %101 = dma.done [#allocation9], 256
    $region53: #{tpu_custom_call.1} parent=1 // pred_fallthru
      _
    // Predicated region
    $region54: #{tpu_custom_call.1} parent=1 // pred_check
      _
    $region55: #{tpu_custom_call.1} parent=1 // pred_check_branch
      %103 = sbr.rel (0) target = $region57
    $region56: #{tpu_custom_call.1} parent=1 // pred_region
      %104 = dma.done [#allocation12], 16
    $region57: #{tpu_custom_call.1} parent=1 // pred_fallthru
      _
    %105 = sfence
    %v106 = vld [vmem:[%s0] sm:$0xff]
    %v107 = vld [vmem:[%s0 + $0x8] sm:$0xff]
    %v108 = vld [vmem:[%s1] sm:$0xff]
    %v109 = vld [vmem:[%s1 + $0x8] sm:$0xff]
    %vm110 = vcmask 64512
    %v111 = vsel %vm110, %v106, 0.0
    %112 = vadd.xlane.f32.xlu0 %v111
    %v113 = vpop.xlane.xlu0 %112
    %v114 = vsel %vm110, %v107, 0.0
    %115 = vadd.xlane.f32.xlu0 %v114
    %v116 = vpop.xlane.xlu0 %115
    %v117 = vsel %vm110, %v108, 0.0
    %118 = vadd.xlane.f32.xlu0 %v117
    %v119 = vpop.xlane.xlu0 %118
    %v120 = vsel %vm110, %v109, 0.0
    %121 = vadd.xlane.f32.xlu0 %v120
    %v122 = vpop.xlane.xlu0 %121
    %v123 = vadd.f32 %v113, %v119
    %v124 = vadd.f32 %v116, %v122
    %v125 = vmul.f32 %v123, 0.0625
    %v126 = vmul.f32 %v124, 0.0625
    %v127 = vsub.f32 %v106, %v125
    %v128 = vsub.f32 %v107, %v126
    %v129 = vsub.f32 %v108, %v125
    %v130 = vsub.f32 %v109, %v126
    %v131 = vmul.f32 %v127, %v127
    %v132 = vmul.f32 %v128, %v128
    %v133 = vsel %vm110, %v131, 0.0
    %134 = vadd.xlane.f32.xlu0 %v133
    %v135 = vpop.xlane.xlu0 %134
    %v136 = vsel %vm110, %v132, 0.0
    %137 = vadd.xlane.f32.xlu0 %v136
    %v138 = vpop.xlane.xlu0 %137
    %v139 = vmul.f32 %v129, %v129
    %v140 = vmul.f32 %v130, %v130
    %v141 = vsel %vm110, %v139, 0.0
    %142 = vadd.xlane.f32.xlu0 %v141
    %v143 = vpop.xlane.xlu0 %142
    %v144 = vsel %vm110, %v140, 0.0
    %145 = vadd.xlane.f32.xlu0 %v144
    %v146 = vpop.xlane.xlu0 %145
    %v147 = vadd.f32 %v135, %v143
    %v148 = vadd.f32 %v138, %v146
    %v149 = vmul.f32 %v147, 0.0625
    %v150 = vmul.f32 %v148, 0.0625
    %v151 = vadd.f32 %v149, 1e-05
    %v152 = vadd.f32 %v150, 1e-05
    %v153 = vrsqrt.pop %v151
    %v154 = vrsqrt.pop %v152
    %v155 = vmul.f32 %v127, %v153
    %v156 = vmul.f32 %v128, %v154
    %v157 = vmul.f32 %v129, %v153
    %v158 = vmul.f32 %v130, %v154
    %s159 = sld [smem:[#allocation2]]
    %s160 = sld [smem:[#allocation2 + $0x80]]
    %s161 = sld [smem:[#allocation2 + $0x100]]
    %s162 = sld [smem:[#allocation5]]
    %v163 = vstv %s159
    %v164 = vmul.f32 %v155, %v163
    %v165 = vmul.f32 %v156, %v163
    %v166 = vstv %s160
    %v167 = vmul.f32 %v157, %v166
    %v168 = vmul.f32 %v158, %v166
    %v169 = vadd.f32 %v164, %v167
    %v170 = vadd.f32 %v165, %v168
    %v171 = vstv %s161
    %v172 = vmul.f32 %v155, %v171
    %v173 = vmul.f32 %v156, %v171
    %176 = vrot.lane.b32.xlu0 %v172, 127
    %v177 = vpop.permute.xlu0 %176
    %178 = vrot.lane.b32.xlu0 %v173, 127
    %v179 = vpop.permute.xlu0 %178
    %v182 = vadd.f32 %v169, %v177
    %v183 = vadd.f32 %v170, %v179
    %v184 = vstv %s162
    %v185 = vadd.f32 %v182, %v184
    %v186 = vadd.f32 %v183, %v184
    %v187 = vmul.f32 %v157, %v163
    %v188 = vmul.f32 %v158, %v163
    %v189 = vmul.f32 %v155, %v166
    %v190 = vmul.f32 %v156, %v166
    %193 = vrot.lane.b32.xlu0 %v189, 127
    %v194 = vpop.permute.xlu0 %193
    %195 = vrot.lane.b32.xlu0 %v190, 127
    %v196 = vpop.permute.xlu0 %195
    %v199 = vadd.f32 %v187, %v194
    %v200 = vadd.f32 %v188, %v196
    %v201 = vmul.f32 %v157, %v171
    %v202 = vmul.f32 %v158, %v171
    %205 = vrot.lane.b32.xlu0 %v201, 127
    %v206 = vpop.permute.xlu0 %205
    %207 = vrot.lane.b32.xlu0 %v202, 127
    %v208 = vpop.permute.xlu0 %207
    %v211 = vadd.f32 %v199, %v206
    %v212 = vadd.f32 %v200, %v208
    %v213 = vadd.f32 %v211, %v184
    %v214 = vadd.f32 %v212, %v184
    %s215 = sld [smem:[#allocation2 + $0x1]]
    %s216 = sld [smem:[#allocation2 + $0x81]]
    %s217 = sld [smem:[#allocation2 + $0x101]]
    %s218 = sld [smem:[#allocation5 + $0x1]]
    %v219 = vstv %s215
    %v220 = vmul.f32 %v155, %v219
    %v221 = vmul.f32 %v156, %v219
    %v222 = vstv %s216
    %v223 = vmul.f32 %v157, %v222
    %v224 = vmul.f32 %v158, %v222
    %v225 = vadd.f32 %v220, %v223
    %v226 = vadd.f32 %v221, %v224
    %v227 = vstv %s217
    %v228 = vmul.f32 %v155, %v227
    %v229 = vmul.f32 %v156, %v227
    %232 = vrot.lane.b32.xlu0 %v228, 127
    %v233 = vpop.permute.xlu0 %232
    %234 = vrot.lane.b32.xlu0 %v229, 127
    %v235 = vpop.permute.xlu0 %234
    %v238 = vadd.f32 %v225, %v233
    %v239 = vadd.f32 %v226, %v235
    %v240 = vstv %s218
    %v241 = vadd.f32 %v238, %v240
    %v242 = vadd.f32 %v239, %v240
    %v243 = vmul.f32 %v157, %v219
    %v244 = vmul.f32 %v158, %v219
    %v245 = vmul.f32 %v155, %v222
    %v246 = vmul.f32 %v156, %v222
    %249 = vrot.lane.b32.xlu0 %v245, 127
    %v250 = vpop.permute.xlu0 %249
    %251 = vrot.lane.b32.xlu0 %v246, 127
    %v252 = vpop.permute.xlu0 %251
    %v255 = vadd.f32 %v243, %v250
    %v256 = vadd.f32 %v244, %v252
    %v257 = vmul.f32 %v157, %v227
    %v258 = vmul.f32 %v158, %v227
    %261 = vrot.lane.b32.xlu0 %v257, 127
    %v262 = vpop.permute.xlu0 %261
    %263 = vrot.lane.b32.xlu0 %v258, 127
    %v264 = vpop.permute.xlu0 %263
    %v267 = vadd.f32 %v255, %v262
    %v268 = vadd.f32 %v256, %v264
    %v269 = vadd.f32 %v267, %v240
    %v270 = vadd.f32 %v268, %v240
    %s271 = sld [smem:[#allocation2 + $0x2]]
    %s272 = sld [smem:[#allocation2 + $0x82]]
    %s273 = sld [smem:[#allocation2 + $0x102]]
    %s274 = sld [smem:[#allocation5 + $0x2]]
    %v275 = vstv %s271
    %v276 = vmul.f32 %v155, %v275
    %v277 = vmul.f32 %v156, %v275
    %v278 = vstv %s272
    %v279 = vmul.f32 %v157, %v278
    %v280 = vmul.f32 %v158, %v278
    %v281 = vadd.f32 %v276, %v279
    %v282 = vadd.f32 %v277, %v280
    %v283 = vstv %s273
    %v284 = vmul.f32 %v155, %v283
    %v285 = vmul.f32 %v156, %v283
    %288 = vrot.lane.b32.xlu0 %v284, 127
    %v289 = vpop.permute.xlu0 %288
    %290 = vrot.lane.b32.xlu0 %v285, 127
    %v291 = vpop.permute.xlu0 %290
    %v294 = vadd.f32 %v281, %v289
    %v295 = vadd.f32 %v282, %v291
    %v296 = vstv %s274
    %v297 = vadd.f32 %v294, %v296
    %v298 = vadd.f32 %v295, %v296
    %v299 = vmul.f32 %v157, %v275
    %v300 = vmul.f32 %v158, %v275
    %v301 = vmul.f32 %v155, %v278
    %v302 = vmul.f32 %v156, %v278
    %305 = vrot.lane.b32.xlu0 %v301, 127
    %v306 = vpop.permute.xlu0 %305
    %307 = vrot.lane.b32.xlu0 %v302, 127
    %v308 = vpop.permute.xlu0 %307
    %v311 = vadd.f32 %v299, %v306
    %v312 = vadd.f32 %v300, %v308
    %v313 = vmul.f32 %v157, %v283
    %v314 = vmul.f32 %v158, %v283
    %317 = vrot.lane.b32.xlu0 %v313, 127
    %v318 = vpop.permute.xlu0 %317
    %319 = vrot.lane.b32.xlu0 %v314, 127
    %v320 = vpop.permute.xlu0 %319
    %v323 = vadd.f32 %v311, %v318
    %v324 = vadd.f32 %v312, %v320
    %v325 = vadd.f32 %v323, %v296
    %v326 = vadd.f32 %v324, %v296
    %s327 = sld [smem:[#allocation2 + $0x3]]
    %s328 = sld [smem:[#allocation2 + $0x83]]
    %s329 = sld [smem:[#allocation2 + $0x103]]
    %s330 = sld [smem:[#allocation5 + $0x3]]
    %v331 = vstv %s327
    %v332 = vmul.f32 %v155, %v331
    %v333 = vmul.f32 %v156, %v331
    %v334 = vstv %s328
    %v335 = vmul.f32 %v157, %v334
    %v336 = vmul.f32 %v158, %v334
    %v337 = vadd.f32 %v332, %v335
    %v338 = vadd.f32 %v333, %v336
    %v339 = vstv %s329
    %v340 = vmul.f32 %v155, %v339
    %v341 = vmul.f32 %v156, %v339
    %344 = vrot.lane.b32.xlu0 %v340, 127
    %v345 = vpop.permute.xlu0 %344
    %346 = vrot.lane.b32.xlu0 %v341, 127
    %v347 = vpop.permute.xlu0 %346
    %v350 = vadd.f32 %v337, %v345
    %v351 = vadd.f32 %v338, %v347
    %v352 = vstv %s330
    %v353 = vadd.f32 %v350, %v352
    %v354 = vadd.f32 %v351, %v352
    %v355 = vmul.f32 %v157, %v331
    %v356 = vmul.f32 %v158, %v331
    %v357 = vmul.f32 %v155, %v334
    %v358 = vmul.f32 %v156, %v334
    %361 = vrot.lane.b32.xlu0 %v357, 127
    %v362 = vpop.permute.xlu0 %361
    %363 = vrot.lane.b32.xlu0 %v358, 127
    %v364 = vpop.permute.xlu0 %363
    %v367 = vadd.f32 %v355, %v362
    %v368 = vadd.f32 %v356, %v364
    %v369 = vmul.f32 %v157, %v339
    %v370 = vmul.f32 %v158, %v339
    %373 = vrot.lane.b32.xlu0 %v369, 127
    %v374 = vpop.permute.xlu0 %373
    %375 = vrot.lane.b32.xlu0 %v370, 127
    %v376 = vpop.permute.xlu0 %375
    %v379 = vadd.f32 %v367, %v374
    %v380 = vadd.f32 %v368, %v376
    %v381 = vadd.f32 %v379, %v352
    %v382 = vadd.f32 %v380, %v352
    %s383 = sld [smem:[#allocation2 + $0x4]]
    %s384 = sld [smem:[#allocation2 + $0x84]]
    %s385 = sld [smem:[#allocation2 + $0x104]]
    %s386 = sld [smem:[#allocation5 + $0x4]]
    %v387 = vstv %s383
    %v388 = vmul.f32 %v155, %v387
    %v389 = vmul.f32 %v156, %v387
    %v390 = vstv %s384
    %v391 = vmul.f32 %v157, %v390
    %v392 = vmul.f32 %v158, %v390
    %v393 = vadd.f32 %v388, %v391
    %v394 = vadd.f32 %v389, %v392
    %v395 = vstv %s385
    %v396 = vmul.f32 %v155, %v395
    %v397 = vmul.f32 %v156, %v395
    %400 = vrot.lane.b32.xlu0 %v396, 127
    %v401 = vpop.permute.xlu0 %400
    %402 = vrot.lane.b32.xlu0 %v397, 127
    %v403 = vpop.permute.xlu0 %402
    %v406 = vadd.f32 %v393, %v401
    %v407 = vadd.f32 %v394, %v403
    %v408 = vstv %s386
    %v409 = vadd.f32 %v406, %v408
    %v410 = vadd.f32 %v407, %v408
    %v411 = vmul.f32 %v157, %v387
    %v412 = vmul.f32 %v158, %v387
    %v413 = vmul.f32 %v155, %v390
    %v414 = vmul.f32 %v156, %v390
    %417 = vrot.lane.b32.xlu0 %v413, 127
    %v418 = vpop.permute.xlu0 %417
    %419 = vrot.lane.b32.xlu0 %v414, 127
    %v420 = vpop.permute.xlu0 %419
    %v423 = vadd.f32 %v411, %v418
    %v424 = vadd.f32 %v412, %v420
    %v425 = vmul.f32 %v157, %v395
    %v426 = vmul.f32 %v158, %v395
    %429 = vrot.lane.b32.xlu0 %v425, 127
    %v430 = vpop.permute.xlu0 %429
    %431 = vrot.lane.b32.xlu0 %v426, 127
    %v432 = vpop.permute.xlu0 %431
    %v435 = vadd.f32 %v423, %v430
    %v436 = vadd.f32 %v424, %v432
    %v437 = vadd.f32 %v435, %v408
    %v438 = vadd.f32 %v436, %v408
    %s439 = sld [smem:[#allocation2 + $0x5]]
    %s440 = sld [smem:[#allocation2 + $0x85]]
    %s441 = sld [smem:[#allocation2 + $0x105]]
    %s442 = sld [smem:[#allocation5 + $0x5]]
    %v443 = vstv %s439
    %v444 = vmul.f32 %v155, %v443
    %v445 = vmul.f32 %v156, %v443
    %v446 = vstv %s440
    %v447 = vmul.f32 %v157, %v446
    %v448 = vmul.f32 %v158, %v446
    %v449 = vadd.f32 %v444, %v447
    %v450 = vadd.f32 %v445, %v448
    %v451 = vstv %s441
    %v452 = vmul.f32 %v155, %v451
    %v453 = vmul.f32 %v156, %v451
    %456 = vrot.lane.b32.xlu0 %v452, 127
    %v457 = vpop.permute.xlu0 %456
    %458 = vrot.lane.b32.xlu0 %v453, 127
    %v459 = vpop.permute.xlu0 %458
    %v462 = vadd.f32 %v449, %v457
    %v463 = vadd.f32 %v450, %v459
    %v464 = vstv %s442
    %v465 = vadd.f32 %v462, %v464
    %v466 = vadd.f32 %v463, %v464
    %v467 = vmul.f32 %v157, %v443
    %v468 = vmul.f32 %v158, %v443
    %v469 = vmul.f32 %v155, %v446
    %v470 = vmul.f32 %v156, %v446
    %473 = vrot.lane.b32.xlu0 %v469, 127
    %v474 = vpop.permute.xlu0 %473
    %475 = vrot.lane.b32.xlu0 %v470, 127
    %v476 = vpop.permute.xlu0 %475
    %v479 = vadd.f32 %v467, %v474
    %v480 = vadd.f32 %v468, %v476
    %v481 = vmul.f32 %v157, %v451
    %v482 = vmul.f32 %v158, %v451
    %485 = vrot.lane.b32.xlu0 %v481, 127
    %v486 = vpop.permute.xlu0 %485
    %487 = vrot.lane.b32.xlu0 %v482, 127
    %v488 = vpop.permute.xlu0 %487
    %v491 = vadd.f32 %v479, %v486
    %v492 = vadd.f32 %v480, %v488
    %v493 = vadd.f32 %v491, %v464
    %v494 = vadd.f32 %v492, %v464
    %s495 = sld [smem:[#allocation2 + $0x6]]
    %s496 = sld [smem:[#allocation2 + $0x86]]
    %s497 = sld [smem:[#allocation2 + $0x106]]
    %s498 = sld [smem:[#allocation5 + $0x6]]
    %v499 = vstv %s495
    %v500 = vmul.f32 %v155, %v499
    %v501 = vmul.f32 %v156, %v499
    %v502 = vstv %s496
    %v503 = vmul.f32 %v157, %v502
    %v504 = vmul.f32 %v158, %v502
    %v505 = vadd.f32 %v500, %v503
    %v506 = vadd.f32 %v501, %v504
    %v507 = vstv %s497
    %v508 = vmul.f32 %v155, %v507
    %v509 = vmul.f32 %v156, %v507
    %512 = vrot.lane.b32.xlu0 %v508, 127
    %v513 = vpop.permute.xlu0 %512
    %514 = vrot.lane.b32.xlu0 %v509, 127
    %v515 = vpop.permute.xlu0 %514
    %v518 = vadd.f32 %v505, %v513
    %v519 = vadd.f32 %v506, %v515
    %v520 = vstv %s498
    %v521 = vadd.f32 %v518, %v520
    %v522 = vadd.f32 %v519, %v520
    %v523 = vmul.f32 %v157, %v499
    %v524 = vmul.f32 %v158, %v499
    %v525 = vmul.f32 %v155, %v502
    %v526 = vmul.f32 %v156, %v502
    %529 = vrot.lane.b32.xlu0 %v525, 127
    %v530 = vpop.permute.xlu0 %529
    %531 = vrot.lane.b32.xlu0 %v526, 127
    %v532 = vpop.permute.xlu0 %531
    %v535 = vadd.f32 %v523, %v530
    %v536 = vadd.f32 %v524, %v532
    %v537 = vmul.f32 %v157, %v507
    %v538 = vmul.f32 %v158, %v507
    %541 = vrot.lane.b32.xlu0 %v537, 127
    %v542 = vpop.permute.xlu0 %541
    %543 = vrot.lane.b32.xlu0 %v538, 127
    %v544 = vpop.permute.xlu0 %543
    %v547 = vadd.f32 %v535, %v542
    %v548 = vadd.f32 %v536, %v544
    %v549 = vadd.f32 %v547, %v520
    %v550 = vadd.f32 %v548, %v520
    %s551 = sld [smem:[#allocation2 + $0x7]]
    %s552 = sld [smem:[#allocation2 + $0x87]]
    %s553 = sld [smem:[#allocation2 + $0x107]]
    %s554 = sld [smem:[#allocation5 + $0x7]]
    %v555 = vstv %s551
    %v556 = vmul.f32 %v155, %v555
    %v557 = vmul.f32 %v156, %v555
    %v558 = vstv %s552
    %v559 = vmul.f32 %v157, %v558
    %v560 = vmul.f32 %v158, %v558
    %v561 = vadd.f32 %v556, %v559
    %v562 = vadd.f32 %v557, %v560
    %v563 = vstv %s553
    %v564 = vmul.f32 %v155, %v563
    %v565 = vmul.f32 %v156, %v563
    %568 = vrot.lane.b32.xlu0 %v564, 127
    %v569 = vpop.permute.xlu0 %568
    %570 = vrot.lane.b32.xlu0 %v565, 127
    %v571 = vpop.permute.xlu0 %570
    %v574 = vadd.f32 %v561, %v569
    %v575 = vadd.f32 %v562, %v571
    %v576 = vstv %s554
    %v577 = vadd.f32 %v574, %v576
    %v578 = vadd.f32 %v575, %v576
    %v579 = vmul.f32 %v157, %v555
    %v580 = vmul.f32 %v158, %v555
    %v581 = vmul.f32 %v155, %v558
    %v582 = vmul.f32 %v156, %v558
    %585 = vrot.lane.b32.xlu0 %v581, 127
    %v586 = vpop.permute.xlu0 %585
    %587 = vrot.lane.b32.xlu0 %v582, 127
    %v588 = vpop.permute.xlu0 %587
    %v591 = vadd.f32 %v579, %v586
    %v592 = vadd.f32 %v580, %v588
    %v593 = vmul.f32 %v157, %v563
    %v594 = vmul.f32 %v158, %v563
    %597 = vrot.lane.b32.xlu0 %v593, 127
    %v598 = vpop.permute.xlu0 %597
    %599 = vrot.lane.b32.xlu0 %v594, 127
    %v600 = vpop.permute.xlu0 %599
    %v603 = vadd.f32 %v591, %v598
    %v604 = vadd.f32 %v592, %v600
    %v605 = vadd.f32 %v603, %v576
    %v606 = vadd.f32 %v604, %v576
    %s607 = sld [smem:[#allocation7]]
    %v608 = vstv %s607
    %v609 = vmul.f32 %v185, %v608
    %v610 = vmul.f32 %v186, %v608
    %s611 = sld [smem:[#allocation7 + $0x80]]
    %v612 = vstv %s611
    %v613 = vmul.f32 %v241, %v612
    %v614 = vmul.f32 %v242, %v612
    %v615 = vadd.f32 %v609, %v613
    %v616 = vadd.f32 %v610, %v614
    %s617 = sld [smem:[#allocation7 + $0x100]]
    %v618 = vstv %s617
    %v619 = vmul.f32 %v297, %v618
    %v620 = vmul.f32 %v298, %v618
    %v621 = vadd.f32 %v615, %v619
    %v622 = vadd.f32 %v616, %v620
    %s623 = sld [smem:[#allocation7 + $0x180]]
    %v624 = vstv %s623
    %v625 = vmul.f32 %v353, %v624
    %v626 = vmul.f32 %v354, %v624
    %v627 = vadd.f32 %v621, %v625
    %v628 = vadd.f32 %v622, %v626
    %s629 = sld [smem:[#allocation7 + $0x200]]
    %v630 = vstv %s629
    %v631 = vmul.f32 %v409, %v630
    %v632 = vmul.f32 %v410, %v630
    %v633 = vadd.f32 %v627, %v631
    %v634 = vadd.f32 %v628, %v632
    %s635 = sld [smem:[#allocation7 + $0x280]]
    %v636 = vstv %s635
    %v637 = vmul.f32 %v465, %v636
    %v638 = vmul.f32 %v466, %v636
    %v639 = vadd.f32 %v633, %v637
    %v640 = vadd.f32 %v634, %v638
    %s641 = sld [smem:[#allocation7 + $0x300]]
    %v642 = vstv %s641
    %v643 = vmul.f32 %v521, %v642
    %v644 = vmul.f32 %v522, %v642
    %v645 = vadd.f32 %v639, %v643
    %v646 = vadd.f32 %v640, %v644
    %s647 = sld [smem:[#allocation7 + $0x380]]
    %v648 = vstv %s647
    %v649 = vmul.f32 %v577, %v648
    %v650 = vmul.f32 %v578, %v648
    %v651 = vadd.f32 %v645, %v649
    %v652 = vadd.f32 %v646, %v650
    %s653 = sld [smem:[#allocation8]]
    %v654 = vstv %s653
    %v655 = vadd.f32 %v651, %v654
    %v656 = vadd.f32 %v652, %v654
    %s657 = sld [smem:[#allocation7 + $0x1]]
    %v658 = vstv %s657
    %v659 = vmul.f32 %v185, %v658
    %v660 = vmul.f32 %v186, %v658
    %s661 = sld [smem:[#allocation7 + $0x81]]
    %v662 = vstv %s661
    %v663 = vmul.f32 %v241, %v662
    %v664 = vmul.f32 %v242, %v662
    %v665 = vadd.f32 %v659, %v663
    %v666 = vadd.f32 %v660, %v664
    %s667 = sld [smem:[#allocation7 + $0x101]]
    %v668 = vstv %s667
    %v669 = vmul.f32 %v297, %v668
    %v670 = vmul.f32 %v298, %v668
    %v671 = vadd.f32 %v665, %v669
    %v672 = vadd.f32 %v666, %v670
    %s673 = sld [smem:[#allocation7 + $0x181]]
    %v674 = vstv %s673
    %v675 = vmul.f32 %v353, %v674
    %v676 = vmul.f32 %v354, %v674
    %v677 = vadd.f32 %v671, %v675
    %v678 = vadd.f32 %v672, %v676
    %s679 = sld [smem:[#allocation7 + $0x201]]
    %v680 = vstv %s679
    %v681 = vmul.f32 %v409, %v680
    %v682 = vmul.f32 %v410, %v680
    %v683 = vadd.f32 %v677, %v681
    %v684 = vadd.f32 %v678, %v682
    %s685 = sld [smem:[#allocation7 + $0x281]]
    %v686 = vstv %s685
    %v687 = vmul.f32 %v465, %v686
    %v688 = vmul.f32 %v466, %v686
    %v689 = vadd.f32 %v683, %v687
    %v690 = vadd.f32 %v684, %v688
    %s691 = sld [smem:[#allocation7 + $0x301]]
    %v692 = vstv %s691
    %v693 = vmul.f32 %v521, %v692
    %v694 = vmul.f32 %v522, %v692
    %v695 = vadd.f32 %v689, %v693
    %v696 = vadd.f32 %v690, %v694
    %s697 = sld [smem:[#allocation7 + $0x381]]
    %v698 = vstv %s697
    %v699 = vmul.f32 %v577, %v698
    %v700 = vmul.f32 %v578, %v698
    %v701 = vadd.f32 %v695, %v699
    %v702 = vadd.f32 %v696, %v700
    %s703 = sld [smem:[#allocation8 + $0x1]]
    %v704 = vstv %s703
    %v705 = vadd.f32 %v701, %v704
    %v706 = vadd.f32 %v702, %v704
    %s707 = sld [smem:[#allocation7 + $0x2]]
    %v708 = vstv %s707
    %v709 = vmul.f32 %v185, %v708
    %v710 = vmul.f32 %v186, %v708
    %s711 = sld [smem:[#allocation7 + $0x82]]
    %v712 = vstv %s711
    %v713 = vmul.f32 %v241, %v712
    %v714 = vmul.f32 %v242, %v712
    %v715 = vadd.f32 %v709, %v713
    %v716 = vadd.f32 %v710, %v714
    %s717 = sld [smem:[#allocation7 + $0x102]]
    %v718 = vstv %s717
    %v719 = vmul.f32 %v297, %v718
    %v720 = vmul.f32 %v298, %v718
    %v721 = vadd.f32 %v715, %v719
    %v722 = vadd.f32 %v716, %v720
    %s723 = sld [smem:[#allocation7 + $0x182]]
    %v724 = vstv %s723
    %v725 = vmul.f32 %v353, %v724
    %v726 = vmul.f32 %v354, %v724
    %v727 = vadd.f32 %v721, %v725
    %v728 = vadd.f32 %v722, %v726
    %s729 = sld [smem:[#allocation7 + $0x202]]
    %v730 = vstv %s729
    %v731 = vmul.f32 %v409, %v730
    %v732 = vmul.f32 %v410, %v730
    %v733 = vadd.f32 %v727, %v731
    %v734 = vadd.f32 %v728, %v732
    %s735 = sld [smem:[#allocation7 + $0x282]]
    %v736 = vstv %s735
    %v737 = vmul.f32 %v465, %v736
    %v738 = vmul.f32 %v466, %v736
    %v739 = vadd.f32 %v733, %v737
    %v740 = vadd.f32 %v734, %v738
    %s741 = sld [smem:[#allocation7 + $0x302]]
    %v742 = vstv %s741
    %v743 = vmul.f32 %v521, %v742
    %v744 = vmul.f32 %v522, %v742
    %v745 = vadd.f32 %v739, %v743
    %v746 = vadd.f32 %v740, %v744
    %s747 = sld [smem:[#allocation7 + $0x382]]
    %v748 = vstv %s747
    %v749 = vmul.f32 %v577, %v748
    %v750 = vmul.f32 %v578, %v748
    %v751 = vadd.f32 %v745, %v749
    %v752 = vadd.f32 %v746, %v750
    %s753 = sld [smem:[#allocation8 + $0x2]]
    %v754 = vstv %s753
    %v755 = vadd.f32 %v751, %v754
    %v756 = vadd.f32 %v752, %v754
    %s757 = sld [smem:[#allocation7 + $0x3]]
    %v758 = vstv %s757
    %v759 = vmul.f32 %v185, %v758
    %v760 = vmul.f32 %v186, %v758
    %s761 = sld [smem:[#allocation7 + $0x83]]
    %v762 = vstv %s761
    %v763 = vmul.f32 %v241, %v762
    %v764 = vmul.f32 %v242, %v762
    %v765 = vadd.f32 %v759, %v763
    %v766 = vadd.f32 %v760, %v764
    %s767 = sld [smem:[#allocation7 + $0x103]]
    %v768 = vstv %s767
    %v769 = vmul.f32 %v297, %v768
    %v770 = vmul.f32 %v298, %v768
    %v771 = vadd.f32 %v765, %v769
    %v772 = vadd.f32 %v766, %v770
    %s773 = sld [smem:[#allocation7 + $0x183]]
    %v774 = vstv %s773
    %v775 = vmul.f32 %v353, %v774
    %v776 = vmul.f32 %v354, %v774
    %v777 = vadd.f32 %v771, %v775
    %v778 = vadd.f32 %v772, %v776
    %s779 = sld [smem:[#allocation7 + $0x203]]
    %v780 = vstv %s779
    %v781 = vmul.f32 %v409, %v780
    %v782 = vmul.f32 %v410, %v780
    %v783 = vadd.f32 %v777, %v781
    %v784 = vadd.f32 %v778, %v782
    %s785 = sld [smem:[#allocation7 + $0x283]]
    %v786 = vstv %s785
    %v787 = vmul.f32 %v465, %v786
    %v788 = vmul.f32 %v466, %v786
    %v789 = vadd.f32 %v783, %v787
    %v790 = vadd.f32 %v784, %v788
    %s791 = sld [smem:[#allocation7 + $0x303]]
    %v792 = vstv %s791
    %v793 = vmul.f32 %v521, %v792
    %v794 = vmul.f32 %v522, %v792
    %v795 = vadd.f32 %v789, %v793
    %v796 = vadd.f32 %v790, %v794
    %s797 = sld [smem:[#allocation7 + $0x383]]
    %v798 = vstv %s797
    %v799 = vmul.f32 %v577, %v798
    %v800 = vmul.f32 %v578, %v798
    %v801 = vadd.f32 %v795, %v799
    %v802 = vadd.f32 %v796, %v800
    %s803 = sld [smem:[#allocation8 + $0x3]]
    %v804 = vstv %s803
    %v805 = vadd.f32 %v801, %v804
    %v806 = vadd.f32 %v802, %v804
    %s807 = sld [smem:[#allocation7 + $0x4]]
    %v808 = vstv %s807
    %v809 = vmul.f32 %v185, %v808
    %v810 = vmul.f32 %v186, %v808
    %s811 = sld [smem:[#allocation7 + $0x84]]
    %v812 = vstv %s811
    %v813 = vmul.f32 %v241, %v812
    %v814 = vmul.f32 %v242, %v812
    %v815 = vadd.f32 %v809, %v813
    %v816 = vadd.f32 %v810, %v814
    %s817 = sld [smem:[#allocation7 + $0x104]]
    %v818 = vstv %s817
    %v819 = vmul.f32 %v297, %v818
    %v820 = vmul.f32 %v298, %v818
    %v821 = vadd.f32 %v815, %v819
    %v822 = vadd.f32 %v816, %v820
    %s823 = sld [smem:[#allocation7 + $0x184]]
    %v824 = vstv %s823
    %v825 = vmul.f32 %v353, %v824
    %v826 = vmul.f32 %v354, %v824
    %v827 = vadd.f32 %v821, %v825
    %v828 = vadd.f32 %v822, %v826
    %s829 = sld [smem:[#allocation7 + $0x204]]
    %v830 = vstv %s829
    %v831 = vmul.f32 %v409, %v830
    %v832 = vmul.f32 %v410, %v830
    %v833 = vadd.f32 %v827, %v831
    %v834 = vadd.f32 %v828, %v832
    %s835 = sld [smem:[#allocation7 + $0x284]]
    %v836 = vstv %s835
    %v837 = vmul.f32 %v465, %v836
    %v838 = vmul.f32 %v466, %v836
    %v839 = vadd.f32 %v833, %v837
    %v840 = vadd.f32 %v834, %v838
    %s841 = sld [smem:[#allocation7 + $0x304]]
    %v842 = vstv %s841
    %v843 = vmul.f32 %v521, %v842
    %v844 = vmul.f32 %v522, %v842
    %v845 = vadd.f32 %v839, %v843
    %v846 = vadd.f32 %v840, %v844
    %s847 = sld [smem:[#allocation7 + $0x384]]
    %v848 = vstv %s847
    %v849 = vmul.f32 %v577, %v848
    %v850 = vmul.f32 %v578, %v848
    %v851 = vadd.f32 %v845, %v849
    %v852 = vadd.f32 %v846, %v850
    %s853 = sld [smem:[#allocation8 + $0x4]]
    %v854 = vstv %s853
    %v855 = vadd.f32 %v851, %v854
    %v856 = vadd.f32 %v852, %v854
    %s857 = sld [smem:[#allocation7 + $0x5]]
    %v858 = vstv %s857
    %v859 = vmul.f32 %v185, %v858
    %v860 = vmul.f32 %v186, %v858
    %s861 = sld [smem:[#allocation7 + $0x85]]
    %v862 = vstv %s861
    %v863 = vmul.f32 %v241, %v862
    %v864 = vmul.f32 %v242, %v862
    %v865 = vadd.f32 %v859, %v863
    %v866 = vadd.f32 %v860, %v864
    %s867 = sld [smem:[#allocation7 + $0x105]]
    %v868 = vstv %s867
    %v869 = vmul.f32 %v297, %v868
    %v870 = vmul.f32 %v298, %v868
    %v871 = vadd.f32 %v865, %v869
    %v872 = vadd.f32 %v866, %v870
    %s873 = sld [smem:[#allocation7 + $0x185]]
    %v874 = vstv %s873
    %v875 = vmul.f32 %v353, %v874
    %v876 = vmul.f32 %v354, %v874
    %v877 = vadd.f32 %v871, %v875
    %v878 = vadd.f32 %v872, %v876
    %s879 = sld [smem:[#allocation7 + $0x205]]
    %v880 = vstv %s879
    %v881 = vmul.f32 %v409, %v880
    %v882 = vmul.f32 %v410, %v880
    %v883 = vadd.f32 %v877, %v881
    %v884 = vadd.f32 %v878, %v882
    %s885 = sld [smem:[#allocation7 + $0x285]]
    %v886 = vstv %s885
    %v887 = vmul.f32 %v465, %v886
    %v888 = vmul.f32 %v466, %v886
    %v889 = vadd.f32 %v883, %v887
    %v890 = vadd.f32 %v884, %v888
    %s891 = sld [smem:[#allocation7 + $0x305]]
    %v892 = vstv %s891
    %v893 = vmul.f32 %v521, %v892
    %v894 = vmul.f32 %v522, %v892
    %v895 = vadd.f32 %v889, %v893
    %v896 = vadd.f32 %v890, %v894
    %s897 = sld [smem:[#allocation7 + $0x385]]
    %v898 = vstv %s897
    %v899 = vmul.f32 %v577, %v898
    %v900 = vmul.f32 %v578, %v898
    %v901 = vadd.f32 %v895, %v899
    %v902 = vadd.f32 %v896, %v900
    %s903 = sld [smem:[#allocation8 + $0x5]]
    %v904 = vstv %s903
    %v905 = vadd.f32 %v901, %v904
    %v906 = vadd.f32 %v902, %v904
    %s907 = sld [smem:[#allocation7 + $0x6]]
    %v908 = vstv %s907
    %v909 = vmul.f32 %v185, %v908
    %v910 = vmul.f32 %v186, %v908
    %s911 = sld [smem:[#allocation7 + $0x86]]
    %v912 = vstv %s911
    %v913 = vmul.f32 %v241, %v912
    %v914 = vmul.f32 %v242, %v912
    %v915 = vadd.f32 %v909, %v913
    %v916 = vadd.f32 %v910, %v914
    %s917 = sld [smem:[#allocation7 + $0x106]]
    %v918 = vstv %s917
    %v919 = vmul.f32 %v297, %v918
    %v920 = vmul.f32 %v298, %v918
    %v921 = vadd.f32 %v915, %v919
    %v922 = vadd.f32 %v916, %v920
    %s923 = sld [smem:[#allocation7 + $0x186]]
    %v924 = vstv %s923
    %v925 = vmul.f32 %v353, %v924
    %v926 = vmul.f32 %v354, %v924
    %v927 = vadd.f32 %v921, %v925
    %v928 = vadd.f32 %v922, %v926
    %s929 = sld [smem:[#allocation7 + $0x206]]
    %v930 = vstv %s929
    %v931 = vmul.f32 %v409, %v930
    %v932 = vmul.f32 %v410, %v930
    %v933 = vadd.f32 %v927, %v931
    %v934 = vadd.f32 %v928, %v932
    %s935 = sld [smem:[#allocation7 + $0x286]]
    %v936 = vstv %s935
    %v937 = vmul.f32 %v465, %v936
    %v938 = vmul.f32 %v466, %v936
    %v939 = vadd.f32 %v933, %v937
    %v940 = vadd.f32 %v934, %v938
    %s941 = sld [smem:[#allocation7 + $0x306]]
    %v942 = vstv %s941
    %v943 = vmul.f32 %v521, %v942
    %v944 = vmul.f32 %v522, %v942
    %v945 = vadd.f32 %v939, %v943
    %v946 = vadd.f32 %v940, %v944
    %s947 = sld [smem:[#allocation7 + $0x386]]
    %v948 = vstv %s947
    %v949 = vmul.f32 %v577, %v948
    %v950 = vmul.f32 %v578, %v948
    %v951 = vadd.f32 %v945, %v949
    %v952 = vadd.f32 %v946, %v950
    %s953 = sld [smem:[#allocation8 + $0x6]]
    %v954 = vstv %s953
    %v955 = vadd.f32 %v951, %v954
    %v956 = vadd.f32 %v952, %v954
    %s957 = sld [smem:[#allocation7 + $0x7]]
    %v958 = vstv %s957
    %v959 = vmul.f32 %v185, %v958
    %v960 = vmul.f32 %v186, %v958
    %s961 = sld [smem:[#allocation7 + $0x87]]
    %v962 = vstv %s961
    %v963 = vmul.f32 %v241, %v962
    %v964 = vmul.f32 %v242, %v962
    %v965 = vadd.f32 %v959, %v963
    %v966 = vadd.f32 %v960, %v964
    %s967 = sld [smem:[#allocation7 + $0x107]]
    %v968 = vstv %s967
    %v969 = vmul.f32 %v297, %v968
    %v970 = vmul.f32 %v298, %v968
    %v971 = vadd.f32 %v965, %v969
    %v972 = vadd.f32 %v966, %v970
    %s973 = sld [smem:[#allocation7 + $0x187]]
    %v974 = vstv %s973
    %v975 = vmul.f32 %v353, %v974
    %v976 = vmul.f32 %v354, %v974
    %v977 = vadd.f32 %v971, %v975
    %v978 = vadd.f32 %v972, %v976
    %s979 = sld [smem:[#allocation7 + $0x207]]
    %v980 = vstv %s979
    %v981 = vmul.f32 %v409, %v980
    %v982 = vmul.f32 %v410, %v980
    %v983 = vadd.f32 %v977, %v981
    %v984 = vadd.f32 %v978, %v982
    %s985 = sld [smem:[#allocation7 + $0x287]]
    %v986 = vstv %s985
    %v987 = vmul.f32 %v465, %v986
    %v988 = vmul.f32 %v466, %v986
    %v989 = vadd.f32 %v983, %v987
    %v990 = vadd.f32 %v984, %v988
    %s991 = sld [smem:[#allocation7 + $0x307]]
    %v992 = vstv %s991
    %v993 = vmul.f32 %v521, %v992
    %v994 = vmul.f32 %v522, %v992
    %v995 = vadd.f32 %v989, %v993
    %v996 = vadd.f32 %v990, %v994
    %s997 = sld [smem:[#allocation7 + $0x387]]
    %v998 = vstv %s997
    %v999 = vmul.f32 %v577, %v998
    %v1000 = vmul.f32 %v578, %v998
    %v1001 = vadd.f32 %v995, %v999
    %v1002 = vadd.f32 %v996, %v1000
    %s1003 = sld [smem:[#allocation8 + $0x7]]
    %v1004 = vstv %s1003
    %v1005 = vadd.f32 %v1001, %v1004
    %v1006 = vadd.f32 %v1002, %v1004
    %s1007 = sld [smem:[#allocation10]]
    %v1008 = vstv %s1007
    %v1009 = vmul.f32 %v185, %v1008
    %v1010 = vmul.f32 %v186, %v1008
    %s1011 = sld [smem:[#allocation10 + $0x400]]
    %v1012 = vstv %s1011
    %v1013 = vmul.f32 %v213, %v1012
    %v1014 = vmul.f32 %v214, %v1012
    %v1015 = vadd.f32 %v1009, %v1013
    %v1016 = vadd.f32 %v1010, %v1014
    %v1017 = vmul.f32 %v213, %v1008
    %v1018 = vmul.f32 %v214, %v1008
    %v1019 = vmul.f32 %v185, %v1012
    %v1020 = vmul.f32 %v186, %v1012
    %1023 = vrot.lane.b32.xlu0 %v1019, 127
    %v1024 = vpop.permute.xlu0 %1023
    %1025 = vrot.lane.b32.xlu0 %v1020, 127
    %v1026 = vpop.permute.xlu0 %1025
    %v1029 = vadd.f32 %v1017, %v1024
    %v1030 = vadd.f32 %v1018, %v1026
    %s1031 = sld [smem:[#allocation10 + $0x80]]
    %v1032 = vstv %s1031
    %v1033 = vmul.f32 %v241, %v1032
    %v1034 = vmul.f32 %v242, %v1032
    %v1035 = vadd.f32 %v1015, %v1033
    %v1036 = vadd.f32 %v1016, %v1034
    %s1037 = sld [smem:[#allocation10 + $0x480]]
    %v1038 = vstv %s1037
    %v1039 = vmul.f32 %v269, %v1038
    %v1040 = vmul.f32 %v270, %v1038
    %v1041 = vadd.f32 %v1035, %v1039
    %v1042 = vadd.f32 %v1036, %v1040
    %v1043 = vmul.f32 %v269, %v1032
    %v1044 = vmul.f32 %v270, %v1032
    %v1045 = vadd.f32 %v1029, %v1043
    %v1046 = vadd.f32 %v1030, %v1044
    %v1047 = vmul.f32 %v241, %v1038
    %v1048 = vmul.f32 %v242, %v1038
    %1051 = vrot.lane.b32.xlu0 %v1047, 127
    %v1052 = vpop.permute.xlu0 %1051
    %1053 = vrot.lane.b32.xlu0 %v1048, 127
    %v1054 = vpop.permute.xlu0 %1053
    %v1057 = vadd.f32 %v1045, %v1052
    %v1058 = vadd.f32 %v1046, %v1054
    %s1059 = sld [smem:[#allocation10 + $0x100]]
    %v1060 = vstv %s1059
    %v1061 = vmul.f32 %v297, %v1060
    %v1062 = vmul.f32 %v298, %v1060
    %v1063 = vadd.f32 %v1041, %v1061
    %v1064 = vadd.f32 %v1042, %v1062
    %s1065 = sld [smem:[#allocation10 + $0x500]]
    %v1066 = vstv %s1065
    %v1067 = vmul.f32 %v325, %v1066
    %v1068 = vmul.f32 %v326, %v1066
    %v1069 = vadd.f32 %v1063, %v1067
    %v1070 = vadd.f32 %v1064, %v1068
    %v1071 = vmul.f32 %v325, %v1060
    %v1072 = vmul.f32 %v326, %v1060
    %v1073 = vadd.f32 %v1057, %v1071
    %v1074 = vadd.f32 %v1058, %v1072
    %v1075 = vmul.f32 %v297, %v1066
    %v1076 = vmul.f32 %v298, %v1066
    %1079 = vrot.lane.b32.xlu0 %v1075, 127
    %v1080 = vpop.permute.xlu0 %1079
    %1081 = vrot.lane.b32.xlu0 %v1076, 127
    %v1082 = vpop.permute.xlu0 %1081
    %v1085 = vadd.f32 %v1073, %v1080
    %v1086 = vadd.f32 %v1074, %v1082
    %s1087 = sld [smem:[#allocation10 + $0x180]]
    %v1088 = vstv %s1087
    %v1089 = vmul.f32 %v353, %v1088
    %v1090 = vmul.f32 %v354, %v1088
    %v1091 = vadd.f32 %v1069, %v1089
    %v1092 = vadd.f32 %v1070, %v1090
    %s1093 = sld [smem:[#allocation10 + $0x580]]
    %v1094 = vstv %s1093
    %v1095 = vmul.f32 %v381, %v1094
    %v1096 = vmul.f32 %v382, %v1094
    %v1097 = vadd.f32 %v1091, %v1095
    %v1098 = vadd.f32 %v1092, %v1096
    %v1099 = vmul.f32 %v381, %v1088
    %v1100 = vmul.f32 %v382, %v1088
    %v1101 = vadd.f32 %v1085, %v1099
    %v1102 = vadd.f32 %v1086, %v1100
    %v1103 = vmul.f32 %v353, %v1094
    %v1104 = vmul.f32 %v354, %v1094
    %1107 = vrot.lane.b32.xlu0 %v1103, 127
    %v1108 = vpop.permute.xlu0 %1107
    %1109 = vrot.lane.b32.xlu0 %v1104, 127
    %v1110 = vpop.permute.xlu0 %1109
    %v1113 = vadd.f32 %v1101, %v1108
    %v1114 = vadd.f32 %v1102, %v1110
    %s1115 = sld [smem:[#allocation10 + $0x200]]
    %v1116 = vstv %s1115
    %v1117 = vmul.f32 %v409, %v1116
    %v1118 = vmul.f32 %v410, %v1116
    %v1119 = vadd.f32 %v1097, %v1117
    %v1120 = vadd.f32 %v1098, %v1118
    %s1121 = sld [smem:[#allocation10 + $0x600]]
    %v1122 = vstv %s1121
    %v1123 = vmul.f32 %v437, %v1122
    %v1124 = vmul.f32 %v438, %v1122
    %v1125 = vadd.f32 %v1119, %v1123
    %v1126 = vadd.f32 %v1120, %v1124
    %v1127 = vmul.f32 %v437, %v1116
    %v1128 = vmul.f32 %v438, %v1116
    %v1129 = vadd.f32 %v1113, %v1127
    %v1130 = vadd.f32 %v1114, %v1128
    %v1131 = vmul.f32 %v409, %v1122
    %v1132 = vmul.f32 %v410, %v1122
    %1135 = vrot.lane.b32.xlu0 %v1131, 127
    %v1136 = vpop.permute.xlu0 %1135
    %1137 = vrot.lane.b32.xlu0 %v1132, 127
    %v1138 = vpop.permute.xlu0 %1137
    %v1141 = vadd.f32 %v1129, %v1136
    %v1142 = vadd.f32 %v1130, %v1138
    %s1143 = sld [smem:[#allocation10 + $0x280]]
    %v1144 = vstv %s1143
    %v1145 = vmul.f32 %v465, %v1144
    %v1146 = vmul.f32 %v466, %v1144
    %v1147 = vadd.f32 %v1125, %v1145
    %v1148 = vadd.f32 %v1126, %v1146
    %s1149 = sld [smem:[#allocation10 + $0x680]]
    %v1150 = vstv %s1149
    %v1151 = vmul.f32 %v493, %v1150
    %v1152 = vmul.f32 %v494, %v1150
    %v1153 = vadd.f32 %v1147, %v1151
    %v1154 = vadd.f32 %v1148, %v1152
    %v1155 = vmul.f32 %v493, %v1144
    %v1156 = vmul.f32 %v494, %v1144
    %v1157 = vadd.f32 %v1141, %v1155
    %v1158 = vadd.f32 %v1142, %v1156
    %v1159 = vmul.f32 %v465, %v1150
    %v1160 = vmul.f32 %v466, %v1150
    %1163 = vrot.lane.b32.xlu0 %v1159, 127
    %v1164 = vpop.permute.xlu0 %1163
    %1165 = vrot.lane.b32.xlu0 %v1160, 127
    %v1166 = vpop.permute.xlu0 %1165
    %v1169 = vadd.f32 %v1157, %v1164
    %v1170 = vadd.f32 %v1158, %v1166
    %s1171 = sld [smem:[#allocation10 + $0x300]]
    %v1172 = vstv %s1171
    %v1173 = vmul.f32 %v521, %v1172
    %v1174 = vmul.f32 %v522, %v1172
    %v1175 = vadd.f32 %v1153, %v1173
    %v1176 = vadd.f32 %v1154, %v1174
    %s1177 = sld [smem:[#allocation10 + $0x700]]
    %v1178 = vstv %s1177
    %v1179 = vmul.f32 %v549, %v1178
    %v1180 = vmul.f32 %v550, %v1178
    %v1181 = vadd.f32 %v1175, %v1179
    %v1182 = vadd.f32 %v1176, %v1180
    %v1183 = vmul.f32 %v549, %v1172
    %v1184 = vmul.f32 %v550, %v1172
    %v1185 = vadd.f32 %v1169, %v1183
    %v1186 = vadd.f32 %v1170, %v1184
    %v1187 = vmul.f32 %v521, %v1178
    %v1188 = vmul.f32 %v522, %v1178
    %1191 = vrot.lane.b32.xlu0 %v1187, 127
    %v1192 = vpop.permute.xlu0 %1191
    %1193 = vrot.lane.b32.xlu0 %v1188, 127
    %v1194 = vpop.permute.xlu0 %1193
    %v1197 = vadd.f32 %v1185, %v1192
    %v1198 = vadd.f32 %v1186, %v1194
    %s1199 = sld [smem:[#allocation10 + $0x380]]
    %v1200 = vstv %s1199
    %v1201 = vmul.f32 %v577, %v1200
    %v1202 = vmul.f32 %v578, %v1200
    %v1203 = vadd.f32 %v1181, %v1201
    %v1204 = vadd.f32 %v1182, %v1202
    %s1205 = sld [smem:[#allocation10 + $0x780]]
    %v1206 = vstv %s1205
    %v1207 = vmul.f32 %v605, %v1206
    %v1208 = vmul.f32 %v606, %v1206
    %v1209 = vadd.f32 %v1203, %v1207
    %v1210 = vadd.f32 %v1204, %v1208
    %v1211 = vmul.f32 %v605, %v1200
    %v1212 = vmul.f32 %v606, %v1200
    %v1213 = vadd.f32 %v1197, %v1211
    %v1214 = vadd.f32 %v1198, %v1212
    %v1215 = vmul.f32 %v577, %v1206
    %v1216 = vmul.f32 %v578, %v1206
    %1219 = vrot.lane.b32.xlu0 %v1215, 127
    %v1220 = vpop.permute.xlu0 %1219
    %1221 = vrot.lane.b32.xlu0 %v1216, 127
    %v1222 = vpop.permute.xlu0 %1221
    %v1225 = vadd.f32 %v1213, %v1220
    %v1226 = vadd.f32 %v1214, %v1222
    %s1227 = sld [smem:[#allocation11]]
    %v1228 = vstv %s1227
    %v1229 = vadd.f32 %v1209, %v1228
    %v1230 = vadd.f32 %v1210, %v1228
    %v1231 = vadd.f32 %v1225, %v1228
    %v1232 = vadd.f32 %v1226, %v1228
    %s1233 = sld [smem:[#allocation10 + $0x1]]
    %v1234 = vstv %s1233
    %v1235 = vmul.f32 %v185, %v1234
    %v1236 = vmul.f32 %v186, %v1234
    %s1237 = sld [smem:[#allocation10 + $0x401]]
    %v1238 = vstv %s1237
    %v1239 = vmul.f32 %v213, %v1238
    %v1240 = vmul.f32 %v214, %v1238
    %v1241 = vadd.f32 %v1235, %v1239
    %v1242 = vadd.f32 %v1236, %v1240
    %v1243 = vmul.f32 %v213, %v1234
    %v1244 = vmul.f32 %v214, %v1234
    %v1245 = vmul.f32 %v185, %v1238
    %v1246 = vmul.f32 %v186, %v1238
    %1249 = vrot.lane.b32.xlu0 %v1245, 127
    %v1250 = vpop.permute.xlu0 %1249
    %1251 = vrot.lane.b32.xlu0 %v1246, 127
    %v1252 = vpop.permute.xlu0 %1251
    %v1255 = vadd.f32 %v1243, %v1250
    %v1256 = vadd.f32 %v1244, %v1252
    %s1257 = sld [smem:[#allocation10 + $0x81]]
    %v1258 = vstv %s1257
    %v1259 = vmul.f32 %v241, %v1258
    %v1260 = vmul.f32 %v242, %v1258
    %v1261 = vadd.f32 %v1241, %v1259
    %v1262 = vadd.f32 %v1242, %v1260
    %s1263 = sld [smem:[#allocation10 + $0x481]]
    %v1264 = vstv %s1263
    %v1265 = vmul.f32 %v269, %v1264
    %v1266 = vmul.f32 %v270, %v1264
    %v1267 = vadd.f32 %v1261, %v1265
    %v1268 = vadd.f32 %v1262, %v1266
    %v1269 = vmul.f32 %v269, %v1258
    %v1270 = vmul.f32 %v270, %v1258
    %v1271 = vadd.f32 %v1255, %v1269
    %v1272 = vadd.f32 %v1256, %v1270
    %v1273 = vmul.f32 %v241, %v1264
    %v1274 = vmul.f32 %v242, %v1264
    %1277 = vrot.lane.b32.xlu0 %v1273, 127
    %v1278 = vpop.permute.xlu0 %1277
    %1279 = vrot.lane.b32.xlu0 %v1274, 127
    %v1280 = vpop.permute.xlu0 %1279
    %v1283 = vadd.f32 %v1271, %v1278
    %v1284 = vadd.f32 %v1272, %v1280
    %s1285 = sld [smem:[#allocation10 + $0x101]]
    %v1286 = vstv %s1285
    %v1287 = vmul.f32 %v297, %v1286
    %v1288 = vmul.f32 %v298, %v1286
    %v1289 = vadd.f32 %v1267, %v1287
    %v1290 = vadd.f32 %v1268, %v1288
    %s1291 = sld [smem:[#allocation10 + $0x501]]
    %v1292 = vstv %s1291
    %v1293 = vmul.f32 %v325, %v1292
    %v1294 = vmul.f32 %v326, %v1292
    %v1295 = vadd.f32 %v1289, %v1293
    %v1296 = vadd.f32 %v1290, %v1294
    %v1297 = vmul.f32 %v325, %v1286
    %v1298 = vmul.f32 %v326, %v1286
    %v1299 = vadd.f32 %v1283, %v1297
    %v1300 = vadd.f32 %v1284, %v1298
    %v1301 = vmul.f32 %v297, %v1292
    %v1302 = vmul.f32 %v298, %v1292
    %1305 = vrot.lane.b32.xlu0 %v1301, 127
    %v1306 = vpop.permute.xlu0 %1305
    %1307 = vrot.lane.b32.xlu0 %v1302, 127
    %v1308 = vpop.permute.xlu0 %1307
    %v1311 = vadd.f32 %v1299, %v1306
    %v1312 = vadd.f32 %v1300, %v1308
    %s1313 = sld [smem:[#allocation10 + $0x181]]
    %v1314 = vstv %s1313
    %v1315 = vmul.f32 %v353, %v1314
    %v1316 = vmul.f32 %v354, %v1314
    %v1317 = vadd.f32 %v1295, %v1315
    %v1318 = vadd.f32 %v1296, %v1316
    %s1319 = sld [smem:[#allocation10 + $0x581]]
    %v1320 = vstv %s1319
    %v1321 = vmul.f32 %v381, %v1320
    %v1322 = vmul.f32 %v382, %v1320
    %v1323 = vadd.f32 %v1317, %v1321
    %v1324 = vadd.f32 %v1318, %v1322
    %v1325 = vmul.f32 %v381, %v1314
    %v1326 = vmul.f32 %v382, %v1314
    %v1327 = vadd.f32 %v1311, %v1325
    %v1328 = vadd.f32 %v1312, %v1326
    %v1329 = vmul.f32 %v353, %v1320
    %v1330 = vmul.f32 %v354, %v1320
    %1333 = vrot.lane.b32.xlu0 %v1329, 127
    %v1334 = vpop.permute.xlu0 %1333
    %1335 = vrot.lane.b32.xlu0 %v1330, 127
    %v1336 = vpop.permute.xlu0 %1335
    %v1339 = vadd.f32 %v1327, %v1334
    %v1340 = vadd.f32 %v1328, %v1336
    %s1341 = sld [smem:[#allocation10 + $0x201]]
    %v1342 = vstv %s1341
    %v1343 = vmul.f32 %v409, %v1342
    %v1344 = vmul.f32 %v410, %v1342
    %v1345 = vadd.f32 %v1323, %v1343
    %v1346 = vadd.f32 %v1324, %v1344
    %s1347 = sld [smem:[#allocation10 + $0x601]]
    %v1348 = vstv %s1347
    %v1349 = vmul.f32 %v437, %v1348
    %v1350 = vmul.f32 %v438, %v1348
    %v1351 = vadd.f32 %v1345, %v1349
    %v1352 = vadd.f32 %v1346, %v1350
    %v1353 = vmul.f32 %v437, %v1342
    %v1354 = vmul.f32 %v438, %v1342
    %v1355 = vadd.f32 %v1339, %v1353
    %v1356 = vadd.f32 %v1340, %v1354
    %v1357 = vmul.f32 %v409, %v1348
    %v1358 = vmul.f32 %v410, %v1348
    %1361 = vrot.lane.b32.xlu0 %v1357, 127
    %v1362 = vpop.permute.xlu0 %1361
    %1363 = vrot.lane.b32.xlu0 %v1358, 127
    %v1364 = vpop.permute.xlu0 %1363
    %v1367 = vadd.f32 %v1355, %v1362
    %v1368 = vadd.f32 %v1356, %v1364
    %s1369 = sld [smem:[#allocation10 + $0x281]]
    %v1370 = vstv %s1369
    %v1371 = vmul.f32 %v465, %v1370
    %v1372 = vmul.f32 %v466, %v1370
    %v1373 = vadd.f32 %v1351, %v1371
    %v1374 = vadd.f32 %v1352, %v1372
    %s1375 = sld [smem:[#allocation10 + $0x681]]
    %v1376 = vstv %s1375
    %v1377 = vmul.f32 %v493, %v1376
    %v1378 = vmul.f32 %v494, %v1376
    %v1379 = vadd.f32 %v1373, %v1377
    %v1380 = vadd.f32 %v1374, %v1378
    %v1381 = vmul.f32 %v493, %v1370
    %v1382 = vmul.f32 %v494, %v1370
    %v1383 = vadd.f32 %v1367, %v1381
    %v1384 = vadd.f32 %v1368, %v1382
    %v1385 = vmul.f32 %v465, %v1376
    %v1386 = vmul.f32 %v466, %v1376
    %1389 = vrot.lane.b32.xlu0 %v1385, 127
    %v1390 = vpop.permute.xlu0 %1389
    %1391 = vrot.lane.b32.xlu0 %v1386, 127
    %v1392 = vpop.permute.xlu0 %1391
    %v1395 = vadd.f32 %v1383, %v1390
    %v1396 = vadd.f32 %v1384, %v1392
    %s1397 = sld [smem:[#allocation10 + $0x301]]
    %v1398 = vstv %s1397
    %v1399 = vmul.f32 %v521, %v1398
    %v1400 = vmul.f32 %v522, %v1398
    %v1401 = vadd.f32 %v1379, %v1399
    %v1402 = vadd.f32 %v1380, %v1400
    %s1403 = sld [smem:[#allocation10 + $0x701]]
    %v1404 = vstv %s1403
    %v1405 = vmul.f32 %v549, %v1404
    %v1406 = vmul.f32 %v550, %v1404
    %v1407 = vadd.f32 %v1401, %v1405
    %v1408 = vadd.f32 %v1402, %v1406
    %v1409 = vmul.f32 %v549, %v1398
    %v1410 = vmul.f32 %v550, %v1398
    %v1411 = vadd.f32 %v1395, %v1409
    %v1412 = vadd.f32 %v1396, %v1410
    %v1413 = vmul.f32 %v521, %v1404
    %v1414 = vmul.f32 %v522, %v1404
    %1417 = vrot.lane.b32.xlu0 %v1413, 127
    %v1418 = vpop.permute.xlu0 %1417
    %1419 = vrot.lane.b32.xlu0 %v1414, 127
    %v1420 = vpop.permute.xlu0 %1419
    %v1423 = vadd.f32 %v1411, %v1418
    %v1424 = vadd.f32 %v1412, %v1420
    %s1425 = sld [smem:[#allocation10 + $0x381]]
    %v1426 = vstv %s1425
    %v1427 = vmul.f32 %v577, %v1426
    %v1428 = vmul.f32 %v578, %v1426
    %v1429 = vadd.f32 %v1407, %v1427
    %v1430 = vadd.f32 %v1408, %v1428
    %s1431 = sld [smem:[#allocation10 + $0x781]]
    %v1432 = vstv %s1431
    %v1433 = vmul.f32 %v605, %v1432
    %v1434 = vmul.f32 %v606, %v1432
    %v1435 = vadd.f32 %v1429, %v1433
    %v1436 = vadd.f32 %v1430, %v1434
    %v1437 = vmul.f32 %v605, %v1426
    %v1438 = vmul.f32 %v606, %v1426
    %v1439 = vadd.f32 %v1423, %v1437
    %v1440 = vadd.f32 %v1424, %v1438
    %v1441 = vmul.f32 %v577, %v1432
    %v1442 = vmul.f32 %v578, %v1432
    %1445 = vrot.lane.b32.xlu0 %v1441, 127
    %v1446 = vpop.permute.xlu0 %1445
    %1447 = vrot.lane.b32.xlu0 %v1442, 127
    %v1448 = vpop.permute.xlu0 %1447
    %v1451 = vadd.f32 %v1439, %v1446
    %v1452 = vadd.f32 %v1440, %v1448
    %s1453 = sld [smem:[#allocation11 + $0x1]]
    %v1454 = vstv %s1453
    %v1455 = vadd.f32 %v1435, %v1454
    %v1456 = vadd.f32 %v1436, %v1454
    %v1457 = vadd.f32 %v1451, %v1454
    %v1458 = vadd.f32 %v1452, %v1454
    %s1459 = sld [smem:[#allocation10 + $0x2]]
    %v1460 = vstv %s1459
    %v1461 = vmul.f32 %v185, %v1460
    %v1462 = vmul.f32 %v186, %v1460
    %s1463 = sld [smem:[#allocation10 + $0x402]]
    %v1464 = vstv %s1463
    %v1465 = vmul.f32 %v213, %v1464
    %v1466 = vmul.f32 %v214, %v1464
    %v1467 = vadd.f32 %v1461, %v1465
    %v1468 = vadd.f32 %v1462, %v1466
    %v1469 = vmul.f32 %v213, %v1460
    %v1470 = vmul.f32 %v214, %v1460
    %v1471 = vmul.f32 %v185, %v1464
    %v1472 = vmul.f32 %v186, %v1464
    %1475 = vrot.lane.b32.xlu0 %v1471, 127
    %v1476 = vpop.permute.xlu0 %1475
    %1477 = vrot.lane.b32.xlu0 %v1472, 127
    %v1478 = vpop.permute.xlu0 %1477
    %v1481 = vadd.f32 %v1469, %v1476
    %v1482 = vadd.f32 %v1470, %v1478
    %s1483 = sld [smem:[#allocation10 + $0x82]]
    %v1484 = vstv %s1483
    %v1485 = vmul.f32 %v241, %v1484
    %v1486 = vmul.f32 %v242, %v1484
    %v1487 = vadd.f32 %v1467, %v1485
    %v1488 = vadd.f32 %v1468, %v1486
    %s1489 = sld [smem:[#allocation10 + $0x482]]
    %v1490 = vstv %s1489
    %v1491 = vmul.f32 %v269, %v1490
    %v1492 = vmul.f32 %v270, %v1490
    %v1493 = vadd.f32 %v1487, %v1491
    %v1494 = vadd.f32 %v1488, %v1492
    %v1495 = vmul.f32 %v269, %v1484
    %v1496 = vmul.f32 %v270, %v1484
    %v1497 = vadd.f32 %v1481, %v1495
    %v1498 = vadd.f32 %v1482, %v1496
    %v1499 = vmul.f32 %v241, %v1490
    %v1500 = vmul.f32 %v242, %v1490
    %1503 = vrot.lane.b32.xlu0 %v1499, 127
    %v1504 = vpop.permute.xlu0 %1503
    %1505 = vrot.lane.b32.xlu0 %v1500, 127
    %v1506 = vpop.permute.xlu0 %1505
    %v1509 = vadd.f32 %v1497, %v1504
    %v1510 = vadd.f32 %v1498, %v1506
    %s1511 = sld [smem:[#allocation10 + $0x102]]
    %v1512 = vstv %s1511
    %v1513 = vmul.f32 %v297, %v1512
    %v1514 = vmul.f32 %v298, %v1512
    %v1515 = vadd.f32 %v1493, %v1513
    %v1516 = vadd.f32 %v1494, %v1514
    %s1517 = sld [smem:[#allocation10 + $0x502]]
    %v1518 = vstv %s1517
    %v1519 = vmul.f32 %v325, %v1518
    %v1520 = vmul.f32 %v326, %v1518
    %v1521 = vadd.f32 %v1515, %v1519
    %v1522 = vadd.f32 %v1516, %v1520
    %v1523 = vmul.f32 %v325, %v1512
    %v1524 = vmul.f32 %v326, %v1512
    %v1525 = vadd.f32 %v1509, %v1523
    %v1526 = vadd.f32 %v1510, %v1524
    %v1527 = vmul.f32 %v297, %v1518
    %v1528 = vmul.f32 %v298, %v1518
    %1531 = vrot.lane.b32.xlu0 %v1527, 127
    %v1532 = vpop.permute.xlu0 %1531
    %1533 = vrot.lane.b32.xlu0 %v1528, 127
    %v1534 = vpop.permute.xlu0 %1533
    %v1537 = vadd.f32 %v1525, %v1532
    %v1538 = vadd.f32 %v1526, %v1534
    %s1539 = sld [smem:[#allocation10 + $0x182]]
    %v1540 = vstv %s1539
    %v1541 = vmul.f32 %v353, %v1540
    %v1542 = vmul.f32 %v354, %v1540
    %v1543 = vadd.f32 %v1521, %v1541
    %v1544 = vadd.f32 %v1522, %v1542
    %s1545 = sld [smem:[#allocation10 + $0x582]]
    %v1546 = vstv %s1545
    %v1547 = vmul.f32 %v381, %v1546
    %v1548 = vmul.f32 %v382, %v1546
    %v1549 = vadd.f32 %v1543, %v1547
    %v1550 = vadd.f32 %v1544, %v1548
    %v1551 = vmul.f32 %v381, %v1540
    %v1552 = vmul.f32 %v382, %v1540
    %v1553 = vadd.f32 %v1537, %v1551
    %v1554 = vadd.f32 %v1538, %v1552
    %v1555 = vmul.f32 %v353, %v1546
    %v1556 = vmul.f32 %v354, %v1546
    %1559 = vrot.lane.b32.xlu0 %v1555, 127
    %v1560 = vpop.permute.xlu0 %1559
    %1561 = vrot.lane.b32.xlu0 %v1556, 127
    %v1562 = vpop.permute.xlu0 %1561
    %v1565 = vadd.f32 %v1553, %v1560
    %v1566 = vadd.f32 %v1554, %v1562
    %s1567 = sld [smem:[#allocation10 + $0x202]]
    %v1568 = vstv %s1567
    %v1569 = vmul.f32 %v409, %v1568
    %v1570 = vmul.f32 %v410, %v1568
    %v1571 = vadd.f32 %v1549, %v1569
    %v1572 = vadd.f32 %v1550, %v1570
    %s1573 = sld [smem:[#allocation10 + $0x602]]
    %v1574 = vstv %s1573
    %v1575 = vmul.f32 %v437, %v1574
    %v1576 = vmul.f32 %v438, %v1574
    %v1577 = vadd.f32 %v1571, %v1575
    %v1578 = vadd.f32 %v1572, %v1576
    %v1579 = vmul.f32 %v437, %v1568
    %v1580 = vmul.f32 %v438, %v1568
    %v1581 = vadd.f32 %v1565, %v1579
    %v1582 = vadd.f32 %v1566, %v1580
    %v1583 = vmul.f32 %v409, %v1574
    %v1584 = vmul.f32 %v410, %v1574
    %1587 = vrot.lane.b32.xlu0 %v1583, 127
    %v1588 = vpop.permute.xlu0 %1587
    %1589 = vrot.lane.b32.xlu0 %v1584, 127
    %v1590 = vpop.permute.xlu0 %1589
    %v1593 = vadd.f32 %v1581, %v1588
    %v1594 = vadd.f32 %v1582, %v1590
    %s1595 = sld [smem:[#allocation10 + $0x282]]
    %v1596 = vstv %s1595
    %v1597 = vmul.f32 %v465, %v1596
    %v1598 = vmul.f32 %v466, %v1596
    %v1599 = vadd.f32 %v1577, %v1597
    %v1600 = vadd.f32 %v1578, %v1598
    %s1601 = sld [smem:[#allocation10 + $0x682]]
    %v1602 = vstv %s1601
    %v1603 = vmul.f32 %v493, %v1602
    %v1604 = vmul.f32 %v494, %v1602
    %v1605 = vadd.f32 %v1599, %v1603
    %v1606 = vadd.f32 %v1600, %v1604
    %v1607 = vmul.f32 %v493, %v1596
    %v1608 = vmul.f32 %v494, %v1596
    %v1609 = vadd.f32 %v1593, %v1607
    %v1610 = vadd.f32 %v1594, %v1608
    %v1611 = vmul.f32 %v465, %v1602
    %v1612 = vmul.f32 %v466, %v1602
    %1615 = vrot.lane.b32.xlu0 %v1611, 127
    %v1616 = vpop.permute.xlu0 %1615
    %1617 = vrot.lane.b32.xlu0 %v1612, 127
    %v1618 = vpop.permute.xlu0 %1617
    %v1621 = vadd.f32 %v1609, %v1616
    %v1622 = vadd.f32 %v1610, %v1618
    %s1623 = sld [smem:[#allocation10 + $0x302]]
    %v1624 = vstv %s1623
    %v1625 = vmul.f32 %v521, %v1624
    %v1626 = vmul.f32 %v522, %v1624
    %v1627 = vadd.f32 %v1605, %v1625
    %v1628 = vadd.f32 %v1606, %v1626
    %s1629 = sld [smem:[#allocation10 + $0x702]]
    %v1630 = vstv %s1629
    %v1631 = vmul.f32 %v549, %v1630
    %v1632 = vmul.f32 %v550, %v1630
    %v1633 = vadd.f32 %v1627, %v1631
    %v1634 = vadd.f32 %v1628, %v1632
    %v1635 = vmul.f32 %v549, %v1624
    %v1636 = vmul.f32 %v550, %v1624
    %v1637 = vadd.f32 %v1621, %v1635
    %v1638 = vadd.f32 %v1622, %v1636
    %v1639 = vmul.f32 %v521, %v1630
    %v1640 = vmul.f32 %v522, %v1630
    %1643 = vrot.lane.b32.xlu0 %v1639, 127
    %v1644 = vpop.permute.xlu0 %1643
    %1645 = vrot.lane.b32.xlu0 %v1640, 127
    %v1646 = vpop.permute.xlu0 %1645
    %v1649 = vadd.f32 %v1637, %v1644
    %v1650 = vadd.f32 %v1638, %v1646
    %s1651 = sld [smem:[#allocation10 + $0x382]]
    %v1652 = vstv %s1651
    %v1653 = vmul.f32 %v577, %v1652
    %v1654 = vmul.f32 %v578, %v1652
    %v1655 = vadd.f32 %v1633, %v1653
    %v1656 = vadd.f32 %v1634, %v1654
    %s1657 = sld [smem:[#allocation10 + $0x782]]
    %v1658 = vstv %s1657
    %v1659 = vmul.f32 %v605, %v1658
    %v1660 = vmul.f32 %v606, %v1658
    %v1661 = vadd.f32 %v1655, %v1659
    %v1662 = vadd.f32 %v1656, %v1660
    %v1663 = vmul.f32 %v605, %v1652
    %v1664 = vmul.f32 %v606, %v1652
    %v1665 = vadd.f32 %v1649, %v1663
    %v1666 = vadd.f32 %v1650, %v1664
    %v1667 = vmul.f32 %v577, %v1658
    %v1668 = vmul.f32 %v578, %v1658
    %1671 = vrot.lane.b32.xlu0 %v1667, 127
    %v1672 = vpop.permute.xlu0 %1671
    %1673 = vrot.lane.b32.xlu0 %v1668, 127
    %v1674 = vpop.permute.xlu0 %1673
    %v1677 = vadd.f32 %v1665, %v1672
    %v1678 = vadd.f32 %v1666, %v1674
    %s1679 = sld [smem:[#allocation11 + $0x2]]
    %v1680 = vstv %s1679
    %v1681 = vadd.f32 %v1661, %v1680
    %v1682 = vadd.f32 %v1662, %v1680
    %v1683 = vadd.f32 %v1677, %v1680
    %v1684 = vadd.f32 %v1678, %v1680
    %s1685 = sld [smem:[#allocation10 + $0x3]]
    %v1686 = vstv %s1685
    %v1687 = vmul.f32 %v185, %v1686
    %v1688 = vmul.f32 %v186, %v1686
    %s1689 = sld [smem:[#allocation10 + $0x403]]
    %v1690 = vstv %s1689
    %v1691 = vmul.f32 %v213, %v1690
    %v1692 = vmul.f32 %v214, %v1690
    %v1693 = vadd.f32 %v1687, %v1691
    %v1694 = vadd.f32 %v1688, %v1692
    %v1695 = vmul.f32 %v213, %v1686
    %v1696 = vmul.f32 %v214, %v1686
    %v1697 = vmul.f32 %v185, %v1690
    %v1698 = vmul.f32 %v186, %v1690
    %1701 = vrot.lane.b32.xlu0 %v1697, 127
    %v1702 = vpop.permute.xlu0 %1701
    %1703 = vrot.lane.b32.xlu0 %v1698, 127
    %v1704 = vpop.permute.xlu0 %1703
    %v1707 = vadd.f32 %v1695, %v1702
    %v1708 = vadd.f32 %v1696, %v1704
    %s1709 = sld [smem:[#allocation10 + $0x83]]
    %v1710 = vstv %s1709
    %v1711 = vmul.f32 %v241, %v1710
    %v1712 = vmul.f32 %v242, %v1710
    %v1713 = vadd.f32 %v1693, %v1711
    %v1714 = vadd.f32 %v1694, %v1712
    %s1715 = sld [smem:[#allocation10 + $0x483]]
    %v1716 = vstv %s1715
    %v1717 = vmul.f32 %v269, %v1716
    %v1718 = vmul.f32 %v270, %v1716
    %v1719 = vadd.f32 %v1713, %v1717
    %v1720 = vadd.f32 %v1714, %v1718
    %v1721 = vmul.f32 %v269, %v1710
    %v1722 = vmul.f32 %v270, %v1710
    %v1723 = vadd.f32 %v1707, %v1721
    %v1724 = vadd.f32 %v1708, %v1722
    %v1725 = vmul.f32 %v241, %v1716
    %v1726 = vmul.f32 %v242, %v1716
    %1729 = vrot.lane.b32.xlu0 %v1725, 127
    %v1730 = vpop.permute.xlu0 %1729
    %1731 = vrot.lane.b32.xlu0 %v1726, 127
    %v1732 = vpop.permute.xlu0 %1731
    %v1735 = vadd.f32 %v1723, %v1730
    %v1736 = vadd.f32 %v1724, %v1732
    %s1737 = sld [smem:[#allocation10 + $0x103]]
    %v1738 = vstv %s1737
    %v1739 = vmul.f32 %v297, %v1738
    %v1740 = vmul.f32 %v298, %v1738
    %v1741 = vadd.f32 %v1719, %v1739
    %v1742 = vadd.f32 %v1720, %v1740
    %s1743 = sld [smem:[#allocation10 + $0x503]]
    %v1744 = vstv %s1743
    %v1745 = vmul.f32 %v325, %v1744
    %v1746 = vmul.f32 %v326, %v1744
    %v1747 = vadd.f32 %v1741, %v1745
    %v1748 = vadd.f32 %v1742, %v1746
    %v1749 = vmul.f32 %v325, %v1738
    %v1750 = vmul.f32 %v326, %v1738
    %v1751 = vadd.f32 %v1735, %v1749
    %v1752 = vadd.f32 %v1736, %v1750
    %v1753 = vmul.f32 %v297, %v1744
    %v1754 = vmul.f32 %v298, %v1744
    %1757 = vrot.lane.b32.xlu0 %v1753, 127
    %v1758 = vpop.permute.xlu0 %1757
    %1759 = vrot.lane.b32.xlu0 %v1754, 127
    %v1760 = vpop.permute.xlu0 %1759
    %v1763 = vadd.f32 %v1751, %v1758
    %v1764 = vadd.f32 %v1752, %v1760
    %s1765 = sld [smem:[#allocation10 + $0x183]]
    %v1766 = vstv %s1765
    %v1767 = vmul.f32 %v353, %v1766
    %v1768 = vmul.f32 %v354, %v1766
    %v1769 = vadd.f32 %v1747, %v1767
    %v1770 = vadd.f32 %v1748, %v1768
    %s1771 = sld [smem:[#allocation10 + $0x583]]
    %v1772 = vstv %s1771
    %v1773 = vmul.f32 %v381, %v1772
    %v1774 = vmul.f32 %v382, %v1772
    %v1775 = vadd.f32 %v1769, %v1773
    %v1776 = vadd.f32 %v1770, %v1774
    %v1777 = vmul.f32 %v381, %v1766
    %v1778 = vmul.f32 %v382, %v1766
    %v1779 = vadd.f32 %v1763, %v1777
    %v1780 = vadd.f32 %v1764, %v1778
    %v1781 = vmul.f32 %v353, %v1772
    %v1782 = vmul.f32 %v354, %v1772
    %1785 = vrot.lane.b32.xlu0 %v1781, 127
    %v1786 = vpop.permute.xlu0 %1785
    %1787 = vrot.lane.b32.xlu0 %v1782, 127
    %v1788 = vpop.permute.xlu0 %1787
    %v1791 = vadd.f32 %v1779, %v1786
    %v1792 = vadd.f32 %v1780, %v1788
    %s1793 = sld [smem:[#allocation10 + $0x203]]
    %v1794 = vstv %s1793
    %v1795 = vmul.f32 %v409, %v1794
    %v1796 = vmul.f32 %v410, %v1794
    %v1797 = vadd.f32 %v1775, %v1795
    %v1798 = vadd.f32 %v1776, %v1796
    %s1799 = sld [smem:[#allocation10 + $0x603]]
    %v1800 = vstv %s1799
    %v1801 = vmul.f32 %v437, %v1800
    %v1802 = vmul.f32 %v438, %v1800
    %v1803 = vadd.f32 %v1797, %v1801
    %v1804 = vadd.f32 %v1798, %v1802
    %v1805 = vmul.f32 %v437, %v1794
    %v1806 = vmul.f32 %v438, %v1794
    %v1807 = vadd.f32 %v1791, %v1805
    %v1808 = vadd.f32 %v1792, %v1806
    %v1809 = vmul.f32 %v409, %v1800
    %v1810 = vmul.f32 %v410, %v1800
    %1813 = vrot.lane.b32.xlu0 %v1809, 127
    %v1814 = vpop.permute.xlu0 %1813
    %1815 = vrot.lane.b32.xlu0 %v1810, 127
    %v1816 = vpop.permute.xlu0 %1815
    %v1819 = vadd.f32 %v1807, %v1814
    %v1820 = vadd.f32 %v1808, %v1816
    %s1821 = sld [smem:[#allocation10 + $0x283]]
    %v1822 = vstv %s1821
    %v1823 = vmul.f32 %v465, %v1822
    %v1824 = vmul.f32 %v466, %v1822
    %v1825 = vadd.f32 %v1803, %v1823
    %v1826 = vadd.f32 %v1804, %v1824
    %s1827 = sld [smem:[#allocation10 + $0x683]]
    %v1828 = vstv %s1827
    %v1829 = vmul.f32 %v493, %v1828
    %v1830 = vmul.f32 %v494, %v1828
    %v1831 = vadd.f32 %v1825, %v1829
    %v1832 = vadd.f32 %v1826, %v1830
    %v1833 = vmul.f32 %v493, %v1822
    %v1834 = vmul.f32 %v494, %v1822
    %v1835 = vadd.f32 %v1819, %v1833
    %v1836 = vadd.f32 %v1820, %v1834
    %v1837 = vmul.f32 %v465, %v1828
    %v1838 = vmul.f32 %v466, %v1828
    %1841 = vrot.lane.b32.xlu0 %v1837, 127
    %v1842 = vpop.permute.xlu0 %1841
    %1843 = vrot.lane.b32.xlu0 %v1838, 127
    %v1844 = vpop.permute.xlu0 %1843
    %v1847 = vadd.f32 %v1835, %v1842
    %v1848 = vadd.f32 %v1836, %v1844
    %s1849 = sld [smem:[#allocation10 + $0x303]]
    %v1850 = vstv %s1849
    %v1851 = vmul.f32 %v521, %v1850
    %v1852 = vmul.f32 %v522, %v1850
    %v1853 = vadd.f32 %v1831, %v1851
    %v1854 = vadd.f32 %v1832, %v1852
    %s1855 = sld [smem:[#allocation10 + $0x703]]
    %v1856 = vstv %s1855
    %v1857 = vmul.f32 %v549, %v1856
    %v1858 = vmul.f32 %v550, %v1856
    %v1859 = vadd.f32 %v1853, %v1857
    %v1860 = vadd.f32 %v1854, %v1858
    %v1861 = vmul.f32 %v549, %v1850
    %v1862 = vmul.f32 %v550, %v1850
    %v1863 = vadd.f32 %v1847, %v1861
    %v1864 = vadd.f32 %v1848, %v1862
    %v1865 = vmul.f32 %v521, %v1856
    %v1866 = vmul.f32 %v522, %v1856
    %1869 = vrot.lane.b32.xlu0 %v1865, 127
    %v1870 = vpop.permute.xlu0 %1869
    %1871 = vrot.lane.b32.xlu0 %v1866, 127
    %v1872 = vpop.permute.xlu0 %1871
    %v1875 = vadd.f32 %v1863, %v1870
    %v1876 = vadd.f32 %v1864, %v1872
    %s1877 = sld [smem:[#allocation10 + $0x383]]
    %v1878 = vstv %s1877
    %v1879 = vmul.f32 %v577, %v1878
    %v1880 = vmul.f32 %v578, %v1878
    %v1881 = vadd.f32 %v1859, %v1879
    %v1882 = vadd.f32 %v1860, %v1880
    %s1883 = sld [smem:[#allocation10 + $0x783]]
    %v1884 = vstv %s1883
    %v1885 = vmul.f32 %v605, %v1884
    %v1886 = vmul.f32 %v606, %v1884
    %v1887 = vadd.f32 %v1881, %v1885
    %v1888 = vadd.f32 %v1882, %v1886
    %v1889 = vmul.f32 %v605, %v1878
    %v1890 = vmul.f32 %v606, %v1878
    %v1891 = vadd.f32 %v1875, %v1889
    %v1892 = vadd.f32 %v1876, %v1890
    %v1893 = vmul.f32 %v577, %v1884
    %v1894 = vmul.f32 %v578, %v1884
    %1897 = vrot.lane.b32.xlu0 %v1893, 127
    %v1898 = vpop.permute.xlu0 %1897
    %1899 = vrot.lane.b32.xlu0 %v1894, 127
    %v1900 = vpop.permute.xlu0 %1899
    %v1903 = vadd.f32 %v1891, %v1898
    %v1904 = vadd.f32 %v1892, %v1900
    %s1905 = sld [smem:[#allocation11 + $0x3]]
    %v1906 = vstv %s1905
    %v1907 = vadd.f32 %v1887, %v1906
    %v1908 = vadd.f32 %v1888, %v1906
    %v1909 = vadd.f32 %v1903, %v1906
    %v1910 = vadd.f32 %v1904, %v1906
    %s1911 = sld [smem:[#allocation10 + $0x4]]
    %v1912 = vstv %s1911
    %v1913 = vmul.f32 %v185, %v1912
    %v1914 = vmul.f32 %v186, %v1912
    %s1915 = sld [smem:[#allocation10 + $0x404]]
    %v1916 = vstv %s1915
    %v1917 = vmul.f32 %v213, %v1916
    %v1918 = vmul.f32 %v214, %v1916
    %v1919 = vadd.f32 %v1913, %v1917
    %v1920 = vadd.f32 %v1914, %v1918
    %v1921 = vmul.f32 %v213, %v1912
    %v1922 = vmul.f32 %v214, %v1912
    %v1923 = vmul.f32 %v185, %v1916
    %v1924 = vmul.f32 %v186, %v1916
    %1927 = vrot.lane.b32.xlu0 %v1923, 127
    %v1928 = vpop.permute.xlu0 %1927
    %1929 = vrot.lane.b32.xlu0 %v1924, 127
    %v1930 = vpop.permute.xlu0 %1929
    %v1933 = vadd.f32 %v1921, %v1928
    %v1934 = vadd.f32 %v1922, %v1930
    %s1935 = sld [smem:[#allocation10 + $0x84]]
    %v1936 = vstv %s1935
    %v1937 = vmul.f32 %v241, %v1936
    %v1938 = vmul.f32 %v242, %v1936
    %v1939 = vadd.f32 %v1919, %v1937
    %v1940 = vadd.f32 %v1920, %v1938
    %s1941 = sld [smem:[#allocation10 + $0x484]]
    %v1942 = vstv %s1941
    %v1943 = vmul.f32 %v269, %v1942
    %v1944 = vmul.f32 %v270, %v1942
    %v1945 = vadd.f32 %v1939, %v1943
    %v1946 = vadd.f32 %v1940, %v1944
    %v1947 = vmul.f32 %v269, %v1936
    %v1948 = vmul.f32 %v270, %v1936
    %v1949 = vadd.f32 %v1933, %v1947
    %v1950 = vadd.f32 %v1934, %v1948
    %v1951 = vmul.f32 %v241, %v1942
    %v1952 = vmul.f32 %v242, %v1942
    %1955 = vrot.lane.b32.xlu0 %v1951, 127
    %v1956 = vpop.permute.xlu0 %1955
    %1957 = vrot.lane.b32.xlu0 %v1952, 127
    %v1958 = vpop.permute.xlu0 %1957
    %v1961 = vadd.f32 %v1949, %v1956
    %v1962 = vadd.f32 %v1950, %v1958
    %s1963 = sld [smem:[#allocation10 + $0x104]]
    %v1964 = vstv %s1963
    %v1965 = vmul.f32 %v297, %v1964
    %v1966 = vmul.f32 %v298, %v1964
    %v1967 = vadd.f32 %v1945, %v1965
    %v1968 = vadd.f32 %v1946, %v1966
    %s1969 = sld [smem:[#allocation10 + $0x504]]
    %v1970 = vstv %s1969
    %v1971 = vmul.f32 %v325, %v1970
    %v1972 = vmul.f32 %v326, %v1970
    %v1973 = vadd.f32 %v1967, %v1971
    %v1974 = vadd.f32 %v1968, %v1972
    %v1975 = vmul.f32 %v325, %v1964
    %v1976 = vmul.f32 %v326, %v1964
    %v1977 = vadd.f32 %v1961, %v1975
    %v1978 = vadd.f32 %v1962, %v1976
    %v1979 = vmul.f32 %v297, %v1970
    %v1980 = vmul.f32 %v298, %v1970
    %1983 = vrot.lane.b32.xlu0 %v1979, 127
    %v1984 = vpop.permute.xlu0 %1983
    %1985 = vrot.lane.b32.xlu0 %v1980, 127
    %v1986 = vpop.permute.xlu0 %1985
    %v1989 = vadd.f32 %v1977, %v1984
    %v1990 = vadd.f32 %v1978, %v1986
    %s1991 = sld [smem:[#allocation10 + $0x184]]
    %v1992 = vstv %s1991
    %v1993 = vmul.f32 %v353, %v1992
    %v1994 = vmul.f32 %v354, %v1992
    %v1995 = vadd.f32 %v1973, %v1993
    %v1996 = vadd.f32 %v1974, %v1994
    %s1997 = sld [smem:[#allocation10 + $0x584]]
    %v1998 = vstv %s1997
    %v1999 = vmul.f32 %v381, %v1998
    %v2000 = vmul.f32 %v382, %v1998
    %v2001 = vadd.f32 %v1995, %v1999
    %v2002 = vadd.f32 %v1996, %v2000
    %v2003 = vmul.f32 %v381, %v1992
    %v2004 = vmul.f32 %v382, %v1992
    %v2005 = vadd.f32 %v1989, %v2003
    %v2006 = vadd.f32 %v1990, %v2004
    %v2007 = vmul.f32 %v353, %v1998
    %v2008 = vmul.f32 %v354, %v1998
    %2011 = vrot.lane.b32.xlu0 %v2007, 127
    %v2012 = vpop.permute.xlu0 %2011
    %2013 = vrot.lane.b32.xlu0 %v2008, 127
    %v2014 = vpop.permute.xlu0 %2013
    %v2017 = vadd.f32 %v2005, %v2012
    %v2018 = vadd.f32 %v2006, %v2014
    %s2019 = sld [smem:[#allocation10 + $0x204]]
    %v2020 = vstv %s2019
    %v2021 = vmul.f32 %v409, %v2020
    %v2022 = vmul.f32 %v410, %v2020
    %v2023 = vadd.f32 %v2001, %v2021
    %v2024 = vadd.f32 %v2002, %v2022
    %s2025 = sld [smem:[#allocation10 + $0x604]]
    %v2026 = vstv %s2025
    %v2027 = vmul.f32 %v437, %v2026
    %v2028 = vmul.f32 %v438, %v2026
    %v2029 = vadd.f32 %v2023, %v2027
    %v2030 = vadd.f32 %v2024, %v2028
    %v2031 = vmul.f32 %v437, %v2020
    %v2032 = vmul.f32 %v438, %v2020
    %v2033 = vadd.f32 %v2017, %v2031
    %v2034 = vadd.f32 %v2018, %v2032
    %v2035 = vmul.f32 %v409, %v2026
    %v2036 = vmul.f32 %v410, %v2026
    %2039 = vrot.lane.b32.xlu0 %v2035, 127
    %v2040 = vpop.permute.xlu0 %2039
    %2041 = vrot.lane.b32.xlu0 %v2036, 127
    %v2042 = vpop.permute.xlu0 %2041
    %v2045 = vadd.f32 %v2033, %v2040
    %v2046 = vadd.f32 %v2034, %v2042
    %s2047 = sld [smem:[#allocation10 + $0x284]]
    %v2048 = vstv %s2047
    %v2049 = vmul.f32 %v465, %v2048
    %v2050 = vmul.f32 %v466, %v2048
    %v2051 = vadd.f32 %v2029, %v2049
    %v2052 = vadd.f32 %v2030, %v2050
    %s2053 = sld [smem:[#allocation10 + $0x684]]
    %v2054 = vstv %s2053
    %v2055 = vmul.f32 %v493, %v2054
    %v2056 = vmul.f32 %v494, %v2054
    %v2057 = vadd.f32 %v2051, %v2055
    %v2058 = vadd.f32 %v2052, %v2056
    %v2059 = vmul.f32 %v493, %v2048
    %v2060 = vmul.f32 %v494, %v2048
    %v2061 = vadd.f32 %v2045, %v2059
    %v2062 = vadd.f32 %v2046, %v2060
    %v2063 = vmul.f32 %v465, %v2054
    %v2064 = vmul.f32 %v466, %v2054
    %2067 = vrot.lane.b32.xlu0 %v2063, 127
    %v2068 = vpop.permute.xlu0 %2067
    %2069 = vrot.lane.b32.xlu0 %v2064, 127
    %v2070 = vpop.permute.xlu0 %2069
    %v2073 = vadd.f32 %v2061, %v2068
    %v2074 = vadd.f32 %v2062, %v2070
    %s2075 = sld [smem:[#allocation10 + $0x304]]
    %v2076 = vstv %s2075
    %v2077 = vmul.f32 %v521, %v2076
    %v2078 = vmul.f32 %v522, %v2076
    %v2079 = vadd.f32 %v2057, %v2077
    %v2080 = vadd.f32 %v2058, %v2078
    %s2081 = sld [smem:[#allocation10 + $0x704]]
    %v2082 = vstv %s2081
    %v2083 = vmul.f32 %v549, %v2082
    %v2084 = vmul.f32 %v550, %v2082
    %v2085 = vadd.f32 %v2079, %v2083
    %v2086 = vadd.f32 %v2080, %v2084
    %v2087 = vmul.f32 %v549, %v2076
    %v2088 = vmul.f32 %v550, %v2076
    %v2089 = vadd.f32 %v2073, %v2087
    %v2090 = vadd.f32 %v2074, %v2088
    %v2091 = vmul.f32 %v521, %v2082
    %v2092 = vmul.f32 %v522, %v2082
    %2095 = vrot.lane.b32.xlu0 %v2091, 127
    %v2096 = vpop.permute.xlu0 %2095
    %2097 = vrot.lane.b32.xlu0 %v2092, 127
    %v2098 = vpop.permute.xlu0 %2097
    %v2101 = vadd.f32 %v2089, %v2096
    %v2102 = vadd.f32 %v2090, %v2098
    %s2103 = sld [smem:[#allocation10 + $0x384]]
    %v2104 = vstv %s2103
    %v2105 = vmul.f32 %v577, %v2104
    %v2106 = vmul.f32 %v578, %v2104
    %v2107 = vadd.f32 %v2085, %v2105
    %v2108 = vadd.f32 %v2086, %v2106
    %s2109 = sld [smem:[#allocation10 + $0x784]]
    %v2110 = vstv %s2109
    %v2111 = vmul.f32 %v605, %v2110
    %v2112 = vmul.f32 %v606, %v2110
    %v2113 = vadd.f32 %v2107, %v2111
    %v2114 = vadd.f32 %v2108, %v2112
    %v2115 = vmul.f32 %v605, %v2104
    %v2116 = vmul.f32 %v606, %v2104
    %v2117 = vadd.f32 %v2101, %v2115
    %v2118 = vadd.f32 %v2102, %v2116
    %v2119 = vmul.f32 %v577, %v2110
    %v2120 = vmul.f32 %v578, %v2110
    %2123 = vrot.lane.b32.xlu0 %v2119, 127
    %v2124 = vpop.permute.xlu0 %2123
    %2125 = vrot.lane.b32.xlu0 %v2120, 127
    %v2126 = vpop.permute.xlu0 %2125
    %v2129 = vadd.f32 %v2117, %v2124
    %v2130 = vadd.f32 %v2118, %v2126
    %s2131 = sld [smem:[#allocation11 + $0x4]]
    %v2132 = vstv %s2131
    %v2133 = vadd.f32 %v2113, %v2132
    %v2134 = vadd.f32 %v2114, %v2132
    %v2135 = vadd.f32 %v2129, %v2132
    %v2136 = vadd.f32 %v2130, %v2132
    %s2137 = sld [smem:[#allocation10 + $0x5]]
    %v2138 = vstv %s2137
    %v2139 = vmul.f32 %v185, %v2138
    %v2140 = vmul.f32 %v186, %v2138
    %s2141 = sld [smem:[#allocation10 + $0x405]]
    %v2142 = vstv %s2141
    %v2143 = vmul.f32 %v213, %v2142
    %v2144 = vmul.f32 %v214, %v2142
    %v2145 = vadd.f32 %v2139, %v2143
    %v2146 = vadd.f32 %v2140, %v2144
    %v2147 = vmul.f32 %v213, %v2138
    %v2148 = vmul.f32 %v214, %v2138
    %v2149 = vmul.f32 %v185, %v2142
    %v2150 = vmul.f32 %v186, %v2142
    %2153 = vrot.lane.b32.xlu0 %v2149, 127
    %v2154 = vpop.permute.xlu0 %2153
    %2155 = vrot.lane.b32.xlu0 %v2150, 127
    %v2156 = vpop.permute.xlu0 %2155
    %v2159 = vadd.f32 %v2147, %v2154
    %v2160 = vadd.f32 %v2148, %v2156
    %s2161 = sld [smem:[#allocation10 + $0x85]]
    %v2162 = vstv %s2161
    %v2163 = vmul.f32 %v241, %v2162
    %v2164 = vmul.f32 %v242, %v2162
    %v2165 = vadd.f32 %v2145, %v2163
    %v2166 = vadd.f32 %v2146, %v2164
    %s2167 = sld [smem:[#allocation10 + $0x485]]
    %v2168 = vstv %s2167
    %v2169 = vmul.f32 %v269, %v2168
    %v2170 = vmul.f32 %v270, %v2168
    %v2171 = vadd.f32 %v2165, %v2169
    %v2172 = vadd.f32 %v2166, %v2170
    %v2173 = vmul.f32 %v269, %v2162
    %v2174 = vmul.f32 %v270, %v2162
    %v2175 = vadd.f32 %v2159, %v2173
    %v2176 = vadd.f32 %v2160, %v2174
    %v2177 = vmul.f32 %v241, %v2168
    %v2178 = vmul.f32 %v242, %v2168
    %2181 = vrot.lane.b32.xlu0 %v2177, 127
    %v2182 = vpop.permute.xlu0 %2181
    %2183 = vrot.lane.b32.xlu0 %v2178, 127
    %v2184 = vpop.permute.xlu0 %2183
    %v2187 = vadd.f32 %v2175, %v2182
    %v2188 = vadd.f32 %v2176, %v2184
    %s2189 = sld [smem:[#allocation10 + $0x105]]
    %v2190 = vstv %s2189
    %v2191 = vmul.f32 %v297, %v2190
    %v2192 = vmul.f32 %v298, %v2190
    %v2193 = vadd.f32 %v2171, %v2191
    %v2194 = vadd.f32 %v2172, %v2192
    %s2195 = sld [smem:[#allocation10 + $0x505]]
    %v2196 = vstv %s2195
    %v2197 = vmul.f32 %v325, %v2196
    %v2198 = vmul.f32 %v326, %v2196
    %v2199 = vadd.f32 %v2193, %v2197
    %v2200 = vadd.f32 %v2194, %v2198
    %v2201 = vmul.f32 %v325, %v2190
    %v2202 = vmul.f32 %v326, %v2190
    %v2203 = vadd.f32 %v2187, %v2201
    %v2204 = vadd.f32 %v2188, %v2202
    %v2205 = vmul.f32 %v297, %v2196
    %v2206 = vmul.f32 %v298, %v2196
    %2209 = vrot.lane.b32.xlu0 %v2205, 127
    %v2210 = vpop.permute.xlu0 %2209
    %2211 = vrot.lane.b32.xlu0 %v2206, 127
    %v2212 = vpop.permute.xlu0 %2211
    %v2215 = vadd.f32 %v2203, %v2210
    %v2216 = vadd.f32 %v2204, %v2212
    %s2217 = sld [smem:[#allocation10 + $0x185]]
    %v2218 = vstv %s2217
    %v2219 = vmul.f32 %v353, %v2218
    %v2220 = vmul.f32 %v354, %v2218
    %v2221 = vadd.f32 %v2199, %v2219
    %v2222 = vadd.f32 %v2200, %v2220
    %s2223 = sld [smem:[#allocation10 + $0x585]]
    %v2224 = vstv %s2223
    %v2225 = vmul.f32 %v381, %v2224
    %v2226 = vmul.f32 %v382, %v2224
    %v2227 = vadd.f32 %v2221, %v2225
    %v2228 = vadd.f32 %v2222, %v2226
    %v2229 = vmul.f32 %v381, %v2218
    %v2230 = vmul.f32 %v382, %v2218
    %v2231 = vadd.f32 %v2215, %v2229
    %v2232 = vadd.f32 %v2216, %v2230
    %v2233 = vmul.f32 %v353, %v2224
    %v2234 = vmul.f32 %v354, %v2224
    %2237 = vrot.lane.b32.xlu0 %v2233, 127
    %v2238 = vpop.permute.xlu0 %2237
    %2239 = vrot.lane.b32.xlu0 %v2234, 127
    %v2240 = vpop.permute.xlu0 %2239
    %v2243 = vadd.f32 %v2231, %v2238
    %v2244 = vadd.f32 %v2232, %v2240
    %s2245 = sld [smem:[#allocation10 + $0x205]]
    %v2246 = vstv %s2245
    %v2247 = vmul.f32 %v409, %v2246
    %v2248 = vmul.f32 %v410, %v2246
    %v2249 = vadd.f32 %v2227, %v2247
    %v2250 = vadd.f32 %v2228, %v2248
    %s2251 = sld [smem:[#allocation10 + $0x605]]
    %v2252 = vstv %s2251
    %v2253 = vmul.f32 %v437, %v2252
    %v2254 = vmul.f32 %v438, %v2252
    %v2255 = vadd.f32 %v2249, %v2253
    %v2256 = vadd.f32 %v2250, %v2254
    %v2257 = vmul.f32 %v437, %v2246
    %v2258 = vmul.f32 %v438, %v2246
    %v2259 = vadd.f32 %v2243, %v2257
    %v2260 = vadd.f32 %v2244, %v2258
    %v2261 = vmul.f32 %v409, %v2252
    %v2262 = vmul.f32 %v410, %v2252
    %2265 = vrot.lane.b32.xlu0 %v2261, 127
    %v2266 = vpop.permute.xlu0 %2265
    %2267 = vrot.lane.b32.xlu0 %v2262, 127
    %v2268 = vpop.permute.xlu0 %2267
    %v2271 = vadd.f32 %v2259, %v2266
    %v2272 = vadd.f32 %v2260, %v2268
    %s2273 = sld [smem:[#allocation10 + $0x285]]
    %v2274 = vstv %s2273
    %v2275 = vmul.f32 %v465, %v2274
    %v2276 = vmul.f32 %v466, %v2274
    %v2277 = vadd.f32 %v2255, %v2275
    %v2278 = vadd.f32 %v2256, %v2276
    %s2279 = sld [smem:[#allocation10 + $0x685]]
    %v2280 = vstv %s2279
    %v2281 = vmul.f32 %v493, %v2280
    %v2282 = vmul.f32 %v494, %v2280
    %v2283 = vadd.f32 %v2277, %v2281
    %v2284 = vadd.f32 %v2278, %v2282
    %v2285 = vmul.f32 %v493, %v2274
    %v2286 = vmul.f32 %v494, %v2274
    %v2287 = vadd.f32 %v2271, %v2285
    %v2288 = vadd.f32 %v2272, %v2286
    %v2289 = vmul.f32 %v465, %v2280
    %v2290 = vmul.f32 %v466, %v2280
    %2293 = vrot.lane.b32.xlu0 %v2289, 127
    %v2294 = vpop.permute.xlu0 %2293
    %2295 = vrot.lane.b32.xlu0 %v2290, 127
    %v2296 = vpop.permute.xlu0 %2295
    %v2299 = vadd.f32 %v2287, %v2294
    %v2300 = vadd.f32 %v2288, %v2296
    %s2301 = sld [smem:[#allocation10 + $0x305]]
    %v2302 = vstv %s2301
    %v2303 = vmul.f32 %v521, %v2302
    %v2304 = vmul.f32 %v522, %v2302
    %v2305 = vadd.f32 %v2283, %v2303
    %v2306 = vadd.f32 %v2284, %v2304
    %s2307 = sld [smem:[#allocation10 + $0x705]]
    %v2308 = vstv %s2307
    %v2309 = vmul.f32 %v549, %v2308
    %v2310 = vmul.f32 %v550, %v2308
    %v2311 = vadd.f32 %v2305, %v2309
    %v2312 = vadd.f32 %v2306, %v2310
    %v2313 = vmul.f32 %v549, %v2302
    %v2314 = vmul.f32 %v550, %v2302
    %v2315 = vadd.f32 %v2299, %v2313
    %v2316 = vadd.f32 %v2300, %v2314
    %v2317 = vmul.f32 %v521, %v2308
    %v2318 = vmul.f32 %v522, %v2308
    %2321 = vrot.lane.b32.xlu0 %v2317, 127
    %v2322 = vpop.permute.xlu0 %2321
    %2323 = vrot.lane.b32.xlu0 %v2318, 127
    %v2324 = vpop.permute.xlu0 %2323
    %v2327 = vadd.f32 %v2315, %v2322
    %v2328 = vadd.f32 %v2316, %v2324
    %s2329 = sld [smem:[#allocation10 + $0x385]]
    %v2330 = vstv %s2329
    %v2331 = vmul.f32 %v577, %v2330
    %v2332 = vmul.f32 %v578, %v2330
    %v2333 = vadd.f32 %v2311, %v2331
    %v2334 = vadd.f32 %v2312, %v2332
    %s2335 = sld [smem:[#allocation10 + $0x785]]
    %v2336 = vstv %s2335
    %v2337 = vmul.f32 %v605, %v2336
    %v2338 = vmul.f32 %v606, %v2336
    %v2339 = vadd.f32 %v2333, %v2337
    %v2340 = vadd.f32 %v2334, %v2338
    %v2341 = vmul.f32 %v605, %v2330
    %v2342 = vmul.f32 %v606, %v2330
    %v2343 = vadd.f32 %v2327, %v2341
    %v2344 = vadd.f32 %v2328, %v2342
    %v2345 = vmul.f32 %v577, %v2336
    %v2346 = vmul.f32 %v578, %v2336
    %2349 = vrot.lane.b32.xlu0 %v2345, 127
    %v2350 = vpop.permute.xlu0 %2349
    %2351 = vrot.lane.b32.xlu0 %v2346, 127
    %v2352 = vpop.permute.xlu0 %2351
    %v2355 = vadd.f32 %v2343, %v2350
    %v2356 = vadd.f32 %v2344, %v2352
    %s2357 = sld [smem:[#allocation11 + $0x5]]
    %v2358 = vstv %s2357
    %v2359 = vadd.f32 %v2339, %v2358
    %v2360 = vadd.f32 %v2340, %v2358
    %v2361 = vadd.f32 %v2355, %v2358
    %v2362 = vadd.f32 %v2356, %v2358
    %s2363 = sld [smem:[#allocation10 + $0x6]]
    %v2364 = vstv %s2363
    %v2365 = vmul.f32 %v185, %v2364
    %v2366 = vmul.f32 %v186, %v2364
    %s2367 = sld [smem:[#allocation10 + $0x406]]
    %v2368 = vstv %s2367
    %v2369 = vmul.f32 %v213, %v2368
    %v2370 = vmul.f32 %v214, %v2368
    %v2371 = vadd.f32 %v2365, %v2369
    %v2372 = vadd.f32 %v2366, %v2370
    %v2373 = vmul.f32 %v213, %v2364
    %v2374 = vmul.f32 %v214, %v2364
    %v2375 = vmul.f32 %v185, %v2368
    %v2376 = vmul.f32 %v186, %v2368
    %2379 = vrot.lane.b32.xlu0 %v2375, 127
    %v2380 = vpop.permute.xlu0 %2379
    %2381 = vrot.lane.b32.xlu0 %v2376, 127
    %v2382 = vpop.permute.xlu0 %2381
    %v2385 = vadd.f32 %v2373, %v2380
    %v2386 = vadd.f32 %v2374, %v2382
    %s2387 = sld [smem:[#allocation10 + $0x86]]
    %v2388 = vstv %s2387
    %v2389 = vmul.f32 %v241, %v2388
    %v2390 = vmul.f32 %v242, %v2388
    %v2391 = vadd.f32 %v2371, %v2389
    %v2392 = vadd.f32 %v2372, %v2390
    %s2393 = sld [smem:[#allocation10 + $0x486]]
    %v2394 = vstv %s2393
    %v2395 = vmul.f32 %v269, %v2394
    %v2396 = vmul.f32 %v270, %v2394
    %v2397 = vadd.f32 %v2391, %v2395
    %v2398 = vadd.f32 %v2392, %v2396
    %v2399 = vmul.f32 %v269, %v2388
    %v2400 = vmul.f32 %v270, %v2388
    %v2401 = vadd.f32 %v2385, %v2399
    %v2402 = vadd.f32 %v2386, %v2400
    %v2403 = vmul.f32 %v241, %v2394
    %v2404 = vmul.f32 %v242, %v2394
    %2407 = vrot.lane.b32.xlu0 %v2403, 127
    %v2408 = vpop.permute.xlu0 %2407
    %2409 = vrot.lane.b32.xlu0 %v2404, 127
    %v2410 = vpop.permute.xlu0 %2409
    %v2413 = vadd.f32 %v2401, %v2408
    %v2414 = vadd.f32 %v2402, %v2410
    %s2415 = sld [smem:[#allocation10 + $0x106]]
    %v2416 = vstv %s2415
    %v2417 = vmul.f32 %v297, %v2416
    %v2418 = vmul.f32 %v298, %v2416
    %v2419 = vadd.f32 %v2397, %v2417
    %v2420 = vadd.f32 %v2398, %v2418
    %s2421 = sld [smem:[#allocation10 + $0x506]]
    %v2422 = vstv %s2421
    %v2423 = vmul.f32 %v325, %v2422
    %v2424 = vmul.f32 %v326, %v2422
    %v2425 = vadd.f32 %v2419, %v2423
    %v2426 = vadd.f32 %v2420, %v2424
    %v2427 = vmul.f32 %v325, %v2416
    %v2428 = vmul.f32 %v326, %v2416
    %v2429 = vadd.f32 %v2413, %v2427
    %v2430 = vadd.f32 %v2414, %v2428
    %v2431 = vmul.f32 %v297, %v2422
    %v2432 = vmul.f32 %v298, %v2422
    %2435 = vrot.lane.b32.xlu0 %v2431, 127
    %v2436 = vpop.permute.xlu0 %2435
    %2437 = vrot.lane.b32.xlu0 %v2432, 127
    %v2438 = vpop.permute.xlu0 %2437
    %v2441 = vadd.f32 %v2429, %v2436
    %v2442 = vadd.f32 %v2430, %v2438
    %s2443 = sld [smem:[#allocation10 + $0x186]]
    %v2444 = vstv %s2443
    %v2445 = vmul.f32 %v353, %v2444
    %v2446 = vmul.f32 %v354, %v2444
    %v2447 = vadd.f32 %v2425, %v2445
    %v2448 = vadd.f32 %v2426, %v2446
    %s2449 = sld [smem:[#allocation10 + $0x586]]
    %v2450 = vstv %s2449
    %v2451 = vmul.f32 %v381, %v2450
    %v2452 = vmul.f32 %v382, %v2450
    %v2453 = vadd.f32 %v2447, %v2451
    %v2454 = vadd.f32 %v2448, %v2452
    %v2455 = vmul.f32 %v381, %v2444
    %v2456 = vmul.f32 %v382, %v2444
    %v2457 = vadd.f32 %v2441, %v2455
    %v2458 = vadd.f32 %v2442, %v2456
    %v2459 = vmul.f32 %v353, %v2450
    %v2460 = vmul.f32 %v354, %v2450
    %2463 = vrot.lane.b32.xlu0 %v2459, 127
    %v2464 = vpop.permute.xlu0 %2463
    %2465 = vrot.lane.b32.xlu0 %v2460, 127
    %v2466 = vpop.permute.xlu0 %2465
    %v2469 = vadd.f32 %v2457, %v2464
    %v2470 = vadd.f32 %v2458, %v2466
    %s2471 = sld [smem:[#allocation10 + $0x206]]
    %v2472 = vstv %s2471
    %v2473 = vmul.f32 %v409, %v2472
    %v2474 = vmul.f32 %v410, %v2472
    %v2475 = vadd.f32 %v2453, %v2473
    %v2476 = vadd.f32 %v2454, %v2474
    %s2477 = sld [smem:[#allocation10 + $0x606]]
    %v2478 = vstv %s2477
    %v2479 = vmul.f32 %v437, %v2478
    %v2480 = vmul.f32 %v438, %v2478
    %v2481 = vadd.f32 %v2475, %v2479
    %v2482 = vadd.f32 %v2476, %v2480
    %v2483 = vmul.f32 %v437, %v2472
    %v2484 = vmul.f32 %v438, %v2472
    %v2485 = vadd.f32 %v2469, %v2483
    %v2486 = vadd.f32 %v2470, %v2484
    %v2487 = vmul.f32 %v409, %v2478
    %v2488 = vmul.f32 %v410, %v2478
    %2491 = vrot.lane.b32.xlu0 %v2487, 127
    %v2492 = vpop.permute.xlu0 %2491
    %2493 = vrot.lane.b32.xlu0 %v2488, 127
    %v2494 = vpop.permute.xlu0 %2493
    %v2497 = vadd.f32 %v2485, %v2492
    %v2498 = vadd.f32 %v2486, %v2494
    %s2499 = sld [smem:[#allocation10 + $0x286]]
    %v2500 = vstv %s2499
    %v2501 = vmul.f32 %v465, %v2500
    %v2502 = vmul.f32 %v466, %v2500
    %v2503 = vadd.f32 %v2481, %v2501
    %v2504 = vadd.f32 %v2482, %v2502
    %s2505 = sld [smem:[#allocation10 + $0x686]]
    %v2506 = vstv %s2505
    %v2507 = vmul.f32 %v493, %v2506
    %v2508 = vmul.f32 %v494, %v2506
    %v2509 = vadd.f32 %v2503, %v2507
    %v2510 = vadd.f32 %v2504, %v2508
    %v2511 = vmul.f32 %v493, %v2500
    %v2512 = vmul.f32 %v494, %v2500
    %v2513 = vadd.f32 %v2497, %v2511
    %v2514 = vadd.f32 %v2498, %v2512
    %v2515 = vmul.f32 %v465, %v2506
    %v2516 = vmul.f32 %v466, %v2506
    %2519 = vrot.lane.b32.xlu0 %v2515, 127
    %v2520 = vpop.permute.xlu0 %2519
    %2521 = vrot.lane.b32.xlu0 %v2516, 127
    %v2522 = vpop.permute.xlu0 %2521
    %v2525 = vadd.f32 %v2513, %v2520
    %v2526 = vadd.f32 %v2514, %v2522
    %s2527 = sld [smem:[#allocation10 + $0x306]]
    %v2528 = vstv %s2527
    %v2529 = vmul.f32 %v521, %v2528
    %v2530 = vmul.f32 %v522, %v2528
    %v2531 = vadd.f32 %v2509, %v2529
    %v2532 = vadd.f32 %v2510, %v2530
    %s2533 = sld [smem:[#allocation10 + $0x706]]
    %v2534 = vstv %s2533
    %v2535 = vmul.f32 %v549, %v2534
    %v2536 = vmul.f32 %v550, %v2534
    %v2537 = vadd.f32 %v2531, %v2535
    %v2538 = vadd.f32 %v2532, %v2536
    %v2539 = vmul.f32 %v549, %v2528
    %v2540 = vmul.f32 %v550, %v2528
    %v2541 = vadd.f32 %v2525, %v2539
    %v2542 = vadd.f32 %v2526, %v2540
    %v2543 = vmul.f32 %v521, %v2534
    %v2544 = vmul.f32 %v522, %v2534
    %2547 = vrot.lane.b32.xlu0 %v2543, 127
    %v2548 = vpop.permute.xlu0 %2547
    %2549 = vrot.lane.b32.xlu0 %v2544, 127
    %v2550 = vpop.permute.xlu0 %2549
    %v2553 = vadd.f32 %v2541, %v2548
    %v2554 = vadd.f32 %v2542, %v2550
    %s2555 = sld [smem:[#allocation10 + $0x386]]
    %v2556 = vstv %s2555
    %v2557 = vmul.f32 %v577, %v2556
    %v2558 = vmul.f32 %v578, %v2556
    %v2559 = vadd.f32 %v2537, %v2557
    %v2560 = vadd.f32 %v2538, %v2558
    %s2561 = sld [smem:[#allocation10 + $0x786]]
    %v2562 = vstv %s2561
    %v2563 = vmul.f32 %v605, %v2562
    %v2564 = vmul.f32 %v606, %v2562
    %v2565 = vadd.f32 %v2559, %v2563
    %v2566 = vadd.f32 %v2560, %v2564
    %v2567 = vmul.f32 %v605, %v2556
    %v2568 = vmul.f32 %v606, %v2556
    %v2569 = vadd.f32 %v2553, %v2567
    %v2570 = vadd.f32 %v2554, %v2568
    %v2571 = vmul.f32 %v577, %v2562
    %v2572 = vmul.f32 %v578, %v2562
    %2575 = vrot.lane.b32.xlu0 %v2571, 127
    %v2576 = vpop.permute.xlu0 %2575
    %2577 = vrot.lane.b32.xlu0 %v2572, 127
    %v2578 = vpop.permute.xlu0 %2577
    %v2581 = vadd.f32 %v2569, %v2576
    %v2582 = vadd.f32 %v2570, %v2578
    %s2583 = sld [smem:[#allocation11 + $0x6]]
    %v2584 = vstv %s2583
    %v2585 = vadd.f32 %v2565, %v2584
    %v2586 = vadd.f32 %v2566, %v2584
    %v2587 = vadd.f32 %v2581, %v2584
    %v2588 = vadd.f32 %v2582, %v2584
    %s2589 = sld [smem:[#allocation10 + $0x7]]
    %v2590 = vstv %s2589
    %v2591 = vmul.f32 %v185, %v2590
    %v2592 = vmul.f32 %v186, %v2590
    %s2593 = sld [smem:[#allocation10 + $0x407]]
    %v2594 = vstv %s2593
    %v2595 = vmul.f32 %v213, %v2594
    %v2596 = vmul.f32 %v214, %v2594
    %v2597 = vadd.f32 %v2591, %v2595
    %v2598 = vadd.f32 %v2592, %v2596
    %v2599 = vmul.f32 %v213, %v2590
    %v2600 = vmul.f32 %v214, %v2590
    %v2601 = vmul.f32 %v185, %v2594
    %v2602 = vmul.f32 %v186, %v2594
    %2605 = vrot.lane.b32.xlu0 %v2601, 127
    %v2606 = vpop.permute.xlu0 %2605
    %2607 = vrot.lane.b32.xlu0 %v2602, 127
    %v2608 = vpop.permute.xlu0 %2607
    %v2611 = vadd.f32 %v2599, %v2606
    %v2612 = vadd.f32 %v2600, %v2608
    %s2613 = sld [smem:[#allocation10 + $0x87]]
    %v2614 = vstv %s2613
    %v2615 = vmul.f32 %v241, %v2614
    %v2616 = vmul.f32 %v242, %v2614
    %v2617 = vadd.f32 %v2597, %v2615
    %v2618 = vadd.f32 %v2598, %v2616
    %s2619 = sld [smem:[#allocation10 + $0x487]]
    %v2620 = vstv %s2619
    %v2621 = vmul.f32 %v269, %v2620
    %v2622 = vmul.f32 %v270, %v2620
    %v2623 = vadd.f32 %v2617, %v2621
    %v2624 = vadd.f32 %v2618, %v2622
    %v2625 = vmul.f32 %v269, %v2614
    %v2626 = vmul.f32 %v270, %v2614
    %v2627 = vadd.f32 %v2611, %v2625
    %v2628 = vadd.f32 %v2612, %v2626
    %v2629 = vmul.f32 %v241, %v2620
    %v2630 = vmul.f32 %v242, %v2620
    %2633 = vrot.lane.b32.xlu0 %v2629, 127
    %v2634 = vpop.permute.xlu0 %2633
    %2635 = vrot.lane.b32.xlu0 %v2630, 127
    %v2636 = vpop.permute.xlu0 %2635
    %v2639 = vadd.f32 %v2627, %v2634
    %v2640 = vadd.f32 %v2628, %v2636
    %s2641 = sld [smem:[#allocation10 + $0x107]]
    %v2642 = vstv %s2641
    %v2643 = vmul.f32 %v297, %v2642
    %v2644 = vmul.f32 %v298, %v2642
    %v2645 = vadd.f32 %v2623, %v2643
    %v2646 = vadd.f32 %v2624, %v2644
    %s2647 = sld [smem:[#allocation10 + $0x507]]
    %v2648 = vstv %s2647
    %v2649 = vmul.f32 %v325, %v2648
    %v2650 = vmul.f32 %v326, %v2648
    %v2651 = vadd.f32 %v2645, %v2649
    %v2652 = vadd.f32 %v2646, %v2650
    %v2653 = vmul.f32 %v325, %v2642
    %v2654 = vmul.f32 %v326, %v2642
    %v2655 = vadd.f32 %v2639, %v2653
    %v2656 = vadd.f32 %v2640, %v2654
    %v2657 = vmul.f32 %v297, %v2648
    %v2658 = vmul.f32 %v298, %v2648
    %2661 = vrot.lane.b32.xlu0 %v2657, 127
    %v2662 = vpop.permute.xlu0 %2661
    %2663 = vrot.lane.b32.xlu0 %v2658, 127
    %v2664 = vpop.permute.xlu0 %2663
    %v2667 = vadd.f32 %v2655, %v2662
    %v2668 = vadd.f32 %v2656, %v2664
    %s2669 = sld [smem:[#allocation10 + $0x187]]
    %v2670 = vstv %s2669
    %v2671 = vmul.f32 %v353, %v2670
    %v2672 = vmul.f32 %v354, %v2670
    %v2673 = vadd.f32 %v2651, %v2671
    %v2674 = vadd.f32 %v2652, %v2672
    %s2675 = sld [smem:[#allocation10 + $0x587]]
    %v2676 = vstv %s2675
    %v2677 = vmul.f32 %v381, %v2676
    %v2678 = vmul.f32 %v382, %v2676
    %v2679 = vadd.f32 %v2673, %v2677
    %v2680 = vadd.f32 %v2674, %v2678
    %v2681 = vmul.f32 %v381, %v2670
    %v2682 = vmul.f32 %v382, %v2670
    %v2683 = vadd.f32 %v2667, %v2681
    %v2684 = vadd.f32 %v2668, %v2682
    %v2685 = vmul.f32 %v353, %v2676
    %v2686 = vmul.f32 %v354, %v2676
    %2689 = vrot.lane.b32.xlu0 %v2685, 127
    %v2690 = vpop.permute.xlu0 %2689
    %2691 = vrot.lane.b32.xlu0 %v2686, 127
    %v2692 = vpop.permute.xlu0 %2691
    %v2695 = vadd.f32 %v2683, %v2690
    %v2696 = vadd.f32 %v2684, %v2692
    %s2697 = sld [smem:[#allocation10 + $0x207]]
    %v2698 = vstv %s2697
    %v2699 = vmul.f32 %v409, %v2698
    %v2700 = vmul.f32 %v410, %v2698
    %v2701 = vadd.f32 %v2679, %v2699
    %v2702 = vadd.f32 %v2680, %v2700
    %s2703 = sld [smem:[#allocation10 + $0x607]]
    %v2704 = vstv %s2703
    %v2705 = vmul.f32 %v437, %v2704
    %v2706 = vmul.f32 %v438, %v2704
    %v2707 = vadd.f32 %v2701, %v2705
    %v2708 = vadd.f32 %v2702, %v2706
    %v2709 = vmul.f32 %v437, %v2698
    %v2710 = vmul.f32 %v438, %v2698
    %v2711 = vadd.f32 %v2695, %v2709
    %v2712 = vadd.f32 %v2696, %v2710
    %v2713 = vmul.f32 %v409, %v2704
    %v2714 = vmul.f32 %v410, %v2704
    %2717 = vrot.lane.b32.xlu0 %v2713, 127
    %v2718 = vpop.permute.xlu0 %2717
    %2719 = vrot.lane.b32.xlu0 %v2714, 127
    %v2720 = vpop.permute.xlu0 %2719
    %v2723 = vadd.f32 %v2711, %v2718
    %v2724 = vadd.f32 %v2712, %v2720
    %s2725 = sld [smem:[#allocation10 + $0x287]]
    %v2726 = vstv %s2725
    %v2727 = vmul.f32 %v465, %v2726
    %v2728 = vmul.f32 %v466, %v2726
    %v2729 = vadd.f32 %v2707, %v2727
    %v2730 = vadd.f32 %v2708, %v2728
    %s2731 = sld [smem:[#allocation10 + $0x687]]
    %v2732 = vstv %s2731
    %v2733 = vmul.f32 %v493, %v2732
    %v2734 = vmul.f32 %v494, %v2732
    %v2735 = vadd.f32 %v2729, %v2733
    %v2736 = vadd.f32 %v2730, %v2734
    %v2737 = vmul.f32 %v493, %v2726
    %v2738 = vmul.f32 %v494, %v2726
    %v2739 = vadd.f32 %v2723, %v2737
    %v2740 = vadd.f32 %v2724, %v2738
    %v2741 = vmul.f32 %v465, %v2732
    %v2742 = vmul.f32 %v466, %v2732
    %2745 = vrot.lane.b32.xlu0 %v2741, 127
    %v2746 = vpop.permute.xlu0 %2745
    %2747 = vrot.lane.b32.xlu0 %v2742, 127
    %v2748 = vpop.permute.xlu0 %2747
    %v2751 = vadd.f32 %v2739, %v2746
    %v2752 = vadd.f32 %v2740, %v2748
    %s2753 = sld [smem:[#allocation10 + $0x307]]
    %v2754 = vstv %s2753
    %v2755 = vmul.f32 %v521, %v2754
    %v2756 = vmul.f32 %v522, %v2754
    %v2757 = vadd.f32 %v2735, %v2755
    %v2758 = vadd.f32 %v2736, %v2756
    %s2759 = sld [smem:[#allocation10 + $0x707]]
    %v2760 = vstv %s2759
    %v2761 = vmul.f32 %v549, %v2760
    %v2762 = vmul.f32 %v550, %v2760
    %v2763 = vadd.f32 %v2757, %v2761
    %v2764 = vadd.f32 %v2758, %v2762
    %v2765 = vmul.f32 %v549, %v2754
    %v2766 = vmul.f32 %v550, %v2754
    %v2767 = vadd.f32 %v2751, %v2765
    %v2768 = vadd.f32 %v2752, %v2766
    %v2769 = vmul.f32 %v521, %v2760
    %v2770 = vmul.f32 %v522, %v2760
    %2773 = vrot.lane.b32.xlu0 %v2769, 127
    %v2774 = vpop.permute.xlu0 %2773
    %2775 = vrot.lane.b32.xlu0 %v2770, 127
    %v2776 = vpop.permute.xlu0 %2775
    %v2779 = vadd.f32 %v2767, %v2774
    %v2780 = vadd.f32 %v2768, %v2776
    %s2781 = sld [smem:[#allocation10 + $0x387]]
    %v2782 = vstv %s2781
    %v2783 = vmul.f32 %v577, %v2782
    %v2784 = vmul.f32 %v578, %v2782
    %v2785 = vadd.f32 %v2763, %v2783
    %v2786 = vadd.f32 %v2764, %v2784
    %s2787 = sld [smem:[#allocation10 + $0x787]]
    %v2788 = vstv %s2787
    %v2789 = vmul.f32 %v605, %v2788
    %v2790 = vmul.f32 %v606, %v2788
    %v2791 = vadd.f32 %v2785, %v2789
    %v2792 = vadd.f32 %v2786, %v2790
    %v2793 = vmul.f32 %v605, %v2782
    %v2794 = vmul.f32 %v606, %v2782
    %v2795 = vadd.f32 %v2779, %v2793
    %v2796 = vadd.f32 %v2780, %v2794
    %v2797 = vmul.f32 %v577, %v2788
    %v2798 = vmul.f32 %v578, %v2788
    %2801 = vrot.lane.b32.xlu0 %v2797, 127
    %v2802 = vpop.permute.xlu0 %2801
    %2803 = vrot.lane.b32.xlu0 %v2798, 127
    %v2804 = vpop.permute.xlu0 %2803
    %v2807 = vadd.f32 %v2795, %v2802
    %v2808 = vadd.f32 %v2796, %v2804
    %s2809 = sld [smem:[#allocation11 + $0x7]]
    %v2810 = vstv %s2809
    %v2811 = vadd.f32 %v2791, %v2810
    %v2812 = vadd.f32 %v2792, %v2810
    %v2813 = vadd.f32 %v2807, %v2810
    %v2814 = vadd.f32 %v2808, %v2810
    %2817 = vrot.lane.b32.xlu0 %v213, 7
    %v2818 = vpop.permute.xlu0 %2817
    %2819 = vrot.lane.b32.xlu0 %v214, 7
    %v2820 = vpop.permute.xlu0 %2819
    %2825 = vrot.lane.b32.xlu0 %v241, 14
    %v2826 = vpop.permute.xlu0 %2825
    %2827 = vrot.lane.b32.xlu0 %v242, 14
    %v2828 = vpop.permute.xlu0 %2827
    %2833 = vrot.lane.b32.xlu0 %v269, 21
    %v2834 = vpop.permute.xlu0 %2833
    %2835 = vrot.lane.b32.xlu0 %v270, 21
    %v2836 = vpop.permute.xlu0 %2835
    %2841 = vrot.lane.b32.xlu0 %v297, 28
    %v2842 = vpop.permute.xlu0 %2841
    %2843 = vrot.lane.b32.xlu0 %v298, 28
    %v2844 = vpop.permute.xlu0 %2843
    %2849 = vrot.lane.b32.xlu0 %v325, 35
    %v2850 = vpop.permute.xlu0 %2849
    %2851 = vrot.lane.b32.xlu0 %v326, 35
    %v2852 = vpop.permute.xlu0 %2851
    %2857 = vrot.lane.b32.xlu0 %v353, 42
    %v2858 = vpop.permute.xlu0 %2857
    %2859 = vrot.lane.b32.xlu0 %v354, 42
    %v2860 = vpop.permute.xlu0 %2859
    %2865 = vrot.lane.b32.xlu0 %v381, 49
    %v2866 = vpop.permute.xlu0 %2865
    %2867 = vrot.lane.b32.xlu0 %v382, 49
    %v2868 = vpop.permute.xlu0 %2867
    %2873 = vrot.lane.b32.xlu0 %v409, 56
    %v2874 = vpop.permute.xlu0 %2873
    %2875 = vrot.lane.b32.xlu0 %v410, 56
    %v2876 = vpop.permute.xlu0 %2875
    %2881 = vrot.lane.b32.xlu0 %v437, 63
    %v2882 = vpop.permute.xlu0 %2881
    %2883 = vrot.lane.b32.xlu0 %v438, 63
    %v2884 = vpop.permute.xlu0 %2883
    %2889 = vrot.lane.b32.xlu0 %v465, 70
    %v2890 = vpop.permute.xlu0 %2889
    %2891 = vrot.lane.b32.xlu0 %v466, 70
    %v2892 = vpop.permute.xlu0 %2891
    %2897 = vrot.lane.b32.xlu0 %v493, 77
    %v2898 = vpop.permute.xlu0 %2897
    %2899 = vrot.lane.b32.xlu0 %v494, 77
    %v2900 = vpop.permute.xlu0 %2899
    %2905 = vrot.lane.b32.xlu0 %v521, 84
    %v2906 = vpop.permute.xlu0 %2905
    %2907 = vrot.lane.b32.xlu0 %v522, 84
    %v2908 = vpop.permute.xlu0 %2907
    %2913 = vrot.lane.b32.xlu0 %v549, 91
    %v2914 = vpop.permute.xlu0 %2913
    %2915 = vrot.lane.b32.xlu0 %v550, 91
    %v2916 = vpop.permute.xlu0 %2915
    %2921 = vrot.lane.b32.xlu0 %v577, 98
    %v2922 = vpop.permute.xlu0 %2921
    %2923 = vrot.lane.b32.xlu0 %v578, 98
    %v2924 = vpop.permute.xlu0 %2923
    %2929 = vrot.lane.b32.xlu0 %v605, 105
    %v2930 = vpop.permute.xlu0 %2929
    %2931 = vrot.lane.b32.xlu0 %v606, 105
    %v2932 = vpop.permute.xlu0 %2931
    %vm2935 = vcmask 56320
    %v2936 = vsel %vm2935, %v185, %v2818
    %v2937 = vsel %vm2935, %v186, %v2820
    %vm2938 = vcmask 113664
    %v2939 = vsel %vm2938, %v2936, %v2826
    %v2940 = vsel %vm2938, %v2937, %v2828
    %vm2941 = vcmask 171008
    %v2942 = vsel %vm2941, %v2939, %v2834
    %v2943 = vsel %vm2941, %v2940, %v2836
    %vm2944 = vcmask 228352
    %v2945 = vsel %vm2944, %v2942, %v2842
    %v2946 = vsel %vm2944, %v2943, %v2844
    %vm2947 = vcmask 285696
    %v2948 = vsel %vm2947, %v2945, %v2850
    %v2949 = vsel %vm2947, %v2946, %v2852
    %vm2950 = vcmask 343040
    %v2951 = vsel %vm2950, %v2948, %v2858
    %v2952 = vsel %vm2950, %v2949, %v2860
    %vm2953 = vcmask 400384
    %v2954 = vsel %vm2953, %v2951, %v2866
    %v2955 = vsel %vm2953, %v2952, %v2868
    %vm2956 = vcmask 457728
    %v2957 = vsel %vm2956, %v2954, %v2874
    %v2958 = vsel %vm2956, %v2955, %v2876
    %vm2959 = vcmask 515072
    %v2960 = vsel %vm2959, %v2957, %v2882
    %v2961 = vsel %vm2959, %v2958, %v2884
    %vm2962 = vcmask 572416
    %v2963 = vsel %vm2962, %v2960, %v2890
    %v2964 = vsel %vm2962, %v2961, %v2892
    %vm2965 = vcmask 629760
    %v2966 = vsel %vm2965, %v2963, %v2898
    %v2967 = vsel %vm2965, %v2964, %v2900
    %vm2968 = vcmask 687104
    %v2969 = vsel %vm2968, %v2966, %v2906
    %v2970 = vsel %vm2968, %v2967, %v2908
    %vm2971 = vcmask 744448
    %v2972 = vsel %vm2971, %v2969, %v2914
    %v2973 = vsel %vm2971, %v2970, %v2916
    %vm2974 = vcmask 801792
    %v2975 = vsel %vm2974, %v2972, %v2922
    %v2976 = vsel %vm2974, %v2973, %v2924
    %vm2977 = vcmask 859136
    %v2978 = vsel %vm2977, %v2975, %v2930
    %v2979 = vsel %vm2977, %v2976, %v2932
    %vm2980 = vcmask 916480
    %v2981 = vsel %vm2980, %v2978, 0.0
    %v2982 = vsel %vm2980, %v2979, 0.0
    %2983 = vst [vmem:[#allocation13] sm:$0xff] %v2981
    %2984 = vst [vmem:[#allocation13 + $0x8] sm:$0xff] %v2982
    %v2985 = vmax.f32 %v1229, %v1231
    %v2986 = vmax.f32 %v1230, %v1232
    %2989 = vrot.lane.b32.xlu0 %v1229, 127
    %v2990 = vpop.permute.xlu0 %2989
    %2991 = vrot.lane.b32.xlu0 %v1230, 127
    %v2992 = vpop.permute.xlu0 %2991
    %v2995 = vmax.f32 %v2985, %v2990
    %v2996 = vmax.f32 %v2986, %v2992
    %2999 = vrot.lane.b32.xlu0 %v655, 127
    %v3000 = vpop.permute.xlu0 %2999
    %3001 = vrot.lane.b32.xlu0 %v656, 127
    %v3002 = vpop.permute.xlu0 %3001
    %v3005 = vadd.f32 %v2995, %v3000
    %v3006 = vadd.f32 %v2996, %v3002
    %v3007 = vmax.f32 %v3005, 0.0
    %v3008 = vmax.f32 %v3006, 0.0
    %v3009 = vmax.f32 %v1455, %v1457
    %v3010 = vmax.f32 %v1456, %v1458
    %3013 = vrot.lane.b32.xlu0 %v1455, 127
    %v3014 = vpop.permute.xlu0 %3013
    %3015 = vrot.lane.b32.xlu0 %v1456, 127
    %v3016 = vpop.permute.xlu0 %3015
    %v3019 = vmax.f32 %v3009, %v3014
    %v3020 = vmax.f32 %v3010, %v3016
    %3023 = vrot.lane.b32.xlu0 %v705, 127
    %v3024 = vpop.permute.xlu0 %3023
    %3025 = vrot.lane.b32.xlu0 %v706, 127
    %v3026 = vpop.permute.xlu0 %3025
    %v3029 = vadd.f32 %v3019, %v3024
    %v3030 = vadd.f32 %v3020, %v3026
    %v3031 = vmax.f32 %v3029, 0.0
    %v3032 = vmax.f32 %v3030, 0.0
    %v3033 = vmax.f32 %v1681, %v1683
    %v3034 = vmax.f32 %v1682, %v1684
    %3037 = vrot.lane.b32.xlu0 %v1681, 127
    %v3038 = vpop.permute.xlu0 %3037
    %3039 = vrot.lane.b32.xlu0 %v1682, 127
    %v3040 = vpop.permute.xlu0 %3039
    %v3043 = vmax.f32 %v3033, %v3038
    %v3044 = vmax.f32 %v3034, %v3040
    %3047 = vrot.lane.b32.xlu0 %v755, 127
    %v3048 = vpop.permute.xlu0 %3047
    %3049 = vrot.lane.b32.xlu0 %v756, 127
    %v3050 = vpop.permute.xlu0 %3049
    %v3053 = vadd.f32 %v3043, %v3048
    %v3054 = vadd.f32 %v3044, %v3050
    %v3055 = vmax.f32 %v3053, 0.0
    %v3056 = vmax.f32 %v3054, 0.0
    %v3057 = vmax.f32 %v1907, %v1909
    %v3058 = vmax.f32 %v1908, %v1910
    %3061 = vrot.lane.b32.xlu0 %v1907, 127
    %v3062 = vpop.permute.xlu0 %3061
    %3063 = vrot.lane.b32.xlu0 %v1908, 127
    %v3064 = vpop.permute.xlu0 %3063
    %v3067 = vmax.f32 %v3057, %v3062
    %v3068 = vmax.f32 %v3058, %v3064
    %3071 = vrot.lane.b32.xlu0 %v805, 127
    %v3072 = vpop.permute.xlu0 %3071
    %3073 = vrot.lane.b32.xlu0 %v806, 127
    %v3074 = vpop.permute.xlu0 %3073
    %v3077 = vadd.f32 %v3067, %v3072
    %v3078 = vadd.f32 %v3068, %v3074
    %v3079 = vmax.f32 %v3077, 0.0
    %v3080 = vmax.f32 %v3078, 0.0
    %v3081 = vmax.f32 %v2133, %v2135
    %v3082 = vmax.f32 %v2134, %v2136
    %3085 = vrot.lane.b32.xlu0 %v2133, 127
    %v3086 = vpop.permute.xlu0 %3085
    %3087 = vrot.lane.b32.xlu0 %v2134, 127
    %v3088 = vpop.permute.xlu0 %3087
    %v3091 = vmax.f32 %v3081, %v3086
    %v3092 = vmax.f32 %v3082, %v3088
    %3095 = vrot.lane.b32.xlu0 %v855, 127
    %v3096 = vpop.permute.xlu0 %3095
    %3097 = vrot.lane.b32.xlu0 %v856, 127
    %v3098 = vpop.permute.xlu0 %3097
    %v3101 = vadd.f32 %v3091, %v3096
    %v3102 = vadd.f32 %v3092, %v3098
    %v3103 = vmax.f32 %v3101, 0.0
    %v3104 = vmax.f32 %v3102, 0.0
    %v3105 = vmax.f32 %v2359, %v2361
    %v3106 = vmax.f32 %v2360, %v2362
    %3109 = vrot.lane.b32.xlu0 %v2359, 127
    %v3110 = vpop.permute.xlu0 %3109
    %3111 = vrot.lane.b32.xlu0 %v2360, 127
    %v3112 = vpop.permute.xlu0 %3111
    %v3115 = vmax.f32 %v3105, %v3110
    %v3116 = vmax.f32 %v3106, %v3112
    %3119 = vrot.lane.b32.xlu0 %v905, 127
    %v3120 = vpop.permute.xlu0 %3119
    %3121 = vrot.lane.b32.xlu0 %v906, 127
    %v3122 = vpop.permute.xlu0 %3121
    %v3125 = vadd.f32 %v3115, %v3120
    %v3126 = vadd.f32 %v3116, %v3122
    %v3127 = vmax.f32 %v3125, 0.0
    %v3128 = vmax.f32 %v3126, 0.0
    %v3129 = vmax.f32 %v2585, %v2587
    %v3130 = vmax.f32 %v2586, %v2588
    %3133 = vrot.lane.b32.xlu0 %v2585, 127
    %v3134 = vpop.permute.xlu0 %3133
    %3135 = vrot.lane.b32.xlu0 %v2586, 127
    %v3136 = vpop.permute.xlu0 %3135
    %v3139 = vmax.f32 %v3129, %v3134
    %v3140 = vmax.f32 %v3130, %v3136
    %3143 = vrot.lane.b32.xlu0 %v955, 127
    %v3144 = vpop.permute.xlu0 %3143
    %3145 = vrot.lane.b32.xlu0 %v956, 127
    %v3146 = vpop.permute.xlu0 %3145
    %v3149 = vadd.f32 %v3139, %v3144
    %v3150 = vadd.f32 %v3140, %v3146
    %v3151 = vmax.f32 %v3149, 0.0
    %v3152 = vmax.f32 %v3150, 0.0
    %v3153 = vmax.f32 %v2811, %v2813
    %v3154 = vmax.f32 %v2812, %v2814
    %3157 = vrot.lane.b32.xlu0 %v2811, 127
    %v3158 = vpop.permute.xlu0 %3157
    %3159 = vrot.lane.b32.xlu0 %v2812, 127
    %v3160 = vpop.permute.xlu0 %3159
    %v3163 = vmax.f32 %v3153, %v3158
    %v3164 = vmax.f32 %v3154, %v3160
    %3167 = vrot.lane.b32.xlu0 %v1005, 127
    %v3168 = vpop.permute.xlu0 %3167
    %3169 = vrot.lane.b32.xlu0 %v1006, 127
    %v3170 = vpop.permute.xlu0 %3169
    %v3173 = vadd.f32 %v3163, %v3168
    %v3174 = vadd.f32 %v3164, %v3170
    %v3175 = vmax.f32 %v3173, 0.0
    %v3176 = vmax.f32 %v3174, 0.0
    %3179 = vrot.lane.b32.xlu0 %v3031, 6
    %v3180 = vpop.permute.xlu0 %3179
    %3181 = vrot.lane.b32.xlu0 %v3032, 6
    %v3182 = vpop.permute.xlu0 %3181
    %3187 = vrot.lane.b32.xlu0 %v3055, 12
    %v3188 = vpop.permute.xlu0 %3187
    %3189 = vrot.lane.b32.xlu0 %v3056, 12
    %v3190 = vpop.permute.xlu0 %3189
    %3195 = vrot.lane.b32.xlu0 %v3079, 18
    %v3196 = vpop.permute.xlu0 %3195
    %3197 = vrot.lane.b32.xlu0 %v3080, 18
    %v3198 = vpop.permute.xlu0 %3197
    %3203 = vrot.lane.b32.xlu0 %v3103, 24
    %v3204 = vpop.permute.xlu0 %3203
    %3205 = vrot.lane.b32.xlu0 %v3104, 24
    %v3206 = vpop.permute.xlu0 %3205
    %3211 = vrot.lane.b32.xlu0 %v3127, 30
    %v3212 = vpop.permute.xlu0 %3211
    %3213 = vrot.lane.b32.xlu0 %v3128, 30
    %v3214 = vpop.permute.xlu0 %3213
    %3219 = vrot.lane.b32.xlu0 %v3151, 36
    %v3220 = vpop.permute.xlu0 %3219
    %3221 = vrot.lane.b32.xlu0 %v3152, 36
    %v3222 = vpop.permute.xlu0 %3221
    %3227 = vrot.lane.b32.xlu0 %v3175, 42
    %v3228 = vpop.permute.xlu0 %3227
    %3229 = vrot.lane.b32.xlu0 %v3176, 42
    %v3230 = vpop.permute.xlu0 %3229
    %vm3233 = vcmask 48128
    %v3234 = vsel %vm3233, %v3007, %v3180
    %v3235 = vsel %vm3233, %v3008, %v3182
    %vm3236 = vcmask 97280
    %v3237 = vsel %vm3236, %v3234, %v3188
    %v3238 = vsel %vm3236, %v3235, %v3190
    %vm3239 = vcmask 146432
    %v3240 = vsel %vm3239, %v3237, %v3196
    %v3241 = vsel %vm3239, %v3238, %v3198
    %vm3242 = vcmask 195584
    %v3243 = vsel %vm3242, %v3240, %v3204
    %v3244 = vsel %vm3242, %v3241, %v3206
    %vm3245 = vcmask 244736
    %v3246 = vsel %vm3245, %v3243, %v3212
    %v3247 = vsel %vm3245, %v3244, %v3214
    %vm3248 = vcmask 293888
    %v3249 = vsel %vm3248, %v3246, %v3220
    %v3250 = vsel %vm3248, %v3247, %v3222
    %v3251 = vsel %vm2950, %v3249, %v3228
    %v3252 = vsel %vm2950, %v3250, %v3230
    %vm3253 = vcmask 392192
    %v3254 = vsel %vm3253, %v3251, 0.0
    %v3255 = vsel %vm3253, %v3252, 0.0
    %3256 = vst [vmem:[#allocation14] sm:$0xff] %v3254
    %3257 = vst [vmem:[#allocation14 + $0x8] sm:$0xff] %v3255
    // Predicated region
    $region58: #{tpu_custom_call.1} parent=1 // pred_check
      _
    $region59: #{tpu_custom_call.1} parent=1 // pred_check_branch
      %3259 = sbr.rel (0) target = $region61
    $region60: #{tpu_custom_call.1} parent=1 // pred_region
      %s3261 = ssub.s32 256, 256
      %3262 = vsyncadd [#allocation3], %s3261
      %s3263 = sshll.u32 [#allocation13], 4
      %s3264 = int_to_ptr.vmem [resolvable:$true] %s3263
      %3269 = dma.vmem_to_hbm [thread:$0]  %s3264, 256, %s8, [#allocation3], 128, 128, 8
    $region61: #{tpu_custom_call.1} parent=1 // pred_fallthru
      _
    // Predicated region
    $region62: #{tpu_custom_call.1} parent=1 // pred_check
      _
    $region63: #{tpu_custom_call.1} parent=1 // pred_check_branch
      %3271 = sbr.rel (0) target = $region65
    $region64: #{tpu_custom_call.1} parent=1 // pred_region
      %s3273 = ssub.s32 256, 256
      %3274 = vsyncadd [#allocation15], %s3273
      %s3275 = sshll.u32 [#allocation14], 4
      %s3276 = int_to_ptr.vmem [resolvable:$true] %s3275
      %3281 = dma.vmem_to_hbm [thread:$0]  %s3276, 256, %s9, [#allocation15], 128, 128, 8
    $region65: #{tpu_custom_call.1} parent=1 // pred_fallthru
      _
    // Predicated region
    $region66: #{tpu_custom_call.1} parent=1 // pred_check
      _
    $region67: #{tpu_custom_call.1} parent=1 // pred_check_branch
      %3283 = sbr.rel (0) target = $region69
    $region68: #{tpu_custom_call.1} parent=1 // pred_region
      %3284 = dma.done [#allocation3], 256
    $region69: #{tpu_custom_call.1} parent=1 // pred_fallthru
      _
    // Predicated region
    $region70: #{tpu_custom_call.1} parent=1 // pred_check
      _
    $region71: #{tpu_custom_call.1} parent=1 // pred_check_branch
      %3286 = sbr.rel (0) target = $region73
    $region72: #{tpu_custom_call.1} parent=1 // pred_region
      %3287 = dma.done [#allocation15], 256
    $region73: #{tpu_custom_call.1} parent=1 // pred_fallthru
      _
    %3288 = vsyncpa [#allocation3], 1
    %3289 = vsyncpa [#allocation15], 1
    %3290 = vsyncpa [#allocation4], 1
    %3291 = vsyncpa [#allocation6], 1
    %3292 = vsyncpa [#allocation9], 1
    %3293 = vsyncpa [#allocation12], 1

</llo_original>
